<compile_context>
chip_gen: v7x
topology: tpu7x:2x2x1
jax: 0.10.0
libtpu: 0.0.40
codegen_flags: <defaults>
</compile_context>

<pallas_src>
import math
import numpy as np
import jax
import jax.numpy as jnp
from jax import lax
from jax.experimental import pallas as pl
from jax.experimental.pallas import tpu as pltpu

# ----- hyperparams (consistent with the test REPLConfig) -----
N_DIM = 64            # config.n_dim
N_HEAD = 4            # config.n_head
HEAD_DIM = N_DIM // N_HEAD
FFN_HIDDEN = 4 * N_DIM
N_LAYER = 2           # IterativeEncoder(config, n_layer)
ROPE_BASE = 1000.0    # config.loop_rope_base
RMS_EPS = 1e-6


def _round_up(x, m):
    return ((x + m - 1) // m) * m


def _rmsnorm(x, g):
    return x * lax.rsqrt(jnp.mean(x * x, axis=-1, keepdims=True) + RMS_EPS) * g


# ----------------------------- fused Pallas kernel -----------------------------

def make_fused_encoder_kernel(n_layer, L, tile_n, C, hd, hf):
    scale = 1.0 / math.sqrt(hd)

    def kernel(x_ref, wqkv_ref, wo_ref, w12_ref, w3_ref,
               g1_ref, g2_ref, gout_ref, bd_ref, o_ref):
        M = L * tile_n
        # (L, tn, C) -> (L*tn, C): merges leading dims only (tn % 8 == 0), no relayout.
        x = x_ref[...].reshape(M, C)            # f32, row = l*tile_n + n
        bd = bd_ref[...]                        # (C, C) bf16, 1 where same head

        for layer in range(n_layer):
            # ---- pre-attention RMSNorm (residual base is the *normed* x) ----
            h = _rmsnorm(x, g1_ref[layer])      # (M, C) f32
            hb = h.astype(jnp.bfloat16)

            # ---- fused QKV projection per loop-position (RoPE folded into weights) ----
            q_l, k_l, v_l = [], [], []
            for l in range(L):
                hbl = hb[l * tile_n:(l + 1) * tile_n, :]
                qkv = jnp.dot(hbl, wqkv_ref[layer * L + l],
                              preferred_element_type=jnp.float32)     # (tn, 3C)
                q_l.append(qkv[:, 0:C])          # already RoPE-rotated
                k_l.append(qkv[:, C:2 * C])      # already RoPE-rotated
                v_l.append(qkv[:, 2 * C:3 * C])

            # ---- causal attention over the L (loop) dim, vectorized over tile rows ----
            # per-(l,m) head score = (q*k) @ BD  -> score replicated across that head's
            # 16 lanes, so softmax and the PV sum stay full-width elementwise ops.
            outs = []
            for l in range(L):
                svals = []
                for m in range(l + 1):          # causal: m <= l, no mask constant needed
                    prod = (q_l[l] * k_l[m]).astype(jnp.bfloat16)
                    s = jnp.dot(prod, bd, preferred_element_type=jnp.float32) * scale
                    svals.append(s)             # (tn, C)
                smax = svals[0]
                for m in range(1, l + 1):
                    smax = jnp.maximum(smax, svals[m])
                es = [jnp.exp(s - smax) for s in svals]
                den = es[0]
                for m in range(1, l + 1):
                    den = den + es[m]
                acc = es[0] * v_l[0]
                for m in range(1, l + 1):
                    acc = acc + es[m] * v_l[m]
                outs.append(acc * pl.reciprocal(den, approx=True))    # EUP divide
            attn = jnp.concatenate(outs, axis=0)                      # (M, C)

            y = jnp.dot(attn.astype(jnp.bfloat16), wo_ref[layer],
                        preferred_element_type=jnp.float32)
            x1 = h + y                           # residual vs normed input (EncoderBlock)

            # ---- pre-MLP RMSNorm + SwiGLU FFN (fused w1|w2) ----
            m2 = _rmsnorm(x1, g2_ref[layer])
            ab = jnp.dot(m2.astype(jnp.bfloat16), w12_ref[layer],
                         preferred_element_type=jnp.float32)          # (M, 2*hf)
            a = ab[:, 0:hf]
            b = ab[:, hf:2 * hf]
            hid = (a * jax.nn.sigmoid(a) * b).astype(jnp.bfloat16)
            x = x1 + jnp.dot(hid, w3_ref[layer],
                             preferred_element_type=jnp.float32)

        # ---- take last loop state + output RMSNorm (fused) ----
        last = x[(L - 1) * tile_n:, :]                                # (tn, C)
        o_ref[...] = _rmsnorm(last, gout_ref[...]).astype(o_ref.dtype)

    return kernel


# ------------------------------ host wrapper ------------------------------

def iterative_encoder_forward(x_list, packed, tile_n=512):
    L = len(x_list)
    B, T, C = x_list[0].shape
    N = B * T
    # torch: stack(dim=0) -> (L, N, C); (the module's permute(1,0,2) is just its
    # internal (N, L, C) view — keeping L leading lets each tile merge to a
    # contiguous (L*tile_n, C) matmul operand with zero relayout).
    x_stack = jnp.stack([xi.reshape(N, C) for xi in x_list], axis=0)  # (L, N, C) f32

    # Tile selection: big tiles amortize per-step pipeline overhead and fill the MXU
    # M dimension; keep >= 2 grid steps when possible (both v7x TensorCores busy).
    if N > 8:
        tn = min(int(tile_n), _round_up((N + 1) // 2, 8))
    else:
        tn = 8
    tn = max(8, (tn // 8) * 8)
    N_pad = _round_up(N, tn)
    if N_pad != N:  # zero-pad tail rows (zeros flow through safely; sliced off below)
        x_stack = jnp.pad(x_stack, ((0, 0), (0, N_pad - N), (0, 0)))

    n_layer = packed['wo'].shape[0]
    hf = packed['w3'].shape[1]
    hd = C // N_HEAD

    kernel = make_fused_encoder_kernel(n_layer, L, tn, C, hd, hf)

    def _rep(a):
        nd = a.ndim
        return pl.BlockSpec(a.shape, lambda i, _n=nd: (0,) * _n)

    out = pl.pallas_call(
        kernel,
        out_shape=jax.ShapeDtypeStruct((N_pad, C), jnp.float32),
        grid=(N_pad // tn,),
        in_specs=[
            pl.BlockSpec((L, tn, C), lambda i: (0, i, 0)),
            _rep(packed['wqkv']), _rep(packed['wo']),
            _rep(packed['w12']), _rep(packed['w3']),
            _rep(packed['g1']), _rep(packed['g2']), _rep(packed['g_out']),
            _rep(packed['bd']),
        ],
        out_specs=pl.BlockSpec((tn, C), lambda i: (i, 0)),
        compiler_params=pltpu.CompilerParams(
            dimension_semantics=("parallel",),
            vmem_limit_bytes=48 * 1024 * 1024,
        ),
    )(x_stack, packed['wqkv'], packed['wo'], packed['w12'], packed['w3'],
      packed['g1'], packed['g2'], packed['g_out'], packed['bd'])
    return out[:N].reshape(B, T, C)


# --------------------------- params / weight packing ---------------------------

def _rope_matrices(L, C, hd, base):
    """Per-position interleaved (torchtune) RoPE as a linear map: q_rot = q @ R[l]."""
    n_head = C // hd
    inv = 1.0 / (base ** (np.arange(0, hd, 2, dtype=np.float64) / hd))  # (hd/2,)
    R = np.zeros((L, C, C), dtype=np.float64)
    for l in range(L):
        c, s = np.cos(l * inv), np.sin(l * inv)
        for h in range(n_head):
            for i in range(hd // 2):
                e = h * hd + 2 * i
                o = e + 1
                R[l, e, e] = c[i]
                R[l, o, o] = c[i]
                R[l, o, e] = -s[i]
                R[l, e, o] = s[i]
    return R


def pack_params(params, g_out, L):
    """Fuse QKV / w1|w2, fold RoPE(pos=l) into per-position Q/K weights, cast to bf16."""
    C, hd, hf = N_DIM, HEAD_DIM, FFN_HIDDEN
    R = _rope_matrices(L, C, hd, ROPE_BASE)                 # (L, C, C)
    wqkv, wo, w12, w3, g1, g2 = [], [], [], [], [], []
    for lp in params:
        wq = np.asarray(lp['wq'], dtype=np.float64)
        wk = np.asarray(lp['wk'], dtype=np.float64)
        wv = np.asarray(lp['wv'], dtype=np.float64)
        for l in range(L):
            wqkv.append(np.concatenate([wq @ R[l], wk @ R[l], wv], axis=1))  # (C, 3C)
        wo.append(np.asarray(lp['wo']))
        w12.append(np.concatenate([np.asarray(lp['w1']), np.asarray(lp['w2'])], axis=1))
        w3.append(np.asarray(lp['w3']))
        g1.append(np.asarray(lp['g1']))
        g2.append(np.asarray(lp['g2']))
    head_id = np.arange(C) // hd
    bd = (head_id[:, None] == head_id[None, :]).astype(np.float32)   # head replicator
    return dict(
        wqkv=jnp.asarray(np.stack(wqkv), dtype=jnp.bfloat16),        # (n_layer*L, C, 3C)
        wo=jnp.asarray(np.stack(wo), dtype=jnp.bfloat16),            # (n_layer, C, C)
        w12=jnp.asarray(np.stack(w12), dtype=jnp.bfloat16),          # (n_layer, C, 2hf)
        w3=jnp.asarray(np.stack(w3), dtype=jnp.bfloat16),            # (n_layer, hf, C)
        g1=jnp.asarray(np.stack(g1), dtype=jnp.float32),             # (n_layer, 1, C)
        g2=jnp.asarray(np.stack(g2), dtype=jnp.float32),
        g_out=jnp.asarray(np.asarray(g_out), dtype=jnp.float32),     # (1, C)
        bd=jnp.asarray(bd, dtype=jnp.bfloat16),                      # (C, C)
    )


def init_params(key, n_layer, C, hf):
    params = []
    for _ in range(n_layer):
        key, *ks = jax.random.split(key, 10)
        params.append(dict(
            wq=0.05 * jax.random.normal(ks[0], (C, C), jnp.float32),
            wk=0.05 * jax.random.normal(ks[1], (C, C), jnp.float32),
            wv=0.05 * jax.random.normal(ks[2], (C, C), jnp.float32),
            wo=0.05 * jax.random.normal(ks[3], (C, C), jnp.float32),
            w1=0.05 * jax.random.normal(ks[4], (C, hf), jnp.float32),
            w2=0.05 * jax.random.normal(ks[5], (C, hf), jnp.float32),
            w3=0.05 * jax.random.normal(ks[6], (hf, C), jnp.float32),
            g1=1.0 + 0.05 * jax.random.normal(ks[7], (1, C), jnp.float32),
            g2=1.0 + 0.05 * jax.random.normal(ks[8], (1, C), jnp.float32),
        ))
    key, kg = jax.random.split(key)
    g_out = 1.0 + 0.05 * jax.random.normal(kg, (1, C), jnp.float32)
    return params, g_out


# ---------------------------- pure-JAX reference ----------------------------

def _ref_rope_interleaved(t, cos_h, sin_h):
    te, to = t[..., 0::2], t[..., 1::2]
    c = cos_h[None, :, None, :]
    s = sin_h[None, :, None, :]
    oe = te * c - to * s
    oo = to * c + te * s
    return jnp.stack([oe, oo], axis=-1).reshape(t.shape)


def ref_forward(x_list, params, g_out, n_head):
    B, T, C = x_list[0].shape
    hd = C // n_head
    L = len(x_list)
    inv = 1.0 / (ROPE_BASE ** (np.arange(0, hd, 2, dtype=np.float64) / hd))
    ang = np.outer(np.arange(L, dtype=np.float64), inv)
    cos_h = jnp.asarray(np.cos(ang), dtype=jnp.float32)
    sin_h = jnp.asarray(np.sin(ang), dtype=jnp.float32)

    x = jnp.stack([xi.reshape(B * T, C) for xi in x_list], axis=1)   # (N, L, C)
    N = x.shape[0]
    causal = np.tril(np.ones((L, L), dtype=bool))
    for lp in params:
        h = _rmsnorm(x, lp['g1'])
        q = (h @ lp['wq']).reshape(N, L, n_head, hd)
        k = (h @ lp['wk']).reshape(N, L, n_head, hd)
        v = (h @ lp['wv']).reshape(N, L, n_head, hd)
        q = _ref_rope_interleaved(q, cos_h, sin_h)
        k = _ref_rope_interleaved(k, cos_h, sin_h)
        s = jnp.einsum('nlhd,nmhd->nhlm', q, k) / math.sqrt(hd)
        s = jnp.where(causal[None, None], s, -jnp.inf)
        p = jax.nn.softmax(s, axis=-1)
        o = jnp.einsum('nhlm,nmhd->nlhd', p, v).reshape(N, L, C)
        x1 = h + (o @ lp['wo'])
        m = _rmsnorm(x1, lp['g2'])
        x = x1 + (jax.nn.silu(m @ lp['w1']) * (m @ lp['w2'])) @ lp['w3']
    return _rmsnorm(x[:, -1, :], g_out).reshape(B, T, C)


# ----------------------------------- main -----------------------------------

if __name__ == "__main__":
    B, T, Lx = 2, 8, 4            # Lx = len(x) list length (the "loop" dim) <= max_loops
    C, Hf = N_DIM, FFN_HIDDEN

    key = jax.random.PRNGKey(0)
    key, kp, kx = jax.random.split(key, 3)
    params, g_out = init_params(kp, N_LAYER, C, Hf)
    xkeys = jax.random.split(kx, Lx)
    x_list = [jax.random.normal(xkeys[i], (B, T, C), jnp.float32) for i in range(Lx)]

    packed = pack_params(params, g_out, Lx)

    out = iterative_encoder_forward(x_list, packed, tile_n=512)
    out = jax.block_until_ready(out)
    assert out.shape == (B, T, C)

    ref = jax.block_until_ready(ref_forward(x_list, params, g_out, N_HEAD))
    err = float(jnp.max(jnp.abs(out - ref)))
    if not np.allclose(np.asarray(out), np.asarray(ref), atol=3e-2, rtol=3e-2):
        raise AssertionError(f"mismatch vs reference, max abs err={err}")

    print("KERNEL_OK")
</pallas_src>

<mosaic_0001>
module attributes {stable_mosaic.version = 11 : i64} {
  func.func @kernel(%arg0: i32, %arg1: memref<4x8x64xf32, #tpu.memory_space<vmem>>, %arg2: memref<8x64x192xbf16, #tpu.memory_space<vmem>>, %arg3: memref<2x64x64xbf16, #tpu.memory_space<vmem>>, %arg4: memref<2x64x512xbf16, #tpu.memory_space<vmem>>, %arg5: memref<2x256x64xbf16, #tpu.memory_space<vmem>>, %arg6: memref<2x1x64xf32, #tpu.memory_space<vmem>>, %arg7: memref<2x1x64xf32, #tpu.memory_space<vmem>>, %arg8: memref<1x64xf32, #tpu.memory_space<vmem>>, %arg9: memref<64x64xbf16, #tpu.memory_space<vmem>>, %arg10: memref<8x64xf32, #tpu.memory_space<vmem>>) attributes {dimension_semantics = [#tpu.dimension_semantics<parallel>], iteration_bounds = array<i64: 2>, scalar_prefetch = 0 : i64, scratch_operands = 0 : i64, tpu.core_type = #tpu.core_type<tc>, window_params = [{transform_indices = @transform_0, window_bounds = array<i64: 4, 8, 64>}, {pipeline_mode = #tpu.pipeline_mode<synchronous>, transform_indices = @transform_1, window_bounds = array<i64: 8, 64, 192>}, {pipeline_mode = #tpu.pipeline_mode<synchronous>, transform_indices = @transform_2, window_bounds = array<i64: 2, 64, 64>}, {pipeline_mode = #tpu.pipeline_mode<synchronous>, transform_indices = @transform_3, window_bounds = array<i64: 2, 64, 512>}, {pipeline_mode = #tpu.pipeline_mode<synchronous>, transform_indices = @transform_4, window_bounds = array<i64: 2, 256, 64>}, {pipeline_mode = #tpu.pipeline_mode<synchronous>, transform_indices = @transform_5, window_bounds = array<i64: 2, 1, 64>}, {pipeline_mode = #tpu.pipeline_mode<synchronous>, transform_indices = @transform_6, window_bounds = array<i64: 2, 1, 64>}, {pipeline_mode = #tpu.pipeline_mode<synchronous>, transform_indices = @transform_7, window_bounds = array<i64: 1, 64>}, {pipeline_mode = #tpu.pipeline_mode<synchronous>, transform_indices = @transform_8, window_bounds = array<i64: 64, 64>}, {transform_indices = @transform_9, window_bounds = array<i64: 8, 64>}]} {
    %c0 = arith.constant 0 : index
    %c0_0 = arith.constant 0 : index
    %c0_1 = arith.constant 0 : index
    %0 = vector.load %arg1[%c0, %c0_0, %c0_1] : memref<4x8x64xf32, #tpu.memory_space<vmem>>, vector<4x8x64xf32>
    %1 = vector.shape_cast %0 : vector<4x8x64xf32> to vector<32x64xf32>
    %c0_2 = arith.constant 0 : index
    %c0_3 = arith.constant 0 : index
    %2 = vector.load %arg9[%c0_2, %c0_3] : memref<64x64xbf16, #tpu.memory_space<vmem>>, vector<64x64xbf16>
    %c0_4 = arith.constant 0 : index
    %c0_5 = arith.constant 0 : index
    %c0_6 = arith.constant 0 : index
    %3 = vector.load %arg6[%c0_4, %c0_5, %c0_6] : memref<2x1x64xf32, #tpu.memory_space<vmem>>, vector<1x1x64xf32>
    %4 = vector.shape_cast %3 : vector<1x1x64xf32> to vector<1x64xf32>
    %5 = arith.mulf %1, %1 : vector<32x64xf32>
    %cst = arith.constant dense<0.000000e+00> : vector<32xf32>
    %6 = vector.multi_reduction <add>, %5, %cst [1] : vector<32x64xf32> to vector<32xf32>
    %7 = vector.shape_cast %6 : vector<32xf32> to vector<32x1xf32>
    %cst_7 = arith.constant 6.400000e+01 : f32
    %8 = vector.broadcast %cst_7 : f32 to vector<32x1xf32>
    %9 = arith.divf %7, %8 : vector<32x1xf32>
    %cst_8 = arith.constant 9.99999997E-7 : f32
    %10 = vector.broadcast %cst_8 : f32 to vector<32x1xf32>
    %11 = arith.addf %9, %10 : vector<32x1xf32>
    %12 = math.rsqrt %11 : vector<32x1xf32>
    %13 = vector.broadcast %12 : vector<32x1xf32> to vector<32x64xf32>
    %14 = arith.mulf %1, %13 : vector<32x64xf32>
    %15 = vector.broadcast %4 : vector<1x64xf32> to vector<32x64xf32>
    %16 = arith.mulf %14, %15 : vector<32x64xf32>
    %17 = arith.truncf %16 : vector<32x64xf32> to vector<32x64xbf16>
    %18 = vector.extract_strided_slice %17 {offsets = [0, 0], sizes = [8, 64], strides = [1, 1]} : vector<32x64xbf16> to vector<8x64xbf16>
    %c0_9 = arith.constant 0 : index
    %c0_10 = arith.constant 0 : index
    %c0_11 = arith.constant 0 : index
    %19 = vector.load %arg2[%c0_9, %c0_10, %c0_11] : memref<8x64x192xbf16, #tpu.memory_space<vmem>>, vector<1x64x192xbf16>
    %20 = vector.shape_cast %19 : vector<1x64x192xbf16> to vector<64x192xbf16>
    %cst_12 = arith.constant dense<0.000000e+00> : vector<8x192xf32>
    %21 = tpu.matmul %18, %20, %cst_12 {dimension_numbers = #tpu.dot_dimension_numbers<[1], [0], [0], [1], [0, 0, 1, 1], [], []>} : vector<8x64xbf16>, vector<64x192xbf16>, vector<8x192xf32> -> vector<8x192xf32>
    %22 = vector.extract_strided_slice %21 {offsets = [0, 0], sizes = [8, 64], strides = [1, 1]} : vector<8x192xf32> to vector<8x64xf32>
    %23 = vector.extract_strided_slice %21 {offsets = [0, 64], sizes = [8, 64], strides = [1, 1]} : vector<8x192xf32> to vector<8x64xf32>
    %24 = vector.extract_strided_slice %21 {offsets = [0, 128], sizes = [8, 64], strides = [1, 1]} : vector<8x192xf32> to vector<8x64xf32>
    %25 = vector.extract_strided_slice %17 {offsets = [8, 0], sizes = [8, 64], strides = [1, 1]} : vector<32x64xbf16> to vector<8x64xbf16>
    %c1 = arith.constant 1 : index
    %c0_13 = arith.constant 0 : index
    %c0_14 = arith.constant 0 : index
    %26 = vector.load %arg2[%c1, %c0_13, %c0_14] : memref<8x64x192xbf16, #tpu.memory_space<vmem>>, vector<1x64x192xbf16>
    %27 = vector.shape_cast %26 : vector<1x64x192xbf16> to vector<64x192xbf16>
    %cst_15 = arith.constant dense<0.000000e+00> : vector<8x192xf32>
    %28 = tpu.matmul %25, %27, %cst_15 {dimension_numbers = #tpu.dot_dimension_numbers<[1], [0], [0], [1], [0, 0, 1, 1], [], []>} : vector<8x64xbf16>, vector<64x192xbf16>, vector<8x192xf32> -> vector<8x192xf32>
    %29 = vector.extract_strided_slice %28 {offsets = [0, 0], sizes = [8, 64], strides = [1, 1]} : vector<8x192xf32> to vector<8x64xf32>
    %30 = vector.extract_strided_slice %28 {offsets = [0, 64], sizes = [8, 64], strides = [1, 1]} : vector<8x192xf32> to vector<8x64xf32>
    %31 = vector.extract_strided_slice %28 {offsets = [0, 128], sizes = [8, 64], strides = [1, 1]} : vector<8x192xf32> to vector<8x64xf32>
    %32 = vector.extract_strided_slice %17 {offsets = [16, 0], sizes = [8, 64], strides = [1, 1]} : vector<32x64xbf16> to vector<8x64xbf16>
    %c2 = arith.constant 2 : index
    %c0_16 = arith.constant 0 : index
    %c0_17 = arith.constant 0 : index
    %33 = vector.load %arg2[%c2, %c0_16, %c0_17] : memref<8x64x192xbf16, #tpu.memory_space<vmem>>, vector<1x64x192xbf16>
    %34 = vector.shape_cast %33 : vector<1x64x192xbf16> to vector<64x192xbf16>
    %cst_18 = arith.constant dense<0.000000e+00> : vector<8x192xf32>
    %35 = tpu.matmul %32, %34, %cst_18 {dimension_numbers = #tpu.dot_dimension_numbers<[1], [0], [0], [1], [0, 0, 1, 1], [], []>} : vector<8x64xbf16>, vector<64x192xbf16>, vector<8x192xf32> -> vector<8x192xf32>
    %36 = vector.extract_strided_slice %35 {offsets = [0, 0], sizes = [8, 64], strides = [1, 1]} : vector<8x192xf32> to vector<8x64xf32>
    %37 = vector.extract_strided_slice %35 {offsets = [0, 64], sizes = [8, 64], strides = [1, 1]} : vector<8x192xf32> to vector<8x64xf32>
    %38 = vector.extract_strided_slice %35 {offsets = [0, 128], sizes = [8, 64], strides = [1, 1]} : vector<8x192xf32> to vector<8x64xf32>
    %39 = vector.extract_strided_slice %17 {offsets = [24, 0], sizes = [8, 64], strides = [1, 1]} : vector<32x64xbf16> to vector<8x64xbf16>
    %c3 = arith.constant 3 : index
    %c0_19 = arith.constant 0 : index
    %c0_20 = arith.constant 0 : index
    %40 = vector.load %arg2[%c3, %c0_19, %c0_20] : memref<8x64x192xbf16, #tpu.memory_space<vmem>>, vector<1x64x192xbf16>
    %41 = vector.shape_cast %40 : vector<1x64x192xbf16> to vector<64x192xbf16>
    %cst_21 = arith.constant dense<0.000000e+00> : vector<8x192xf32>
    %42 = tpu.matmul %39, %41, %cst_21 {dimension_numbers = #tpu.dot_dimension_numbers<[1], [0], [0], [1], [0, 0, 1, 1], [], []>} : vector<8x64xbf16>, vector<64x192xbf16>, vector<8x192xf32> -> vector<8x192xf32>
    %43 = vector.extract_strided_slice %42 {offsets = [0, 0], sizes = [8, 64], strides = [1, 1]} : vector<8x192xf32> to vector<8x64xf32>
    %44 = vector.extract_strided_slice %42 {offsets = [0, 64], sizes = [8, 64], strides = [1, 1]} : vector<8x192xf32> to vector<8x64xf32>
    %45 = vector.extract_strided_slice %42 {offsets = [0, 128], sizes = [8, 64], strides = [1, 1]} : vector<8x192xf32> to vector<8x64xf32>
    %46 = arith.mulf %22, %23 : vector<8x64xf32>
    %47 = arith.truncf %46 : vector<8x64xf32> to vector<8x64xbf16>
    %cst_22 = arith.constant dense<0.000000e+00> : vector<8x64xf32>
    %48 = tpu.matmul %47, %2, %cst_22 {dimension_numbers = #tpu.dot_dimension_numbers<[1], [0], [0], [1], [0, 0, 1, 1], [], []>} : vector<8x64xbf16>, vector<64x64xbf16>, vector<8x64xf32> -> vector<8x64xf32>
    %cst_23 = arith.constant 2.500000e-01 : f32
    %49 = vector.broadcast %cst_23 : f32 to vector<8x64xf32>
    %50 = arith.mulf %48, %49 : vector<8x64xf32>
    %51 = arith.subf %50, %50 : vector<8x64xf32>
    %52 = math.exp %51 : vector<8x64xf32>
    %53 = arith.mulf %52, %24 : vector<8x64xf32>
    %54 = tpu.reciprocal %52 {approx = true} : vector<8x64xf32> -> vector<8x64xf32>
    %55 = arith.mulf %53, %54 : vector<8x64xf32>
    %56 = arith.mulf %29, %23 : vector<8x64xf32>
    %57 = arith.truncf %56 : vector<8x64xf32> to vector<8x64xbf16>
    %cst_24 = arith.constant dense<0.000000e+00> : vector<8x64xf32>
    %58 = tpu.matmul %57, %2, %cst_24 {dimension_numbers = #tpu.dot_dimension_numbers<[1], [0], [0], [1], [0, 0, 1, 1], [], []>} : vector<8x64xbf16>, vector<64x64xbf16>, vector<8x64xf32> -> vector<8x64xf32>
    %cst_25 = arith.constant 2.500000e-01 : f32
    %59 = vector.broadcast %cst_25 : f32 to vector<8x64xf32>
    %60 = arith.mulf %58, %59 : vector<8x64xf32>
    %61 = arith.mulf %29, %30 : vector<8x64xf32>
    %62 = arith.truncf %61 : vector<8x64xf32> to vector<8x64xbf16>
    %cst_26 = arith.constant dense<0.000000e+00> : vector<8x64xf32>
    %63 = tpu.matmul %62, %2, %cst_26 {dimension_numbers = #tpu.dot_dimension_numbers<[1], [0], [0], [1], [0, 0, 1, 1], [], []>} : vector<8x64xbf16>, vector<64x64xbf16>, vector<8x64xf32> -> vector<8x64xf32>
    %cst_27 = arith.constant 2.500000e-01 : f32
    %64 = vector.broadcast %cst_27 : f32 to vector<8x64xf32>
    %65 = arith.mulf %63, %64 : vector<8x64xf32>
    %66 = arith.maximumf %60, %65 : vector<8x64xf32>
    %67 = arith.subf %60, %66 : vector<8x64xf32>
    %68 = math.exp %67 : vector<8x64xf32>
    %69 = arith.subf %65, %66 : vector<8x64xf32>
    %70 = math.exp %69 : vector<8x64xf32>
    %71 = arith.addf %68, %70 : vector<8x64xf32>
    %72 = arith.mulf %68, %24 : vector<8x64xf32>
    %73 = arith.mulf %70, %31 : vector<8x64xf32>
    %74 = arith.addf %72, %73 : vector<8x64xf32>
    %75 = tpu.reciprocal %71 {approx = true} : vector<8x64xf32> -> vector<8x64xf32>
    %76 = arith.mulf %74, %75 : vector<8x64xf32>
    %77 = arith.mulf %36, %23 : vector<8x64xf32>
    %78 = arith.truncf %77 : vector<8x64xf32> to vector<8x64xbf16>
    %cst_28 = arith.constant dense<0.000000e+00> : vector<8x64xf32>
    %79 = tpu.matmul %78, %2, %cst_28 {dimension_numbers = #tpu.dot_dimension_numbers<[1], [0], [0], [1], [0, 0, 1, 1], [], []>} : vector<8x64xbf16>, vector<64x64xbf16>, vector<8x64xf32> -> vector<8x64xf32>
    %cst_29 = arith.constant 2.500000e-01 : f32
    %80 = vector.broadcast %cst_29 : f32 to vector<8x64xf32>
    %81 = arith.mulf %79, %80 : vector<8x64xf32>
    %82 = arith.mulf %36, %30 : vector<8x64xf32>
    %83 = arith.truncf %82 : vector<8x64xf32> to vector<8x64xbf16>
    %cst_30 = arith.constant dense<0.000000e+00> : vector<8x64xf32>
    %84 = tpu.matmul %83, %2, %cst_30 {dimension_numbers = #tpu.dot_dimension_numbers<[1], [0], [0], [1], [0, 0, 1, 1], [], []>} : vector<8x64xbf16>, vector<64x64xbf16>, vector<8x64xf32> -> vector<8x64xf32>
    %cst_31 = arith.constant 2.500000e-01 : f32
    %85 = vector.broadcast %cst_31 : f32 to vector<8x64xf32>
    %86 = arith.mulf %84, %85 : vector<8x64xf32>
    %87 = arith.mulf %36, %37 : vector<8x64xf32>
    %88 = arith.truncf %87 : vector<8x64xf32> to vector<8x64xbf16>
    %cst_32 = arith.constant dense<0.000000e+00> : vector<8x64xf32>
    %89 = tpu.matmul %88, %2, %cst_32 {dimension_numbers = #tpu.dot_dimension_numbers<[1], [0], [0], [1], [0, 0, 1, 1], [], []>} : vector<8x64xbf16>, vector<64x64xbf16>, vector<8x64xf32> -> vector<8x64xf32>
    %cst_33 = arith.constant 2.500000e-01 : f32
    %90 = vector.broadcast %cst_33 : f32 to vector<8x64xf32>
    %91 = arith.mulf %89, %90 : vector<8x64xf32>
    %92 = arith.maximumf %81, %86 : vector<8x64xf32>
    %93 = arith.maximumf %92, %91 : vector<8x64xf32>
    %94 = arith.subf %81, %93 : vector<8x64xf32>
    %95 = math.exp %94 : vector<8x64xf32>
    %96 = arith.subf %86, %93 : vector<8x64xf32>
    %97 = math.exp %96 : vector<8x64xf32>
    %98 = arith.subf %91, %93 : vector<8x64xf32>
    %99 = math.exp %98 : vector<8x64xf32>
    %100 = arith.addf %95, %97 : vector<8x64xf32>
    %101 = arith.addf %100, %99 : vector<8x64xf32>
    %102 = arith.mulf %95, %24 : vector<8x64xf32>
    %103 = arith.mulf %97, %31 : vector<8x64xf32>
    %104 = arith.addf %102, %103 : vector<8x64xf32>
    %105 = arith.mulf %99, %38 : vector<8x64xf32>
    %106 = arith.addf %104, %105 : vector<8x64xf32>
    %107 = tpu.reciprocal %101 {approx = true} : vector<8x64xf32> -> vector<8x64xf32>
    %108 = arith.mulf %106, %107 : vector<8x64xf32>
    %109 = arith.mulf %43, %23 : vector<8x64xf32>
    %110 = arith.truncf %109 : vector<8x64xf32> to vector<8x64xbf16>
    %cst_34 = arith.constant dense<0.000000e+00> : vector<8x64xf32>
    %111 = tpu.matmul %110, %2, %cst_34 {dimension_numbers = #tpu.dot_dimension_numbers<[1], [0], [0], [1], [0, 0, 1, 1], [], []>} : vector<8x64xbf16>, vector<64x64xbf16>, vector<8x64xf32> -> vector<8x64xf32>
    %cst_35 = arith.constant 2.500000e-01 : f32
    %112 = vector.broadcast %cst_35 : f32 to vector<8x64xf32>
    %113 = arith.mulf %111, %112 : vector<8x64xf32>
    %114 = arith.mulf %43, %30 : vector<8x64xf32>
    %115 = arith.truncf %114 : vector<8x64xf32> to vector<8x64xbf16>
    %cst_36 = arith.constant dense<0.000000e+00> : vector<8x64xf32>
    %116 = tpu.matmul %115, %2, %cst_36 {dimension_numbers = #tpu.dot_dimension_numbers<[1], [0], [0], [1], [0, 0, 1, 1], [], []>} : vector<8x64xbf16>, vector<64x64xbf16>, vector<8x64xf32> -> vector<8x64xf32>
    %cst_37 = arith.constant 2.500000e-01 : f32
    %117 = vector.broadcast %cst_37 : f32 to vector<8x64xf32>
    %118 = arith.mulf %116, %117 : vector<8x64xf32>
    %119 = arith.mulf %43, %37 : vector<8x64xf32>
    %120 = arith.truncf %119 : vector<8x64xf32> to vector<8x64xbf16>
    %cst_38 = arith.constant dense<0.000000e+00> : vector<8x64xf32>
    %121 = tpu.matmul %120, %2, %cst_38 {dimension_numbers = #tpu.dot_dimension_numbers<[1], [0], [0], [1], [0, 0, 1, 1], [], []>} : vector<8x64xbf16>, vector<64x64xbf16>, vector<8x64xf32> -> vector<8x64xf32>
    %cst_39 = arith.constant 2.500000e-01 : f32
    %122 = vector.broadcast %cst_39 : f32 to vector<8x64xf32>
    %123 = arith.mulf %121, %122 : vector<8x64xf32>
    %124 = arith.mulf %43, %44 : vector<8x64xf32>
    %125 = arith.truncf %124 : vector<8x64xf32> to vector<8x64xbf16>
    %cst_40 = arith.constant dense<0.000000e+00> : vector<8x64xf32>
    %126 = tpu.matmul %125, %2, %cst_40 {dimension_numbers = #tpu.dot_dimension_numbers<[1], [0], [0], [1], [0, 0, 1, 1], [], []>} : vector<8x64xbf16>, vector<64x64xbf16>, vector<8x64xf32> -> vector<8x64xf32>
    %cst_41 = arith.constant 2.500000e-01 : f32
    %127 = vector.broadcast %cst_41 : f32 to vector<8x64xf32>
    %128 = arith.mulf %126, %127 : vector<8x64xf32>
    %129 = arith.maximumf %113, %118 : vector<8x64xf32>
    %130 = arith.maximumf %129, %123 : vector<8x64xf32>
    %131 = arith.maximumf %130, %128 : vector<8x64xf32>
    %132 = arith.subf %113, %131 : vector<8x64xf32>
    %133 = math.exp %132 : vector<8x64xf32>
    %134 = arith.subf %118, %131 : vector<8x64xf32>
    %135 = math.exp %134 : vector<8x64xf32>
    %136 = arith.subf %123, %131 : vector<8x64xf32>
    %137 = math.exp %136 : vector<8x64xf32>
    %138 = arith.subf %128, %131 : vector<8x64xf32>
    %139 = math.exp %138 : vector<8x64xf32>
    %140 = arith.addf %133, %135 : vector<8x64xf32>
    %141 = arith.addf %140, %137 : vector<8x64xf32>
    %142 = arith.addf %141, %139 : vector<8x64xf32>
    %143 = arith.mulf %133, %24 : vector<8x64xf32>
    %144 = arith.mulf %135, %31 : vector<8x64xf32>
    %145 = arith.addf %143, %144 : vector<8x64xf32>
    %146 = arith.mulf %137, %38 : vector<8x64xf32>
    %147 = arith.addf %145, %146 : vector<8x64xf32>
    %148 = arith.mulf %139, %45 : vector<8x64xf32>
    %149 = arith.addf %147, %148 : vector<8x64xf32>
    %150 = tpu.reciprocal %142 {approx = true} : vector<8x64xf32> -> vector<8x64xf32>
    %151 = arith.mulf %149, %150 : vector<8x64xf32>
    %152 = tpu.concatenate %55, %76, %108, %151 in 0 : vector<8x64xf32>, vector<8x64xf32>, vector<8x64xf32>, vector<8x64xf32> -> vector<32x64xf32>
    %153 = arith.truncf %152 : vector<32x64xf32> to vector<32x64xbf16>
    %c0_42 = arith.constant 0 : index
    %c0_43 = arith.constant 0 : index
    %c0_44 = arith.constant 0 : index
    %154 = vector.load %arg3[%c0_42, %c0_43, %c0_44] : memref<2x64x64xbf16, #tpu.memory_space<vmem>>, vector<1x64x64xbf16>
    %155 = vector.shape_cast %154 : vector<1x64x64xbf16> to vector<64x64xbf16>
    %cst_45 = arith.constant dense<0.000000e+00> : vector<32x64xf32>
    %156 = tpu.matmul %153, %155, %cst_45 {dimension_numbers = #tpu.dot_dimension_numbers<[1], [0], [0], [1], [0, 0, 1, 1], [], []>} : vector<32x64xbf16>, vector<64x64xbf16>, vector<32x64xf32> -> vector<32x64xf32>
    %157 = arith.addf %16, %156 : vector<32x64xf32>
    %c0_46 = arith.constant 0 : index
    %c0_47 = arith.constant 0 : index
    %c0_48 = arith.constant 0 : index
    %158 = vector.load %arg7[%c0_46, %c0_47, %c0_48] : memref<2x1x64xf32, #tpu.memory_space<vmem>>, vector<1x1x64xf32>
    %159 = vector.shape_cast %158 : vector<1x1x64xf32> to vector<1x64xf32>
    %160 = arith.mulf %157, %157 : vector<32x64xf32>
    %cst_49 = arith.constant dense<0.000000e+00> : vector<32xf32>
    %161 = vector.multi_reduction <add>, %160, %cst_49 [1] : vector<32x64xf32> to vector<32xf32>
    %162 = vector.shape_cast %161 : vector<32xf32> to vector<32x1xf32>
    %cst_50 = arith.constant 6.400000e+01 : f32
    %163 = vector.broadcast %cst_50 : f32 to vector<32x1xf32>
    %164 = arith.divf %162, %163 : vector<32x1xf32>
    %cst_51 = arith.constant 9.99999997E-7 : f32
    %165 = vector.broadcast %cst_51 : f32 to vector<32x1xf32>
    %166 = arith.addf %164, %165 : vector<32x1xf32>
    %167 = math.rsqrt %166 : vector<32x1xf32>
    %168 = vector.broadcast %167 : vector<32x1xf32> to vector<32x64xf32>
    %169 = arith.mulf %157, %168 : vector<32x64xf32>
    %170 = vector.broadcast %159 : vector<1x64xf32> to vector<32x64xf32>
    %171 = arith.mulf %169, %170 : vector<32x64xf32>
    %172 = arith.truncf %171 : vector<32x64xf32> to vector<32x64xbf16>
    %c0_52 = arith.constant 0 : index
    %c0_53 = arith.constant 0 : index
    %c0_54 = arith.constant 0 : index
    %173 = vector.load %arg4[%c0_52, %c0_53, %c0_54] : memref<2x64x512xbf16, #tpu.memory_space<vmem>>, vector<1x64x512xbf16>
    %174 = vector.shape_cast %173 : vector<1x64x512xbf16> to vector<64x512xbf16>
    %cst_55 = arith.constant dense<0.000000e+00> : vector<32x512xf32>
    %175 = tpu.matmul %172, %174, %cst_55 {dimension_numbers = #tpu.dot_dimension_numbers<[1], [0], [0], [1], [0, 0, 1, 1], [], []>} : vector<32x64xbf16>, vector<64x512xbf16>, vector<32x512xf32> -> vector<32x512xf32>
    %176 = vector.extract_strided_slice %175 {offsets = [0, 0], sizes = [32, 256], strides = [1, 1]} : vector<32x512xf32> to vector<32x256xf32>
    %177 = vector.extract_strided_slice %175 {offsets = [0, 256], sizes = [32, 256], strides = [1, 1]} : vector<32x512xf32> to vector<32x256xf32>
    %178 = arith.negf %176 : vector<32x256xf32>
    %179 = math.exp %178 : vector<32x256xf32>
    %cst_56 = arith.constant 1.000000e+00 : f32
    %180 = vector.broadcast %cst_56 : f32 to vector<32x256xf32>
    %181 = arith.addf %180, %179 : vector<32x256xf32>
    %182 = arith.divf %180, %181 : vector<32x256xf32>
    %183 = arith.mulf %176, %182 : vector<32x256xf32>
    %184 = arith.mulf %183, %177 : vector<32x256xf32>
    %185 = arith.truncf %184 : vector<32x256xf32> to vector<32x256xbf16>
    %c0_57 = arith.constant 0 : index
    %c0_58 = arith.constant 0 : index
    %c0_59 = arith.constant 0 : index
    %186 = vector.load %arg5[%c0_57, %c0_58, %c0_59] : memref<2x256x64xbf16, #tpu.memory_space<vmem>>, vector<1x256x64xbf16>
    %187 = vector.shape_cast %186 : vector<1x256x64xbf16> to vector<256x64xbf16>
    %cst_60 = arith.constant dense<0.000000e+00> : vector<32x64xf32>
    %188 = tpu.matmul %185, %187, %cst_60 {dimension_numbers = #tpu.dot_dimension_numbers<[1], [0], [0], [1], [0, 0, 1, 1], [], []>} : vector<32x256xbf16>, vector<256x64xbf16>, vector<32x64xf32> -> vector<32x64xf32>
    %189 = arith.addf %157, %188 : vector<32x64xf32>
    %c1_61 = arith.constant 1 : index
    %c0_62 = arith.constant 0 : index
    %c0_63 = arith.constant 0 : index
    %190 = vector.load %arg6[%c1_61, %c0_62, %c0_63] : memref<2x1x64xf32, #tpu.memory_space<vmem>>, vector<1x1x64xf32>
    %191 = vector.shape_cast %190 : vector<1x1x64xf32> to vector<1x64xf32>
    %192 = arith.mulf %189, %189 : vector<32x64xf32>
    %cst_64 = arith.constant dense<0.000000e+00> : vector<32xf32>
    %193 = vector.multi_reduction <add>, %192, %cst_64 [1] : vector<32x64xf32> to vector<32xf32>
    %194 = vector.shape_cast %193 : vector<32xf32> to vector<32x1xf32>
    %cst_65 = arith.constant 6.400000e+01 : f32
    %195 = vector.broadcast %cst_65 : f32 to vector<32x1xf32>
    %196 = arith.divf %194, %195 : vector<32x1xf32>
    %cst_66 = arith.constant 9.99999997E-7 : f32
    %197 = vector.broadcast %cst_66 : f32 to vector<32x1xf32>
    %198 = arith.addf %196, %197 : vector<32x1xf32>
    %199 = math.rsqrt %198 : vector<32x1xf32>
    %200 = vector.broadcast %199 : vector<32x1xf32> to vector<32x64xf32>
    %201 = arith.mulf %189, %200 : vector<32x64xf32>
    %202 = vector.broadcast %191 : vector<1x64xf32> to vector<32x64xf32>
    %203 = arith.mulf %201, %202 : vector<32x64xf32>
    %204 = arith.truncf %203 : vector<32x64xf32> to vector<32x64xbf16>
    %205 = vector.extract_strided_slice %204 {offsets = [0, 0], sizes = [8, 64], strides = [1, 1]} : vector<32x64xbf16> to vector<8x64xbf16>
    %c4 = arith.constant 4 : index
    %c0_67 = arith.constant 0 : index
    %c0_68 = arith.constant 0 : index
    %206 = vector.load %arg2[%c4, %c0_67, %c0_68] : memref<8x64x192xbf16, #tpu.memory_space<vmem>>, vector<1x64x192xbf16>
    %207 = vector.shape_cast %206 : vector<1x64x192xbf16> to vector<64x192xbf16>
    %cst_69 = arith.constant dense<0.000000e+00> : vector<8x192xf32>
    %208 = tpu.matmul %205, %207, %cst_69 {dimension_numbers = #tpu.dot_dimension_numbers<[1], [0], [0], [1], [0, 0, 1, 1], [], []>} : vector<8x64xbf16>, vector<64x192xbf16>, vector<8x192xf32> -> vector<8x192xf32>
    %209 = vector.extract_strided_slice %208 {offsets = [0, 0], sizes = [8, 64], strides = [1, 1]} : vector<8x192xf32> to vector<8x64xf32>
    %210 = vector.extract_strided_slice %208 {offsets = [0, 64], sizes = [8, 64], strides = [1, 1]} : vector<8x192xf32> to vector<8x64xf32>
    %211 = vector.extract_strided_slice %208 {offsets = [0, 128], sizes = [8, 64], strides = [1, 1]} : vector<8x192xf32> to vector<8x64xf32>
    %212 = vector.extract_strided_slice %204 {offsets = [8, 0], sizes = [8, 64], strides = [1, 1]} : vector<32x64xbf16> to vector<8x64xbf16>
    %c5 = arith.constant 5 : index
    %c0_70 = arith.constant 0 : index
    %c0_71 = arith.constant 0 : index
    %213 = vector.load %arg2[%c5, %c0_70, %c0_71] : memref<8x64x192xbf16, #tpu.memory_space<vmem>>, vector<1x64x192xbf16>
    %214 = vector.shape_cast %213 : vector<1x64x192xbf16> to vector<64x192xbf16>
    %cst_72 = arith.constant dense<0.000000e+00> : vector<8x192xf32>
    %215 = tpu.matmul %212, %214, %cst_72 {dimension_numbers = #tpu.dot_dimension_numbers<[1], [0], [0], [1], [0, 0, 1, 1], [], []>} : vector<8x64xbf16>, vector<64x192xbf16>, vector<8x192xf32> -> vector<8x192xf32>
    %216 = vector.extract_strided_slice %215 {offsets = [0, 0], sizes = [8, 64], strides = [1, 1]} : vector<8x192xf32> to vector<8x64xf32>
    %217 = vector.extract_strided_slice %215 {offsets = [0, 64], sizes = [8, 64], strides = [1, 1]} : vector<8x192xf32> to vector<8x64xf32>
    %218 = vector.extract_strided_slice %215 {offsets = [0, 128], sizes = [8, 64], strides = [1, 1]} : vector<8x192xf32> to vector<8x64xf32>
    %219 = vector.extract_strided_slice %204 {offsets = [16, 0], sizes = [8, 64], strides = [1, 1]} : vector<32x64xbf16> to vector<8x64xbf16>
    %c6 = arith.constant 6 : index
    %c0_73 = arith.constant 0 : index
    %c0_74 = arith.constant 0 : index
    %220 = vector.load %arg2[%c6, %c0_73, %c0_74] : memref<8x64x192xbf16, #tpu.memory_space<vmem>>, vector<1x64x192xbf16>
    %221 = vector.shape_cast %220 : vector<1x64x192xbf16> to vector<64x192xbf16>
    %cst_75 = arith.constant dense<0.000000e+00> : vector<8x192xf32>
    %222 = tpu.matmul %219, %221, %cst_75 {dimension_numbers = #tpu.dot_dimension_numbers<[1], [0], [0], [1], [0, 0, 1, 1], [], []>} : vector<8x64xbf16>, vector<64x192xbf16>, vector<8x192xf32> -> vector<8x192xf32>
    %223 = vector.extract_strided_slice %222 {offsets = [0, 0], sizes = [8, 64], strides = [1, 1]} : vector<8x192xf32> to vector<8x64xf32>
    %224 = vector.extract_strided_slice %222 {offsets = [0, 64], sizes = [8, 64], strides = [1, 1]} : vector<8x192xf32> to vector<8x64xf32>
    %225 = vector.extract_strided_slice %222 {offsets = [0, 128], sizes = [8, 64], strides = [1, 1]} : vector<8x192xf32> to vector<8x64xf32>
    %226 = vector.extract_strided_slice %204 {offsets = [24, 0], sizes = [8, 64], strides = [1, 1]} : vector<32x64xbf16> to vector<8x64xbf16>
    %c7 = arith.constant 7 : index
    %c0_76 = arith.constant 0 : index
    %c0_77 = arith.constant 0 : index
    %227 = vector.load %arg2[%c7, %c0_76, %c0_77] : memref<8x64x192xbf16, #tpu.memory_space<vmem>>, vector<1x64x192xbf16>
    %228 = vector.shape_cast %227 : vector<1x64x192xbf16> to vector<64x192xbf16>
    %cst_78 = arith.constant dense<0.000000e+00> : vector<8x192xf32>
    %229 = tpu.matmul %226, %228, %cst_78 {dimension_numbers = #tpu.dot_dimension_numbers<[1], [0], [0], [1], [0, 0, 1, 1], [], []>} : vector<8x64xbf16>, vector<64x192xbf16>, vector<8x192xf32> -> vector<8x192xf32>
    %230 = vector.extract_strided_slice %229 {offsets = [0, 0], sizes = [8, 64], strides = [1, 1]} : vector<8x192xf32> to vector<8x64xf32>
    %231 = vector.extract_strided_slice %229 {offsets = [0, 64], sizes = [8, 64], strides = [1, 1]} : vector<8x192xf32> to vector<8x64xf32>
    %232 = vector.extract_strided_slice %229 {offsets = [0, 128], sizes = [8, 64], strides = [1, 1]} : vector<8x192xf32> to vector<8x64xf32>
    %233 = arith.mulf %209, %210 : vector<8x64xf32>
    %234 = arith.truncf %233 : vector<8x64xf32> to vector<8x64xbf16>
    %cst_79 = arith.constant dense<0.000000e+00> : vector<8x64xf32>
    %235 = tpu.matmul %234, %2, %cst_79 {dimension_numbers = #tpu.dot_dimension_numbers<[1], [0], [0], [1], [0, 0, 1, 1], [], []>} : vector<8x64xbf16>, vector<64x64xbf16>, vector<8x64xf32> -> vector<8x64xf32>
    %cst_80 = arith.constant 2.500000e-01 : f32
    %236 = vector.broadcast %cst_80 : f32 to vector<8x64xf32>
    %237 = arith.mulf %235, %236 : vector<8x64xf32>
    %238 = arith.subf %237, %237 : vector<8x64xf32>
    %239 = math.exp %238 : vector<8x64xf32>
    %240 = arith.mulf %239, %211 : vector<8x64xf32>
    %241 = tpu.reciprocal %239 {approx = true} : vector<8x64xf32> -> vector<8x64xf32>
    %242 = arith.mulf %240, %241 : vector<8x64xf32>
    %243 = arith.mulf %216, %210 : vector<8x64xf32>
    %244 = arith.truncf %243 : vector<8x64xf32> to vector<8x64xbf16>
    %cst_81 = arith.constant dense<0.000000e+00> : vector<8x64xf32>
    %245 = tpu.matmul %244, %2, %cst_81 {dimension_numbers = #tpu.dot_dimension_numbers<[1], [0], [0], [1], [0, 0, 1, 1], [], []>} : vector<8x64xbf16>, vector<64x64xbf16>, vector<8x64xf32> -> vector<8x64xf32>
    %cst_82 = arith.constant 2.500000e-01 : f32
    %246 = vector.broadcast %cst_82 : f32 to vector<8x64xf32>
    %247 = arith.mulf %245, %246 : vector<8x64xf32>
    %248 = arith.mulf %216, %217 : vector<8x64xf32>
    %249 = arith.truncf %248 : vector<8x64xf32> to vector<8x64xbf16>
    %cst_83 = arith.constant dense<0.000000e+00> : vector<8x64xf32>
    %250 = tpu.matmul %249, %2, %cst_83 {dimension_numbers = #tpu.dot_dimension_numbers<[1], [0], [0], [1], [0, 0, 1, 1], [], []>} : vector<8x64xbf16>, vector<64x64xbf16>, vector<8x64xf32> -> vector<8x64xf32>
    %cst_84 = arith.constant 2.500000e-01 : f32
    %251 = vector.broadcast %cst_84 : f32 to vector<8x64xf32>
    %252 = arith.mulf %250, %251 : vector<8x64xf32>
    %253 = arith.maximumf %247, %252 : vector<8x64xf32>
    %254 = arith.subf %247, %253 : vector<8x64xf32>
    %255 = math.exp %254 : vector<8x64xf32>
    %256 = arith.subf %252, %253 : vector<8x64xf32>
    %257 = math.exp %256 : vector<8x64xf32>
    %258 = arith.addf %255, %257 : vector<8x64xf32>
    %259 = arith.mulf %255, %211 : vector<8x64xf32>
    %260 = arith.mulf %257, %218 : vector<8x64xf32>
    %261 = arith.addf %259, %260 : vector<8x64xf32>
    %262 = tpu.reciprocal %258 {approx = true} : vector<8x64xf32> -> vector<8x64xf32>
    %263 = arith.mulf %261, %262 : vector<8x64xf32>
    %264 = arith.mulf %223, %210 : vector<8x64xf32>
    %265 = arith.truncf %264 : vector<8x64xf32> to vector<8x64xbf16>
    %cst_85 = arith.constant dense<0.000000e+00> : vector<8x64xf32>
    %266 = tpu.matmul %265, %2, %cst_85 {dimension_numbers = #tpu.dot_dimension_numbers<[1], [0], [0], [1], [0, 0, 1, 1], [], []>} : vector<8x64xbf16>, vector<64x64xbf16>, vector<8x64xf32> -> vector<8x64xf32>
    %cst_86 = arith.constant 2.500000e-01 : f32
    %267 = vector.broadcast %cst_86 : f32 to vector<8x64xf32>
    %268 = arith.mulf %266, %267 : vector<8x64xf32>
    %269 = arith.mulf %223, %217 : vector<8x64xf32>
    %270 = arith.truncf %269 : vector<8x64xf32> to vector<8x64xbf16>
    %cst_87 = arith.constant dense<0.000000e+00> : vector<8x64xf32>
    %271 = tpu.matmul %270, %2, %cst_87 {dimension_numbers = #tpu.dot_dimension_numbers<[1], [0], [0], [1], [0, 0, 1, 1], [], []>} : vector<8x64xbf16>, vector<64x64xbf16>, vector<8x64xf32> -> vector<8x64xf32>
    %cst_88 = arith.constant 2.500000e-01 : f32
    %272 = vector.broadcast %cst_88 : f32 to vector<8x64xf32>
    %273 = arith.mulf %271, %272 : vector<8x64xf32>
    %274 = arith.mulf %223, %224 : vector<8x64xf32>
    %275 = arith.truncf %274 : vector<8x64xf32> to vector<8x64xbf16>
    %cst_89 = arith.constant dense<0.000000e+00> : vector<8x64xf32>
    %276 = tpu.matmul %275, %2, %cst_89 {dimension_numbers = #tpu.dot_dimension_numbers<[1], [0], [0], [1], [0, 0, 1, 1], [], []>} : vector<8x64xbf16>, vector<64x64xbf16>, vector<8x64xf32> -> vector<8x64xf32>
    %cst_90 = arith.constant 2.500000e-01 : f32
    %277 = vector.broadcast %cst_90 : f32 to vector<8x64xf32>
    %278 = arith.mulf %276, %277 : vector<8x64xf32>
    %279 = arith.maximumf %268, %273 : vector<8x64xf32>
    %280 = arith.maximumf %279, %278 : vector<8x64xf32>
    %281 = arith.subf %268, %280 : vector<8x64xf32>
    %282 = math.exp %281 : vector<8x64xf32>
    %283 = arith.subf %273, %280 : vector<8x64xf32>
    %284 = math.exp %283 : vector<8x64xf32>
    %285 = arith.subf %278, %280 : vector<8x64xf32>
    %286 = math.exp %285 : vector<8x64xf32>
    %287 = arith.addf %282, %284 : vector<8x64xf32>
    %288 = arith.addf %287, %286 : vector<8x64xf32>
    %289 = arith.mulf %282, %211 : vector<8x64xf32>
    %290 = arith.mulf %284, %218 : vector<8x64xf32>
    %291 = arith.addf %289, %290 : vector<8x64xf32>
    %292 = arith.mulf %286, %225 : vector<8x64xf32>
    %293 = arith.addf %291, %292 : vector<8x64xf32>
    %294 = tpu.reciprocal %288 {approx = true} : vector<8x64xf32> -> vector<8x64xf32>
    %295 = arith.mulf %293, %294 : vector<8x64xf32>
    %296 = arith.mulf %230, %210 : vector<8x64xf32>
    %297 = arith.truncf %296 : vector<8x64xf32> to vector<8x64xbf16>
    %cst_91 = arith.constant dense<0.000000e+00> : vector<8x64xf32>
    %298 = tpu.matmul %297, %2, %cst_91 {dimension_numbers = #tpu.dot_dimension_numbers<[1], [0], [0], [1], [0, 0, 1, 1], [], []>} : vector<8x64xbf16>, vector<64x64xbf16>, vector<8x64xf32> -> vector<8x64xf32>
    %cst_92 = arith.constant 2.500000e-01 : f32
    %299 = vector.broadcast %cst_92 : f32 to vector<8x64xf32>
    %300 = arith.mulf %298, %299 : vector<8x64xf32>
    %301 = arith.mulf %230, %217 : vector<8x64xf32>
    %302 = arith.truncf %301 : vector<8x64xf32> to vector<8x64xbf16>
    %cst_93 = arith.constant dense<0.000000e+00> : vector<8x64xf32>
    %303 = tpu.matmul %302, %2, %cst_93 {dimension_numbers = #tpu.dot_dimension_numbers<[1], [0], [0], [1], [0, 0, 1, 1], [], []>} : vector<8x64xbf16>, vector<64x64xbf16>, vector<8x64xf32> -> vector<8x64xf32>
    %cst_94 = arith.constant 2.500000e-01 : f32
    %304 = vector.broadcast %cst_94 : f32 to vector<8x64xf32>
    %305 = arith.mulf %303, %304 : vector<8x64xf32>
    %306 = arith.mulf %230, %224 : vector<8x64xf32>
    %307 = arith.truncf %306 : vector<8x64xf32> to vector<8x64xbf16>
    %cst_95 = arith.constant dense<0.000000e+00> : vector<8x64xf32>
    %308 = tpu.matmul %307, %2, %cst_95 {dimension_numbers = #tpu.dot_dimension_numbers<[1], [0], [0], [1], [0, 0, 1, 1], [], []>} : vector<8x64xbf16>, vector<64x64xbf16>, vector<8x64xf32> -> vector<8x64xf32>
    %cst_96 = arith.constant 2.500000e-01 : f32
    %309 = vector.broadcast %cst_96 : f32 to vector<8x64xf32>
    %310 = arith.mulf %308, %309 : vector<8x64xf32>
    %311 = arith.mulf %230, %231 : vector<8x64xf32>
    %312 = arith.truncf %311 : vector<8x64xf32> to vector<8x64xbf16>
    %cst_97 = arith.constant dense<0.000000e+00> : vector<8x64xf32>
    %313 = tpu.matmul %312, %2, %cst_97 {dimension_numbers = #tpu.dot_dimension_numbers<[1], [0], [0], [1], [0, 0, 1, 1], [], []>} : vector<8x64xbf16>, vector<64x64xbf16>, vector<8x64xf32> -> vector<8x64xf32>
    %cst_98 = arith.constant 2.500000e-01 : f32
    %314 = vector.broadcast %cst_98 : f32 to vector<8x64xf32>
    %315 = arith.mulf %313, %314 : vector<8x64xf32>
    %316 = arith.maximumf %300, %305 : vector<8x64xf32>
    %317 = arith.maximumf %316, %310 : vector<8x64xf32>
    %318 = arith.maximumf %317, %315 : vector<8x64xf32>
    %319 = arith.subf %300, %318 : vector<8x64xf32>
    %320 = math.exp %319 : vector<8x64xf32>
    %321 = arith.subf %305, %318 : vector<8x64xf32>
    %322 = math.exp %321 : vector<8x64xf32>
    %323 = arith.subf %310, %318 : vector<8x64xf32>
    %324 = math.exp %323 : vector<8x64xf32>
    %325 = arith.subf %315, %318 : vector<8x64xf32>
    %326 = math.exp %325 : vector<8x64xf32>
    %327 = arith.addf %320, %322 : vector<8x64xf32>
    %328 = arith.addf %327, %324 : vector<8x64xf32>
    %329 = arith.addf %328, %326 : vector<8x64xf32>
    %330 = arith.mulf %320, %211 : vector<8x64xf32>
    %331 = arith.mulf %322, %218 : vector<8x64xf32>
    %332 = arith.addf %330, %331 : vector<8x64xf32>
    %333 = arith.mulf %324, %225 : vector<8x64xf32>
    %334 = arith.addf %332, %333 : vector<8x64xf32>
    %335 = arith.mulf %326, %232 : vector<8x64xf32>
    %336 = arith.addf %334, %335 : vector<8x64xf32>
    %337 = tpu.reciprocal %329 {approx = true} : vector<8x64xf32> -> vector<8x64xf32>
    %338 = arith.mulf %336, %337 : vector<8x64xf32>
    %339 = tpu.concatenate %242, %263, %295, %338 in 0 : vector<8x64xf32>, vector<8x64xf32>, vector<8x64xf32>, vector<8x64xf32> -> vector<32x64xf32>
    %340 = arith.truncf %339 : vector<32x64xf32> to vector<32x64xbf16>
    %c1_99 = arith.constant 1 : index
    %c0_100 = arith.constant 0 : index
    %c0_101 = arith.constant 0 : index
    %341 = vector.load %arg3[%c1_99, %c0_100, %c0_101] : memref<2x64x64xbf16, #tpu.memory_space<vmem>>, vector<1x64x64xbf16>
    %342 = vector.shape_cast %341 : vector<1x64x64xbf16> to vector<64x64xbf16>
    %cst_102 = arith.constant dense<0.000000e+00> : vector<32x64xf32>
    %343 = tpu.matmul %340, %342, %cst_102 {dimension_numbers = #tpu.dot_dimension_numbers<[1], [0], [0], [1], [0, 0, 1, 1], [], []>} : vector<32x64xbf16>, vector<64x64xbf16>, vector<32x64xf32> -> vector<32x64xf32>
    %344 = arith.addf %203, %343 : vector<32x64xf32>
    %c1_103 = arith.constant 1 : index
    %c0_104 = arith.constant 0 : index
    %c0_105 = arith.constant 0 : index
    %345 = vector.load %arg7[%c1_103, %c0_104, %c0_105] : memref<2x1x64xf32, #tpu.memory_space<vmem>>, vector<1x1x64xf32>
    %346 = vector.shape_cast %345 : vector<1x1x64xf32> to vector<1x64xf32>
    %347 = arith.mulf %344, %344 : vector<32x64xf32>
    %cst_106 = arith.constant dense<0.000000e+00> : vector<32xf32>
    %348 = vector.multi_reduction <add>, %347, %cst_106 [1] : vector<32x64xf32> to vector<32xf32>
    %349 = vector.shape_cast %348 : vector<32xf32> to vector<32x1xf32>
    %cst_107 = arith.constant 6.400000e+01 : f32
    %350 = vector.broadcast %cst_107 : f32 to vector<32x1xf32>
    %351 = arith.divf %349, %350 : vector<32x1xf32>
    %cst_108 = arith.constant 9.99999997E-7 : f32
    %352 = vector.broadcast %cst_108 : f32 to vector<32x1xf32>
    %353 = arith.addf %351, %352 : vector<32x1xf32>
    %354 = math.rsqrt %353 : vector<32x1xf32>
    %355 = vector.broadcast %354 : vector<32x1xf32> to vector<32x64xf32>
    %356 = arith.mulf %344, %355 : vector<32x64xf32>
    %357 = vector.broadcast %346 : vector<1x64xf32> to vector<32x64xf32>
    %358 = arith.mulf %356, %357 : vector<32x64xf32>
    %359 = arith.truncf %358 : vector<32x64xf32> to vector<32x64xbf16>
    %c1_109 = arith.constant 1 : index
    %c0_110 = arith.constant 0 : index
    %c0_111 = arith.constant 0 : index
    %360 = vector.load %arg4[%c1_109, %c0_110, %c0_111] : memref<2x64x512xbf16, #tpu.memory_space<vmem>>, vector<1x64x512xbf16>
    %361 = vector.shape_cast %360 : vector<1x64x512xbf16> to vector<64x512xbf16>
    %cst_112 = arith.constant dense<0.000000e+00> : vector<32x512xf32>
    %362 = tpu.matmul %359, %361, %cst_112 {dimension_numbers = #tpu.dot_dimension_numbers<[1], [0], [0], [1], [0, 0, 1, 1], [], []>} : vector<32x64xbf16>, vector<64x512xbf16>, vector<32x512xf32> -> vector<32x512xf32>
    %363 = vector.extract_strided_slice %362 {offsets = [0, 0], sizes = [32, 256], strides = [1, 1]} : vector<32x512xf32> to vector<32x256xf32>
    %364 = vector.extract_strided_slice %362 {offsets = [0, 256], sizes = [32, 256], strides = [1, 1]} : vector<32x512xf32> to vector<32x256xf32>
    %365 = arith.negf %363 : vector<32x256xf32>
    %366 = math.exp %365 : vector<32x256xf32>
    %cst_113 = arith.constant 1.000000e+00 : f32
    %367 = vector.broadcast %cst_113 : f32 to vector<32x256xf32>
    %368 = arith.addf %367, %366 : vector<32x256xf32>
    %369 = arith.divf %367, %368 : vector<32x256xf32>
    %370 = arith.mulf %363, %369 : vector<32x256xf32>
    %371 = arith.mulf %370, %364 : vector<32x256xf32>
    %372 = arith.truncf %371 : vector<32x256xf32> to vector<32x256xbf16>
    %c1_114 = arith.constant 1 : index
    %c0_115 = arith.constant 0 : index
    %c0_116 = arith.constant 0 : index
    %373 = vector.load %arg5[%c1_114, %c0_115, %c0_116] : memref<2x256x64xbf16, #tpu.memory_space<vmem>>, vector<1x256x64xbf16>
    %374 = vector.shape_cast %373 : vector<1x256x64xbf16> to vector<256x64xbf16>
    %cst_117 = arith.constant dense<0.000000e+00> : vector<32x64xf32>
    %375 = tpu.matmul %372, %374, %cst_117 {dimension_numbers = #tpu.dot_dimension_numbers<[1], [0], [0], [1], [0, 0, 1, 1], [], []>} : vector<32x256xbf16>, vector<256x64xbf16>, vector<32x64xf32> -> vector<32x64xf32>
    %376 = arith.addf %344, %375 : vector<32x64xf32>
    %377 = vector.extract_strided_slice %376 {offsets = [24, 0], sizes = [8, 64], strides = [1, 1]} : vector<32x64xf32> to vector<8x64xf32>
    %c0_118 = arith.constant 0 : index
    %c0_119 = arith.constant 0 : index
    %378 = vector.load %arg8[%c0_118, %c0_119] : memref<1x64xf32, #tpu.memory_space<vmem>>, vector<1x64xf32>
    %379 = arith.mulf %377, %377 : vector<8x64xf32>
    %cst_120 = arith.constant dense<0.000000e+00> : vector<8xf32>
    %380 = vector.multi_reduction <add>, %379, %cst_120 [1] : vector<8x64xf32> to vector<8xf32>
    %381 = vector.shape_cast %380 : vector<8xf32> to vector<8x1xf32>
    %cst_121 = arith.constant 6.400000e+01 : f32
    %382 = vector.broadcast %cst_121 : f32 to vector<8x1xf32>
    %383 = arith.divf %381, %382 : vector<8x1xf32>
    %cst_122 = arith.constant 9.99999997E-7 : f32
    %384 = vector.broadcast %cst_122 : f32 to vector<8x1xf32>
    %385 = arith.addf %383, %384 : vector<8x1xf32>
    %386 = math.rsqrt %385 : vector<8x1xf32>
    %387 = vector.broadcast %386 : vector<8x1xf32> to vector<8x64xf32>
    %388 = arith.mulf %377, %387 : vector<8x64xf32>
    %389 = vector.broadcast %378 : vector<1x64xf32> to vector<8x64xf32>
    %390 = arith.mulf %388, %389 : vector<8x64xf32>
    %c0_123 = arith.constant 0 : index
    %c0_124 = arith.constant 0 : index
    %391 = vector.load %arg10[%c0_123, %c0_124] : memref<8x64xf32, #tpu.memory_space<vmem>>, vector<8x64xf32>
    tpu.vector_store %arg10[%c0_123, %c0_124], %390 {strides = array<i32>} : memref<8x64xf32, #tpu.memory_space<vmem>>, vector<8x64xf32>,
    return
  }
  func.func @transform_0(%arg0: i32) -> (i32, i32, i32) {
    %c0_i32 = arith.constant 0 : i32
    %c0_i32_0 = arith.constant 0 : i32
    %c0_i32_1 = arith.constant 0 : i32
    return %c0_i32, %arg0, %c0_i32_0 : i32, i32, i32
  }
  func.func @transform_1(%arg0: i32) -> (i32, i32, i32) {
    %c0_i32 = arith.constant 0 : i32
    %c0_i32_0 = arith.constant 0 : i32
    %c0_i32_1 = arith.constant 0 : i32
    %c0_i32_2 = arith.constant 0 : i32
    return %c0_i32, %c0_i32_0, %c0_i32_1 : i32, i32, i32
  }
  func.func @transform_2(%arg0: i32) -> (i32, i32, i32) {
    %c0_i32 = arith.constant 0 : i32
    %c0_i32_0 = arith.constant 0 : i32
    %c0_i32_1 = arith.constant 0 : i32
    %c0_i32_2 = arith.constant 0 : i32
    return %c0_i32, %c0_i32_0, %c0_i32_1 : i32, i32, i32
  }
  func.func @transform_3(%arg0: i32) -> (i32, i32, i32) {
    %c0_i32 = arith.constant 0 : i32
    %c0_i32_0 = arith.constant 0 : i32
    %c0_i32_1 = arith.constant 0 : i32
    %c0_i32_2 = arith.constant 0 : i32
    return %c0_i32, %c0_i32_0, %c0_i32_1 : i32, i32, i32
  }
  func.func @transform_4(%arg0: i32) -> (i32, i32, i32) {
    %c0_i32 = arith.constant 0 : i32
    %c0_i32_0 = arith.constant 0 : i32
    %c0_i32_1 = arith.constant 0 : i32
    %c0_i32_2 = arith.constant 0 : i32
    return %c0_i32, %c0_i32_0, %c0_i32_1 : i32, i32, i32
  }
  func.func @transform_5(%arg0: i32) -> (i32, i32, i32) {
    %c0_i32 = arith.constant 0 : i32
    %c0_i32_0 = arith.constant 0 : i32
    %c0_i32_1 = arith.constant 0 : i32
    %c0_i32_2 = arith.constant 0 : i32
    return %c0_i32, %c0_i32_0, %c0_i32_1 : i32, i32, i32
  }
  func.func @transform_6(%arg0: i32) -> (i32, i32, i32) {
    %c0_i32 = arith.constant 0 : i32
    %c0_i32_0 = arith.constant 0 : i32
    %c0_i32_1 = arith.constant 0 : i32
    %c0_i32_2 = arith.constant 0 : i32
    return %c0_i32, %c0_i32_0, %c0_i32_1 : i32, i32, i32
  }
  func.func @transform_7(%arg0: i32) -> (i32, i32) {
    %c0_i32 = arith.constant 0 : i32
    %c0_i32_0 = arith.constant 0 : i32
    %c0_i32_1 = arith.constant 0 : i32
    return %c0_i32, %c0_i32_0 : i32, i32
  }
  func.func @transform_8(%arg0: i32) -> (i32, i32) {
    %c0_i32 = arith.constant 0 : i32
    %c0_i32_0 = arith.constant 0 : i32
    %c0_i32_1 = arith.constant 0 : i32
    return %c0_i32, %c0_i32_0 : i32, i32
  }
  func.func @transform_9(%arg0: i32) -> (i32, i32) {
    %c0_i32 = arith.constant 0 : i32
    %c0_i32_0 = arith.constant 0 : i32
    return %arg0, %c0_i32 : i32, i32
  }
}

</mosaic_0001>

<llo_original>
// kernel: tpu_custom_call.1
$region0: #{tpu_custom_call.1}
  #allocation0 [shape = 'u32[]', space=smem, size = 0x4, offset = 0x4, fixed_abs, tag = 'smem constant byte address 0x4 - core index']
  #allocation1 [shape = 'u32[144,128]{1,0:T(1,128)}', space=vmem, size = 0x12000, scoped, tag = 'internal scratch']
  %s0 = inlined_call_operand.vmem [shape: f32[4,16,64], index: 0, kind: input, shape index: {}]
  %s1 = inlined_call_operand.hbm [shape: bf16[8,64,192], index: 1, kind: input, shape index: {}]
  %s2 = inlined_call_operand.vmem [shape: bf16[2,64,64], index: 2, kind: input, shape index: {}]
  %s3 = inlined_call_operand.vmem [shape: bf16[2,64,512], index: 3, kind: input, shape index: {}]
  %s4 = inlined_call_operand.vmem [shape: bf16[2,256,64], index: 4, kind: input, shape index: {}]
  %s5 = inlined_call_operand.vmem [shape: f32[2,1,64], index: 5, kind: input, shape index: {}]
  %s6 = inlined_call_operand.vmem [shape: f32[2,1,64], index: 6, kind: input, shape index: {}]
  %s7 = inlined_call_operand.vmem [shape: f32[1,64], index: 7, kind: input, shape index: {}]
  %s8 = inlined_call_operand.hbm [shape: bf16[64,64], index: 8, kind: input, shape index: {}]
  %s9 = inlined_call_operand.hbm [shape: f32[16,64], index: 9, kind: output, shape index: {}]
  %s10 = sld [smem:[#allocation0]]
  $region115: #{tpu_custom_call.1} parent=0
    _
  %s12 = ssub.s32 1, %s10
  %s13 = scalar_select 0, %s12, %s10
  $region1: #{tpu_custom_call.1} parent=0
    #allocation2 [shape = 'u8[32768]{0}', space=vmem, size = 0x8000, scoped, tag = 'input window, operand 0']
    #allocation3 [shape = 'u8[262144]{0}', space=vmem, size = 0x40000, scoped, tag = 'input window, operand 1, single buffered']
    #allocation4 [shape = 's32[2]{0}', space=sflag, size = 0x8, scoped, tag = 'scoped memory for tpu_custom_call.1']
    #allocation5 [shape = 's32[2]{0}', space=sflag, size = 0x8, scoped, tag = 'scoped memory for tpu_custom_call.1']
    #allocation6 [shape = 'u8[16384]{0}', space=vmem, size = 0x4000, scoped, tag = 'input window, operand 8, single buffered']
    #allocation7 [shape = 's32[1]{0}', space=sflag, size = 0x4, scoped, tag = 'scoped memory for tpu_custom_call.1']
    #allocation8 [shape = 'u8[8192]{0}', space=vmem, size = 0x2000, scoped, tag = 'output window, operand 0']
    %14 = vsyncpa [#allocation4], 0
    %15 = vsyncpa [#allocation7], 0
    %16 = vsyncpa [#allocation5], 0
    %s17 = scalar_lea.sflag [#allocation5], 1
    %18 = vsyncpa %s17, 0
    loop: start=0, step=1, limit=4
    $region2: #{tpu_custom_call.1} parent=1 // loop_pre_header
      _
    $region3: #{tpu_custom_call.1} parent=1 // loop_header
      %s20 = sphi 0, %s24
      %p21 = scmp.ge.s32.totalorder %s20, 4
      %s30 = sphi 0, %s32
      %s33 = sphi 0, %s30
      %s34 = sphi 0, %s33
      %s50 = sphi 0, %s34
      %s54 = sphi 0, %s54
      %s56 = sphi 0, %s54
      %s57 = sphi 0, %s56
      %s71 = sphi 0, %s57
      %s75 = sphi 0, %s75
      %s77 = sphi 0, %s75
      %s78 = sphi 0, %s77
      %s92 = sphi 0, %s78
      %s96 = sphi 0, %s96
      %s98 = sphi 0, %s96
      %s99 = sphi 0, %s98
      %s113 = sphi 0, %s99
      %s117 = sphi 0, %s117
      %s119 = sphi 0, %s117
      %s120 = sphi 0, %s119
      %s134 = sphi 0, %s120
      %s138 = sphi 0, %s138
      %s140 = sphi 0, %s138
      %s141 = sphi 0, %s140
      %s155 = sphi 0, %s141
      %s159 = sphi 0, %s159
      %s161 = sphi 0, %s159
      %s162 = sphi 0, %s161
      %s176 = sphi 0, %s162
      %s180 = sphi 0, %s180
      %s182 = sphi 0, %s180
      %s183 = sphi 0, %s182
      %s197 = sphi 0, %s183
      %s201 = sphi 0, %s201
      %s203 = sphi 0, %s201
      %s204 = sphi 0, %s203
      %s218 = sphi 0, %s204
      %s224 = sphi 0, %s226
      %s227 = sphi 0, %s224
      %s228 = sphi 0, %s227
      %s244 = sphi 0, %s228
    $region4: #{tpu_custom_call.1} parent=1 // loop_header_branch
      %23 = sbr.rel (%p21) target = $region8
    $region5: #{tpu_custom_call.1} parent=1 // loop_body
      %s25 = ssub.s32 %s20, 1
      %s26 = ssub.s32 %s20, 2
      %s27 = sadd.s32 %s20, 1
      %s28 = ssub.s32 %s20, %s27
      %p29 = scmp.eq.s32.totalorder %s28, 0
      %s31 = sadd.s32 %s30, 1
      %s32 = scalar_select %p29, %s30, %s31
      %p35 = pneg %p29
      %p36 = scmp.eq.s32.totalorder %s20, 1
      %p37 = por %p35, %p36
      %p38 = scmp.ne.s32.totalorder %s30, %s33
      %p39 = scmp.eq.s32.totalorder %s20, 0
      %p40 = por %p38, %p39
      %p41 = scmp.ne.s32.totalorder %s30, %s33
      %p42 = scmp.eq.s32.totalorder %s25, 1
      %p43 = por %p41, %p42
      %p44 = scmp.ne.s32.totalorder %s33, %s34
      %p45 = scmp.eq.s32.totalorder %s25, 0
      %p46 = por %p44, %p45
      %p47 = scmp.ne.s32.totalorder %s33, %s34
      %p48 = scmp.eq.s32.totalorder %s26, 1
      %p49 = por %p47, %p48
      %p51 = scmp.ne.s32.totalorder %s34, %s50
      %p52 = scmp.eq.s32.totalorder %s26, 0
      %p53 = por %p51, %p52
      %s55 = sadd.s32 %s54, 1
      %p58 = scmp.eq.s32.totalorder %s20, 1
      %p59 = scmp.ne.s32.totalorder %s54, %s56
      %p60 = scmp.eq.s32.totalorder %s20, 0
      %p61 = por %p59, %p60
      %p62 = scmp.ne.s32.totalorder %s54, %s56
      %p63 = scmp.eq.s32.totalorder %s25, 1
      %p64 = por %p62, %p63
      %p65 = scmp.ne.s32.totalorder %s56, %s57
      %p66 = scmp.eq.s32.totalorder %s25, 0
      %p67 = por %p65, %p66
      %p68 = scmp.ne.s32.totalorder %s56, %s57
      %p69 = scmp.eq.s32.totalorder %s26, 1
      %p70 = por %p68, %p69
      %p72 = scmp.ne.s32.totalorder %s57, %s71
      %p73 = scmp.eq.s32.totalorder %s26, 0
      %p74 = por %p72, %p73
      %s76 = sadd.s32 %s75, 1
      %p79 = scmp.eq.s32.totalorder %s20, 1
      %p80 = scmp.ne.s32.totalorder %s75, %s77
      %p81 = scmp.eq.s32.totalorder %s20, 0
      %p82 = por %p80, %p81
      %p83 = scmp.ne.s32.totalorder %s75, %s77
      %p84 = scmp.eq.s32.totalorder %s25, 1
      %p85 = por %p83, %p84
      %p86 = scmp.ne.s32.totalorder %s77, %s78
      %p87 = scmp.eq.s32.totalorder %s25, 0
      %p88 = por %p86, %p87
      %p89 = scmp.ne.s32.totalorder %s77, %s78
      %p90 = scmp.eq.s32.totalorder %s26, 1
      %p91 = por %p89, %p90
      %p93 = scmp.ne.s32.totalorder %s78, %s92
      %p94 = scmp.eq.s32.totalorder %s26, 0
      %p95 = por %p93, %p94
      %s97 = sadd.s32 %s96, 1
      %p100 = scmp.eq.s32.totalorder %s20, 1
      %p101 = scmp.ne.s32.totalorder %s96, %s98
      %p102 = scmp.eq.s32.totalorder %s20, 0
      %p103 = por %p101, %p102
      %p104 = scmp.ne.s32.totalorder %s96, %s98
      %p105 = scmp.eq.s32.totalorder %s25, 1
      %p106 = por %p104, %p105
      %p107 = scmp.ne.s32.totalorder %s98, %s99
      %p108 = scmp.eq.s32.totalorder %s25, 0
      %p109 = por %p107, %p108
      %p110 = scmp.ne.s32.totalorder %s98, %s99
      %p111 = scmp.eq.s32.totalorder %s26, 1
      %p112 = por %p110, %p111
      %p114 = scmp.ne.s32.totalorder %s99, %s113
      %p115 = scmp.eq.s32.totalorder %s26, 0
      %p116 = por %p114, %p115
      %s118 = sadd.s32 %s117, 1
      %p121 = scmp.eq.s32.totalorder %s20, 1
      %p122 = scmp.ne.s32.totalorder %s117, %s119
      %p123 = scmp.eq.s32.totalorder %s20, 0
      %p124 = por %p122, %p123
      %p125 = scmp.ne.s32.totalorder %s117, %s119
      %p126 = scmp.eq.s32.totalorder %s25, 1
      %p127 = por %p125, %p126
      %p128 = scmp.ne.s32.totalorder %s119, %s120
      %p129 = scmp.eq.s32.totalorder %s25, 0
      %p130 = por %p128, %p129
      %p131 = scmp.ne.s32.totalorder %s119, %s120
      %p132 = scmp.eq.s32.totalorder %s26, 1
      %p133 = por %p131, %p132
      %p135 = scmp.ne.s32.totalorder %s120, %s134
      %p136 = scmp.eq.s32.totalorder %s26, 0
      %p137 = por %p135, %p136
      %s139 = sadd.s32 %s138, 1
      %p142 = scmp.eq.s32.totalorder %s20, 1
      %p143 = scmp.ne.s32.totalorder %s138, %s140
      %p144 = scmp.eq.s32.totalorder %s20, 0
      %p145 = por %p143, %p144
      %p146 = scmp.ne.s32.totalorder %s138, %s140
      %p147 = scmp.eq.s32.totalorder %s25, 1
      %p148 = por %p146, %p147
      %p149 = scmp.ne.s32.totalorder %s140, %s141
      %p150 = scmp.eq.s32.totalorder %s25, 0
      %p151 = por %p149, %p150
      %p152 = scmp.ne.s32.totalorder %s140, %s141
      %p153 = scmp.eq.s32.totalorder %s26, 1
      %p154 = por %p152, %p153
      %p156 = scmp.ne.s32.totalorder %s141, %s155
      %p157 = scmp.eq.s32.totalorder %s26, 0
      %p158 = por %p156, %p157
      %s160 = sadd.s32 %s159, 1
      %p163 = scmp.eq.s32.totalorder %s20, 1
      %p164 = scmp.ne.s32.totalorder %s159, %s161
      %p165 = scmp.eq.s32.totalorder %s20, 0
      %p166 = por %p164, %p165
      %p167 = scmp.ne.s32.totalorder %s159, %s161
      %p168 = scmp.eq.s32.totalorder %s25, 1
      %p169 = por %p167, %p168
      %p170 = scmp.ne.s32.totalorder %s161, %s162
      %p171 = scmp.eq.s32.totalorder %s25, 0
      %p172 = por %p170, %p171
      %p173 = scmp.ne.s32.totalorder %s161, %s162
      %p174 = scmp.eq.s32.totalorder %s26, 1
      %p175 = por %p173, %p174
      %p177 = scmp.ne.s32.totalorder %s162, %s176
      %p178 = scmp.eq.s32.totalorder %s26, 0
      %p179 = por %p177, %p178
      %s181 = sadd.s32 %s180, 1
      %p184 = scmp.eq.s32.totalorder %s20, 1
      %p185 = scmp.ne.s32.totalorder %s180, %s182
      %p186 = scmp.eq.s32.totalorder %s20, 0
      %p187 = por %p185, %p186
      %p188 = scmp.ne.s32.totalorder %s180, %s182
      %p189 = scmp.eq.s32.totalorder %s25, 1
      %p190 = por %p188, %p189
      %p191 = scmp.ne.s32.totalorder %s182, %s183
      %p192 = scmp.eq.s32.totalorder %s25, 0
      %p193 = por %p191, %p192
      %p194 = scmp.ne.s32.totalorder %s182, %s183
      %p195 = scmp.eq.s32.totalorder %s26, 1
      %p196 = por %p194, %p195
      %p198 = scmp.ne.s32.totalorder %s183, %s197
      %p199 = scmp.eq.s32.totalorder %s26, 0
      %p200 = por %p198, %p199
      %s202 = sadd.s32 %s201, 1
      %p205 = scmp.eq.s32.totalorder %s20, 1
      %p206 = scmp.ne.s32.totalorder %s201, %s203
      %p207 = scmp.eq.s32.totalorder %s20, 0
      %p208 = por %p206, %p207
      %p209 = scmp.ne.s32.totalorder %s201, %s203
      %p210 = scmp.eq.s32.totalorder %s25, 1
      %p211 = por %p209, %p210
      %p212 = scmp.ne.s32.totalorder %s203, %s204
      %p213 = scmp.eq.s32.totalorder %s25, 0
      %p214 = por %p212, %p213
      %p215 = scmp.ne.s32.totalorder %s203, %s204
      %p216 = scmp.eq.s32.totalorder %s26, 1
      %p217 = por %p215, %p216
      %p219 = scmp.ne.s32.totalorder %s204, %s218
      %p220 = scmp.eq.s32.totalorder %s26, 0
      %p221 = por %p219, %p220
      %s222 = ssub.s32 %s20, %s27
      %p223 = scmp.eq.s32.totalorder %s222, 0
      %s225 = sadd.s32 %s224, 1
      %s226 = scalar_select %p223, %s224, %s225
      %p229 = pneg %p223
      %p230 = scmp.eq.s32.totalorder %s20, 1
      %p231 = por %p229, %p230
      %p232 = scmp.ne.s32.totalorder %s224, %s227
      %p233 = scmp.eq.s32.totalorder %s20, 0
      %p234 = por %p232, %p233
      %p235 = scmp.ne.s32.totalorder %s224, %s227
      %p236 = scmp.eq.s32.totalorder %s25, 1
      %p237 = por %p235, %p236
      %p238 = scmp.ne.s32.totalorder %s227, %s228
      %p239 = scmp.eq.s32.totalorder %s25, 0
      %p240 = por %p238, %p239
      %p241 = scmp.ne.s32.totalorder %s227, %s228
      %p242 = scmp.eq.s32.totalorder %s26, 1
      %p243 = por %p241, %p242
      %p245 = scmp.ne.s32.totalorder %s228, %s244
      %p246 = scmp.eq.s32.totalorder %s26, 0
      %p247 = por %p245, %p246
      %p248 = scmp.le.s32.totalorder 1, %s20
      %p249 = scmp.lt.s32.totalorder %s20, 3
      %p250 = pnand %p248, %p249
      %p251 = pneg %p250
      // Predicated region
      $region9: #{tpu_custom_call.1} parent=5 // pred_check
        _
      $region10: #{tpu_custom_call.1} parent=5 // pred_check_branch
        %253 = sbr.rel (%p250) target = $region12
      $region11: #{tpu_custom_call.1} parent=5 // pred_region
        %s254 = ssub.s32 %s20, 1
        // Predicated region
        $region13: #{tpu_custom_call.1} parent=11 // pred_check
          %p255 = pneg %p67
        $region14: #{tpu_custom_call.1} parent=11 // pred_check_branch
          %257 = sbr.rel (%p255) target = $region16
        $region15: #{tpu_custom_call.1} parent=11 // pred_region
          %s259 = ssub.s32 8192, 8192
          %260 = vsyncadd [#allocation4], %s259
          %s261 = sshll.u32 [#allocation3], 4
          %s262 = int_to_ptr.vmem [resolvable:$true] %s261
          %267 = dma.hbm_to_vmem [thread:$0]  %s1, 8192, %s262, [#allocation4], 128, 128, 8
        $region16: #{tpu_custom_call.1} parent=11 // pred_fallthru
          _
        // Predicated region
        $region17: #{tpu_custom_call.1} parent=11 // pred_check
          %p268 = pneg %p88
        $region18: #{tpu_custom_call.1} parent=11 // pred_check_branch
          %270 = sbr.rel (%p268) target = $region20
        $region19: #{tpu_custom_call.1} parent=11 // pred_region
          _
        $region20: #{tpu_custom_call.1} parent=11 // pred_fallthru
          _
        // Predicated region
        $region21: #{tpu_custom_call.1} parent=11 // pred_check
          %p271 = pneg %p109
        $region22: #{tpu_custom_call.1} parent=11 // pred_check_branch
          %273 = sbr.rel (%p271) target = $region24
        $region23: #{tpu_custom_call.1} parent=11 // pred_region
          _
        $region24: #{tpu_custom_call.1} parent=11 // pred_fallthru
          _
        // Predicated region
        $region25: #{tpu_custom_call.1} parent=11 // pred_check
          %p274 = pneg %p130
        $region26: #{tpu_custom_call.1} parent=11 // pred_check_branch
          %276 = sbr.rel (%p274) target = $region28
        $region27: #{tpu_custom_call.1} parent=11 // pred_region
          _
        $region28: #{tpu_custom_call.1} parent=11 // pred_fallthru
          _
        // Predicated region
        $region29: #{tpu_custom_call.1} parent=11 // pred_check
          %p277 = pneg %p151
        $region30: #{tpu_custom_call.1} parent=11 // pred_check_branch
          %279 = sbr.rel (%p277) target = $region32
        $region31: #{tpu_custom_call.1} parent=11 // pred_region
          _
        $region32: #{tpu_custom_call.1} parent=11 // pred_fallthru
          _
        // Predicated region
        $region33: #{tpu_custom_call.1} parent=11 // pred_check
          %p280 = pneg %p172
        $region34: #{tpu_custom_call.1} parent=11 // pred_check_branch
          %282 = sbr.rel (%p280) target = $region36
        $region35: #{tpu_custom_call.1} parent=11 // pred_region
          _
        $region36: #{tpu_custom_call.1} parent=11 // pred_fallthru
          _
        // Predicated region
        $region37: #{tpu_custom_call.1} parent=11 // pred_check
          %p283 = pneg %p193
        $region38: #{tpu_custom_call.1} parent=11 // pred_check_branch
          %285 = sbr.rel (%p283) target = $region40
        $region39: #{tpu_custom_call.1} parent=11 // pred_region
          _
        $region40: #{tpu_custom_call.1} parent=11 // pred_fallthru
          _
        // Predicated region
        $region41: #{tpu_custom_call.1} parent=11 // pred_check
          %p286 = pneg %p214
        $region42: #{tpu_custom_call.1} parent=11 // pred_check_branch
          %288 = sbr.rel (%p286) target = $region44
        $region43: #{tpu_custom_call.1} parent=11 // pred_region
          %s290 = ssub.s32 512, 512
          %291 = vsyncadd [#allocation7], %s290
          %s292 = sshll.u32 [#allocation6], 4
          %s293 = int_to_ptr.vmem [resolvable:$true] %s292
          %298 = dma.hbm_to_vmem [thread:$0]  %s8, 512, %s293, [#allocation7], 64, 64, 4
        $region44: #{tpu_custom_call.1} parent=11 // pred_fallthru
          _
      $region12: #{tpu_custom_call.1} parent=5 // pred_fallthru
        _
      %p299 = scmp.lt.s32.totalorder %s20, 2
      // Predicated region
      $region45: #{tpu_custom_call.1} parent=5 // pred_check
        %p300 = pneg %p299
      $region46: #{tpu_custom_call.1} parent=5 // pred_check_branch
        %302 = sbr.rel (%p300) target = $region48
      $region47: #{tpu_custom_call.1} parent=5 // pred_region
        // Predicated region
        $region49: #{tpu_custom_call.1} parent=47 // pred_check
          %p303 = pneg %p40
        $region50: #{tpu_custom_call.1} parent=47 // pred_check_branch
          %305 = sbr.rel (%p303) target = $region52
        $region51: #{tpu_custom_call.1} parent=47 // pred_region
          %s306 = sand.u32 %s30, 1
          %s307 = sand.u32 %s30, 1
          %s308 = smul.addr %s307, 32
          %s309 = scalar_lea.vmem [#allocation2], %s308
          %s310 = smul.addr %s20, 8
          %s311 = scalar_lea.vmem %s0, %s310
          // Predicated region
          $region53: #{tpu_custom_call.1} parent=51 // pred_check
            _
          $region54: #{tpu_custom_call.1} parent=51 // pred_check_branch
            %313 = sbr.rel (0) target = $region56
          $region55: #{tpu_custom_call.1} parent=51 // pred_region
            // Predicated region
            $region57: #{tpu_custom_call.1} parent=55 // pred_check
              _
            $region58: #{tpu_custom_call.1} parent=55 // pred_check_branch
              %315 = sbr.rel (0) target = $region60
            $region59: #{tpu_custom_call.1} parent=55 // pred_region
              // Predicated region
              $region72: #{tpu_custom_call.1} parent=59 // pred_check
                _
              $region73: #{tpu_custom_call.1} parent=59 // pred_check_branch
                %336 = sbr.rel (0) target = $region75
              $region74: #{tpu_custom_call.1} parent=59 // pred_region
                loop: start=0, step=1, limit=1
                $region76: #{tpu_custom_call.1} parent=74 // loop_pre_header
                  _
                $region77: #{tpu_custom_call.1} parent=74 // loop_header
                  %s338 = sphi 0, %s342
                  %p339 = scmp.ge.s32.totalorder %s338, 1
                  %s343 = sphi %s311, %s311
                  %s344 = sphi %s309, %s309
                $region78: #{tpu_custom_call.1} parent=74 // loop_header_branch
                  %341 = sbr.rel (%p339) target = $region82
                $region79: #{tpu_custom_call.1} parent=74 // loop_body
                  %v345 = vld [vmem:[%s343] sm:$0xff]
                  %346 = vst [vmem:[%s344] sm:$0xff] %v345
                  %v347 = vld [vmem:[%s343 + $0x10] sm:$0xff]
                  %348 = vst [vmem:[%s344 + $0x8] sm:$0xff] %v347
                  %v349 = vld [vmem:[%s343 + $0x20] sm:$0xff]
                  %350 = vst [vmem:[%s344 + $0x10] sm:$0xff] %v349
                  %v351 = vld [vmem:[%s343 + $0x30] sm:$0xff]
                  %352 = vst [vmem:[%s344 + $0x18] sm:$0xff] %v351
                $region80: #{tpu_custom_call.1} parent=74 // loop_footer
                  %s342 = sadd.s32 1, %s338
                $region81: #{tpu_custom_call.1} parent=74 // loop_footer_branch
                  %337 = sbr.rel target = $region77
                $region82: #{tpu_custom_call.1} parent=74 // loop_exit
                  _
              $region75: #{tpu_custom_call.1} parent=59 // pred_fallthru
                _
              // Predicated region
              $region83: #{tpu_custom_call.1} parent=59 // pred_check
                _
              $region84: #{tpu_custom_call.1} parent=59 // pred_check_branch
                %354 = sbr.rel target = $region86
              $region85: #{tpu_custom_call.1} parent=59 // pred_region
                _
              $region86: #{tpu_custom_call.1} parent=59 // pred_fallthru
                _
            $region60: #{tpu_custom_call.1} parent=55 // pred_fallthru
              _
            // Predicated region
            $region61: #{tpu_custom_call.1} parent=55 // pred_check
              _
            $region62: #{tpu_custom_call.1} parent=55 // pred_check_branch
              %317 = sbr.rel target = $region64
            $region63: #{tpu_custom_call.1} parent=55 // pred_region
              loop: start=0, step=1, limit=1
              $region65: #{tpu_custom_call.1} parent=63 // loop_pre_header
                _
              $region66: #{tpu_custom_call.1} parent=63 // loop_header
                %s320 = sphi 0, %s324
                %p321 = scmp.ge.s32.totalorder %s320, 1
                %s325 = sphi %s311, %s311
                %s326 = sphi %s309, %s309
              $region67: #{tpu_custom_call.1} parent=63 // loop_header_branch
                %323 = sbr.rel (%p321) target = $region71
              $region68: #{tpu_custom_call.1} parent=63 // loop_body
                %v327 = vld [vmem:[%s325] sm:$0xff]
                %328 = vst [vmem:[%s326] sm:$0xff] %v327
                %v329 = vld [vmem:[%s325 + $0x10] sm:$0xff]
                %330 = vst [vmem:[%s326 + $0x8] sm:$0xff] %v329
                %v331 = vld [vmem:[%s325 + $0x20] sm:$0xff]
                %332 = vst [vmem:[%s326 + $0x10] sm:$0xff] %v331
                %v333 = vld [vmem:[%s325 + $0x30] sm:$0xff]
                %334 = vst [vmem:[%s326 + $0x18] sm:$0xff] %v333
              $region69: #{tpu_custom_call.1} parent=63 // loop_footer
                %s324 = sadd.s32 1, %s320
              $region70: #{tpu_custom_call.1} parent=63 // loop_footer_branch
                %319 = sbr.rel target = $region66
              $region71: #{tpu_custom_call.1} parent=63 // loop_exit
                _
            $region64: #{tpu_custom_call.1} parent=55 // pred_fallthru
              _
          $region56: #{tpu_custom_call.1} parent=51 // pred_fallthru
            _
          %355 = vnop
        $region52: #{tpu_custom_call.1} parent=47 // pred_fallthru
          _
      $region48: #{tpu_custom_call.1} parent=5 // pred_fallthru
        _
      %p356 = scmp.le.s32.totalorder 1, %s20
      %p357 = scmp.lt.s32.totalorder %s20, 3
      %p358 = pnand %p356, %p357
      %p359 = pneg %p358
      // Predicated region
      $region87: #{tpu_custom_call.1} parent=5 // pred_check
        _
      $region88: #{tpu_custom_call.1} parent=5 // pred_check_branch
        %361 = sbr.rel (%p358) target = $region90
      $region89: #{tpu_custom_call.1} parent=5 // pred_region
        %s362 = ssub.s32 %s20, 1
        %s363 = sand.u32 %s33, 1
        %s364 = sand.u32 %s33, 1
        %s365 = smul.addr %s364, 32
        %s366 = scalar_lea.vmem [#allocation2], %s365
        // Predicated region
        $region91: #{tpu_custom_call.1} parent=89 // pred_check
          %p367 = pneg %p46
        $region92: #{tpu_custom_call.1} parent=89 // pred_check_branch
          %369 = sbr.rel (%p367) target = $region94
        $region93: #{tpu_custom_call.1} parent=89 // pred_region
          _
        $region94: #{tpu_custom_call.1} parent=89 // pred_fallthru
          _
        // Predicated region
        $region95: #{tpu_custom_call.1} parent=89 // pred_check
          %p370 = pneg %p67
        $region96: #{tpu_custom_call.1} parent=89 // pred_check_branch
          %372 = sbr.rel (%p370) target = $region98
        $region97: #{tpu_custom_call.1} parent=89 // pred_region
          %373 = dma.done [#allocation4], 8192
        $region98: #{tpu_custom_call.1} parent=89 // pred_fallthru
          _
        // Predicated region
        $region99: #{tpu_custom_call.1} parent=89 // pred_check
          %p374 = pneg %p214
        $region100: #{tpu_custom_call.1} parent=89 // pred_check_branch
          %376 = sbr.rel (%p374) target = $region102
        $region101: #{tpu_custom_call.1} parent=89 // pred_region
          %377 = dma.done [#allocation7], 512
        $region102: #{tpu_custom_call.1} parent=89 // pred_fallthru
          _
        %s378 = sand.u32 %s33, 1
        %s379 = sand.u32 %s33, 1
        %s380 = smul.addr %s379, 32
        %s381 = scalar_lea.vmem [#allocation2], %s380
        %p382 = pneg %p46
        %p383 = pneg %p43
        %p384 = pneg %p67
        %p385 = pneg %p64
        %p386 = pneg %p88
        %p387 = pneg %p85
        %p388 = pneg %p109
        %p389 = pneg %p106
        %p390 = pneg %p130
        %p391 = pneg %p127
        %p392 = pneg %p151
        %p393 = pneg %p148
        %p394 = pneg %p172
        %p395 = pneg %p169
        %p396 = pneg %p193
        %p397 = pneg %p190
        %p398 = pneg %p214
        %p399 = pneg %p211
        %p400 = pneg %p240
        %p401 = pneg %p237
        %s402 = sand.u32 %s227, 1
        %s403 = scalar_lea.sflag [#allocation5], %s402
        %s404 = sand.u32 %s227, 1
        %s405 = smul.addr %s404, 8
        %s406 = scalar_lea.vmem [#allocation8], %s405
        %v408 = vld [vmem:[%s366] sm:$0xff]
        %v409 = vld [vmem:[%s366 + $0x8] sm:$0xff]
        %v410 = vld [vmem:[%s366 + $0x10] sm:$0xff]
        %v411 = vld [vmem:[%s366 + $0x18] sm:$0xff]
        %v412 = vld [vmem:[#allocation6] sm:$0xf]
        %v413 = vld [vmem:[#allocation6 + $0x4] sm:$0xf]
        %v414 = vld [vmem:[#allocation6 + $0x8] sm:$0xf]
        %v415 = vld [vmem:[#allocation6 + $0xc] sm:$0xf]
        %v416 = vld [vmem:[#allocation6 + $0x10] sm:$0xf]
        %v417 = vld [vmem:[#allocation6 + $0x14] sm:$0xf]
        %v418 = vld [vmem:[#allocation6 + $0x18] sm:$0xf]
        %v419 = vld [vmem:[#allocation6 + $0x1c] sm:$0xf]
        %v420 = vld [vmem:[%s5] sm:$0x1]
        %v421 = vmul.f32 %v408, %v408
        %v422 = vmul.f32 %v409, %v409
        %v423 = vmul.f32 %v410, %v410
        %v424 = vmul.f32 %v411, %v411
        %vm425 = vcmask 523264
        %v426 = vsel %vm425, %v421, 0.0
        %427 = vadd.xlane.f32.xlu0 %v426
        %v428 = vpop.xlane.xlu0 %427
        %v429 = vsel %vm425, %v422, 0.0
        %430 = vadd.xlane.f32.xlu0 %v429
        %v431 = vpop.xlane.xlu0 %430
        %v432 = vsel %vm425, %v423, 0.0
        %433 = vadd.xlane.f32.xlu0 %v432
        %v434 = vpop.xlane.xlu0 %433
        %v435 = vsel %vm425, %v424, 0.0
        %436 = vadd.xlane.f32.xlu0 %v435
        %v437 = vpop.xlane.xlu0 %436
        %v438 = vrcp.pop 64.0
        %v439 = vmul.f32 %v428, %v438
        %v440 = vmul.f32 %v431, %v438
        %v441 = vmul.f32 %v434, %v438
        %v442 = vmul.f32 %v437, %v438
        %v443 = vadd.f32 %v439, 1e-06
        %v444 = vadd.f32 %v440, 1e-06
        %v445 = vadd.f32 %v441, 1e-06
        %v446 = vadd.f32 %v442, 1e-06
        %v447 = vrsqrt.pop %v443
        %v448 = vrsqrt.pop %v444
        %v449 = vrsqrt.pop %v445
        %v450 = vrsqrt.pop %v446
        %v451 = vmul.f32 %v408, %v447
        %v452 = vmul.f32 %v409, %v448
        %v453 = vmul.f32 %v410, %v449
        %v454 = vmul.f32 %v411, %v450
        %v456 = vlaneseq
        %v457 = vshrl.u32 %v456, 7
        %v458 = vsub.s32 0, %v457
        %v459 = vrot.slane %v420, %v458
        %v461 = vmul.f32 %v451, %v459
        %v462 = vmul.f32 %v452, %v459
        %v463 = vmul.f32 %v453, %v459
        %v464 = vmul.f32 %v454, %v459
        %v465 = vpack.c.bf16 %v462, %v461
        %v466 = vpack.c.bf16 %v464, %v463
        %v467 = vld [vmem:[#allocation3] sm:$0xff]
        %v468 = vld [vmem:[#allocation3 + $0x8] sm:$0xff]
        %v469 = vld [vmem:[#allocation3 + $0x10] sm:$0xff]
        %v470 = vld [vmem:[#allocation3 + $0x18] sm:$0xff]
        %v471 = vld [vmem:[#allocation3 + $0x20] sm:$0xff]
        %v472 = vld [vmem:[#allocation3 + $0x28] sm:$0xff]
        %v473 = vld [vmem:[#allocation3 + $0x30] sm:$0xff]
        %v474 = vld [vmem:[#allocation3 + $0x38] sm:$0xff]
        %v483 = vunpack.c.l.b16 %v467
        %v484 = vunpack.c.h.b16 %v467
        %v485 = vunpack.c.l.b16 %v468
        %v486 = vunpack.c.h.b16 %v468
        %v487 = vunpack.c.l.b16 %v469
        %v488 = vunpack.c.h.b16 %v469
        %v489 = vunpack.c.l.b16 %v470
        %v490 = vunpack.c.h.b16 %v470
        %v491 = vunpack.c.l.b16 %v471
        %v492 = vunpack.c.h.b16 %v471
        %v493 = vunpack.c.l.b16 %v472
        %v494 = vunpack.c.h.b16 %v472
        %v495 = vunpack.c.l.b16 %v473
        %v496 = vunpack.c.h.b16 %v473
        %v497 = vunpack.c.l.b16 %v474
        %v498 = vunpack.c.h.b16 %v474
        %v499 = vpack.c.b16 %v485, %v483
        %v500 = vpack.c.b16 %v486, %v484
        %v501 = vpack.c.b16 %v489, %v487
        %v502 = vpack.c.b16 %v490, %v488
        %v503 = vpack.c.b16 %v493, %v491
        %v504 = vpack.c.b16 %v494, %v492
        %v505 = vpack.c.b16 %v497, %v495
        %v506 = vpack.c.b16 %v498, %v496
        %v516 = vsel %vm425, %v465, 0
        %518 = vmatprep.subr.bf16.mxu0 %v500
        %519 = vmatpush1.bf16.msra.mxu0 %v499
        %520 = vmatprep.subr.bf16.mxu0 %v502
        %521 = vmatpush1.bf16.msra.mxu0 %v501
        %522 = vmatprep.subr.bf16.mxu0 %v504
        %523 = vmatpush1.bf16.msra.mxu0 %v503
        %524 = vmatprep.subr.bf16.mxu0 %v506
        %525 = vmatpush1.bf16.msra.mxu0 %v505
        %526 = vmatprep.subr.bf16.mxu0 0
        %527 = vmatpush1.bf16.msra.mxu0 0
        %528 = vmatprep.subr.bf16.mxu0 0
        %529 = vmatpush1.bf16.msra.mxu0 0
        %530 = vmatprep.subr.bf16.mxu0 0
        %531 = vmatpush1.bf16.msra.mxu0 0
        %532 = vmatprep.subr.bf16.mxu0 0
        %533 = vmatpush1.bf16.msra.mxu0 0
        %534 = vmatprep.subr.bf16.mxu0 0
        %535 = vmatpush1.bf16.msra.mxu0 0
        %536 = vmatprep.subr.bf16.mxu0 0
        %537 = vmatpush1.bf16.msra.mxu0 0
        %538 = vmatprep.subr.bf16.mxu0 0
        %539 = vmatpush1.bf16.msra.mxu0 0
        %540 = vmatprep.subr.bf16.mxu0 0
        %541 = vmatpush1.bf16.msra.mxu0 0
        %542 = vmatprep.subr.bf16.mxu0 0
        %543 = vmatpush1.bf16.msra.mxu0 0
        %544 = vmatprep.subr.bf16.mxu0 0
        %545 = vmatpush1.bf16.msra.mxu0 0
        %546 = vmatprep.subr.bf16.mxu0 0
        %547 = vmatpush1.bf16.msra.mxu0 0
        %548 = vmatprep.subr.bf16.mxu0 0
        %549 = vmatpush1.bf16.msra.mxu0 0
        %550 = vmatprep.mubr.bf16.mxu0 0
        %551 = vmatmul.mubr.bf16.gmra.mrb[0].mxu0 %v516
        %v552 = vpop.f32.mrb[0].mxu0
        %v553 = vadd.f32 0.0, %v552
        %v554 = vpop.f32.mrb[0].mxu0
        %v555 = vadd.f32 0.0, %v554
        %v556 = vpop.f32.mrb[0].mxu0
        %v557 = vpop.f32.mrb[0].mxu0
        %558 = vdwg.mxu0
        %s559 = scalar_lea.vmem [#allocation3], 64
        %v560 = vld [vmem:[%s559] sm:$0xff]
        %v561 = vld [vmem:[%s559 + $0x8] sm:$0xff]
        %v562 = vld [vmem:[%s559 + $0x10] sm:$0xff]
        %v563 = vld [vmem:[%s559 + $0x18] sm:$0xff]
        %v564 = vld [vmem:[%s559 + $0x20] sm:$0xff]
        %v565 = vld [vmem:[%s559 + $0x28] sm:$0xff]
        %v566 = vld [vmem:[%s559 + $0x30] sm:$0xff]
        %v567 = vld [vmem:[%s559 + $0x38] sm:$0xff]
        %v569 = vrot.slane %v465, 4
        %v578 = vunpack.c.l.b16 %v560
        %v579 = vunpack.c.h.b16 %v560
        %v580 = vunpack.c.l.b16 %v561
        %v581 = vunpack.c.h.b16 %v561
        %v582 = vunpack.c.l.b16 %v562
        %v583 = vunpack.c.h.b16 %v562
        %v584 = vunpack.c.l.b16 %v563
        %v585 = vunpack.c.h.b16 %v563
        %v586 = vunpack.c.l.b16 %v564
        %v587 = vunpack.c.h.b16 %v564
        %v588 = vunpack.c.l.b16 %v565
        %v589 = vunpack.c.h.b16 %v565
        %v590 = vunpack.c.l.b16 %v566
        %v591 = vunpack.c.h.b16 %v566
        %v592 = vunpack.c.l.b16 %v567
        %v593 = vunpack.c.h.b16 %v567
        %v594 = vpack.c.b16 %v580, %v578
        %v595 = vpack.c.b16 %v581, %v579
        %v596 = vpack.c.b16 %v584, %v582
        %v597 = vpack.c.b16 %v585, %v583
        %v598 = vpack.c.b16 %v588, %v586
        %v599 = vpack.c.b16 %v589, %v587
        %v600 = vpack.c.b16 %v592, %v590
        %v601 = vpack.c.b16 %v593, %v591
        %v611 = vsel %vm425, %v569, 0
        %613 = vmatprep.subr.bf16.mxu0 %v595
        %614 = vmatpush1.bf16.msra.mxu0 %v594
        %615 = vmatprep.subr.bf16.mxu0 %v597
        %616 = vmatpush1.bf16.msra.mxu0 %v596
        %617 = vmatprep.subr.bf16.mxu0 %v599
        %618 = vmatpush1.bf16.msra.mxu0 %v598
        %619 = vmatprep.subr.bf16.mxu0 %v601
        %620 = vmatpush1.bf16.msra.mxu0 %v600
        %621 = vmatprep.subr.bf16.mxu0 0
        %622 = vmatpush1.bf16.msra.mxu0 0
        %623 = vmatprep.subr.bf16.mxu0 0
        %624 = vmatpush1.bf16.msra.mxu0 0
        %625 = vmatprep.subr.bf16.mxu0 0
        %626 = vmatpush1.bf16.msra.mxu0 0
        %627 = vmatprep.subr.bf16.mxu0 0
        %628 = vmatpush1.bf16.msra.mxu0 0
        %629 = vmatprep.subr.bf16.mxu0 0
        %630 = vmatpush1.bf16.msra.mxu0 0
        %631 = vmatprep.subr.bf16.mxu0 0
        %632 = vmatpush1.bf16.msra.mxu0 0
        %633 = vmatprep.subr.bf16.mxu0 0
        %634 = vmatpush1.bf16.msra.mxu0 0
        %635 = vmatprep.subr.bf16.mxu0 0
        %636 = vmatpush1.bf16.msra.mxu0 0
        %637 = vmatprep.subr.bf16.mxu0 0
        %638 = vmatpush1.bf16.msra.mxu0 0
        %639 = vmatprep.subr.bf16.mxu0 0
        %640 = vmatpush1.bf16.msra.mxu0 0
        %641 = vmatprep.subr.bf16.mxu0 0
        %642 = vmatpush1.bf16.msra.mxu0 0
        %643 = vmatprep.subr.bf16.mxu0 0
        %644 = vmatpush1.bf16.msra.mxu0 0
        %645 = vmatprep.mubr.bf16.mxu0 0
        %646 = vmatmul.mubr.bf16.gmra.mrb[0].mxu0 %v611
        %v647 = vpop.f32.mrb[0].mxu0
        %v648 = vadd.f32 0.0, %v647
        %v649 = vpop.f32.mrb[0].mxu0
        %v650 = vadd.f32 0.0, %v649
        %v651 = vpop.f32.mrb[0].mxu0
        %v652 = vpop.f32.mrb[0].mxu0
        %653 = vdwg.mxu0
        %s654 = scalar_lea.vmem [#allocation3], 128
        %v655 = vld [vmem:[%s654] sm:$0xff]
        %v656 = vld [vmem:[%s654 + $0x8] sm:$0xff]
        %v657 = vld [vmem:[%s654 + $0x10] sm:$0xff]
        %v658 = vld [vmem:[%s654 + $0x18] sm:$0xff]
        %v659 = vld [vmem:[%s654 + $0x20] sm:$0xff]
        %v660 = vld [vmem:[%s654 + $0x28] sm:$0xff]
        %v661 = vld [vmem:[%s654 + $0x30] sm:$0xff]
        %v662 = vld [vmem:[%s654 + $0x38] sm:$0xff]
        %v671 = vunpack.c.l.b16 %v655
        %v672 = vunpack.c.h.b16 %v655
        %v673 = vunpack.c.l.b16 %v656
        %v674 = vunpack.c.h.b16 %v656
        %v675 = vunpack.c.l.b16 %v657
        %v676 = vunpack.c.h.b16 %v657
        %v677 = vunpack.c.l.b16 %v658
        %v678 = vunpack.c.h.b16 %v658
        %v679 = vunpack.c.l.b16 %v659
        %v680 = vunpack.c.h.b16 %v659
        %v681 = vunpack.c.l.b16 %v660
        %v682 = vunpack.c.h.b16 %v660
        %v683 = vunpack.c.l.b16 %v661
        %v684 = vunpack.c.h.b16 %v661
        %v685 = vunpack.c.l.b16 %v662
        %v686 = vunpack.c.h.b16 %v662
        %v687 = vpack.c.b16 %v673, %v671
        %v688 = vpack.c.b16 %v674, %v672
        %v689 = vpack.c.b16 %v677, %v675
        %v690 = vpack.c.b16 %v678, %v676
        %v691 = vpack.c.b16 %v681, %v679
        %v692 = vpack.c.b16 %v682, %v680
        %v693 = vpack.c.b16 %v685, %v683
        %v694 = vpack.c.b16 %v686, %v684
        %v704 = vsel %vm425, %v466, 0
        %706 = vmatprep.subr.bf16.mxu0 %v688
        %707 = vmatpush1.bf16.msra.mxu0 %v687
        %708 = vmatprep.subr.bf16.mxu0 %v690
        %709 = vmatpush1.bf16.msra.mxu0 %v689
        %710 = vmatprep.subr.bf16.mxu0 %v692
        %711 = vmatpush1.bf16.msra.mxu0 %v691
        %712 = vmatprep.subr.bf16.mxu0 %v694
        %713 = vmatpush1.bf16.msra.mxu0 %v693
        %714 = vmatprep.subr.bf16.mxu0 0
        %715 = vmatpush1.bf16.msra.mxu0 0
        %716 = vmatprep.subr.bf16.mxu0 0
        %717 = vmatpush1.bf16.msra.mxu0 0
        %718 = vmatprep.subr.bf16.mxu0 0
        %719 = vmatpush1.bf16.msra.mxu0 0
        %720 = vmatprep.subr.bf16.mxu0 0
        %721 = vmatpush1.bf16.msra.mxu0 0
        %722 = vmatprep.subr.bf16.mxu0 0
        %723 = vmatpush1.bf16.msra.mxu0 0
        %724 = vmatprep.subr.bf16.mxu0 0
        %725 = vmatpush1.bf16.msra.mxu0 0
        %726 = vmatprep.subr.bf16.mxu0 0
        %727 = vmatpush1.bf16.msra.mxu0 0
        %728 = vmatprep.subr.bf16.mxu0 0
        %729 = vmatpush1.bf16.msra.mxu0 0
        %730 = vmatprep.subr.bf16.mxu0 0
        %731 = vmatpush1.bf16.msra.mxu0 0
        %732 = vmatprep.subr.bf16.mxu0 0
        %733 = vmatpush1.bf16.msra.mxu0 0
        %734 = vmatprep.subr.bf16.mxu0 0
        %735 = vmatpush1.bf16.msra.mxu0 0
        %736 = vmatprep.subr.bf16.mxu0 0
        %737 = vmatpush1.bf16.msra.mxu0 0
        %738 = vmatprep.mubr.bf16.mxu0 0
        %739 = vmatmul.mubr.bf16.gmra.mrb[0].mxu0 %v704
        %v740 = vpop.f32.mrb[0].mxu0
        %v741 = vadd.f32 0.0, %v740
        %v742 = vpop.f32.mrb[0].mxu0
        %v743 = vadd.f32 0.0, %v742
        %v744 = vpop.f32.mrb[0].mxu0
        %v745 = vpop.f32.mrb[0].mxu0
        %746 = vdwg.mxu0
        %s747 = scalar_lea.vmem [#allocation3], 192
        %v748 = vld [vmem:[%s747] sm:$0xff]
        %v749 = vld [vmem:[%s747 + $0x8] sm:$0xff]
        %v750 = vld [vmem:[%s747 + $0x10] sm:$0xff]
        %v751 = vld [vmem:[%s747 + $0x18] sm:$0xff]
        %v752 = vld [vmem:[%s747 + $0x20] sm:$0xff]
        %v753 = vld [vmem:[%s747 + $0x28] sm:$0xff]
        %v754 = vld [vmem:[%s747 + $0x30] sm:$0xff]
        %v755 = vld [vmem:[%s747 + $0x38] sm:$0xff]
        %v757 = vrot.slane %v466, 4
        %v766 = vunpack.c.l.b16 %v748
        %v767 = vunpack.c.h.b16 %v748
        %v768 = vunpack.c.l.b16 %v749
        %v769 = vunpack.c.h.b16 %v749
        %v770 = vunpack.c.l.b16 %v750
        %v771 = vunpack.c.h.b16 %v750
        %v772 = vunpack.c.l.b16 %v751
        %v773 = vunpack.c.h.b16 %v751
        %v774 = vunpack.c.l.b16 %v752
        %v775 = vunpack.c.h.b16 %v752
        %v776 = vunpack.c.l.b16 %v753
        %v777 = vunpack.c.h.b16 %v753
        %v778 = vunpack.c.l.b16 %v754
        %v779 = vunpack.c.h.b16 %v754
        %v780 = vunpack.c.l.b16 %v755
        %v781 = vunpack.c.h.b16 %v755
        %v782 = vpack.c.b16 %v768, %v766
        %v783 = vpack.c.b16 %v769, %v767
        %v784 = vpack.c.b16 %v772, %v770
        %v785 = vpack.c.b16 %v773, %v771
        %v786 = vpack.c.b16 %v776, %v774
        %v787 = vpack.c.b16 %v777, %v775
        %v788 = vpack.c.b16 %v780, %v778
        %v789 = vpack.c.b16 %v781, %v779
        %v799 = vsel %vm425, %v757, 0
        %801 = vmatprep.subr.bf16.mxu0 %v783
        %802 = vmatpush1.bf16.msra.mxu0 %v782
        %803 = vmatprep.subr.bf16.mxu0 %v785
        %804 = vmatpush1.bf16.msra.mxu0 %v784
        %805 = vmatprep.subr.bf16.mxu0 %v787
        %806 = vmatpush1.bf16.msra.mxu0 %v786
        %807 = vmatprep.subr.bf16.mxu0 %v789
        %808 = vmatpush1.bf16.msra.mxu0 %v788
        %809 = vmatprep.subr.bf16.mxu0 0
        %810 = vmatpush1.bf16.msra.mxu0 0
        %811 = vmatprep.subr.bf16.mxu0 0
        %812 = vmatpush1.bf16.msra.mxu0 0
        %813 = vmatprep.subr.bf16.mxu0 0
        %814 = vmatpush1.bf16.msra.mxu0 0
        %815 = vmatprep.subr.bf16.mxu0 0
        %816 = vmatpush1.bf16.msra.mxu0 0
        %817 = vmatprep.subr.bf16.mxu0 0
        %818 = vmatpush1.bf16.msra.mxu0 0
        %819 = vmatprep.subr.bf16.mxu0 0
        %820 = vmatpush1.bf16.msra.mxu0 0
        %821 = vmatprep.subr.bf16.mxu0 0
        %822 = vmatpush1.bf16.msra.mxu0 0
        %823 = vmatprep.subr.bf16.mxu0 0
        %824 = vmatpush1.bf16.msra.mxu0 0
        %825 = vmatprep.subr.bf16.mxu0 0
        %826 = vmatpush1.bf16.msra.mxu0 0
        %827 = vmatprep.subr.bf16.mxu0 0
        %828 = vmatpush1.bf16.msra.mxu0 0
        %829 = vmatprep.subr.bf16.mxu0 0
        %830 = vmatpush1.bf16.msra.mxu0 0
        %831 = vmatprep.subr.bf16.mxu0 0
        %832 = vmatpush1.bf16.msra.mxu0 0
        %833 = vmatprep.mubr.bf16.mxu0 0
        %834 = vmatmul.mubr.bf16.gmra.mrb[0].mxu0 %v799
        %v835 = vpop.f32.mrb[0].mxu0
        %v836 = vadd.f32 0.0, %v835
        %v837 = vpop.f32.mrb[0].mxu0
        %v838 = vadd.f32 0.0, %v837
        %v839 = vpop.f32.mrb[0].mxu0
        %v840 = vpop.f32.mrb[0].mxu0
        %841 = vdwg.mxu0
        %843 = vrot.lane.b32.xlu0 %v553, 64
        %v844 = vpop.permute.xlu0 %843
        %v846 = vmul.f32 %v553, %v844
        %v847 = vpack.c.bf16 %v846, %v846
        %v856 = vunpack.c.l.b16 %v412
        %v857 = vunpack.c.l.b16 %v413
        %v858 = vunpack.c.l.b16 %v414
        %v859 = vunpack.c.l.b16 %v415
        %v860 = vunpack.c.l.b16 %v416
        %v861 = vunpack.c.l.b16 %v417
        %v862 = vunpack.c.l.b16 %v418
        %v863 = vunpack.c.l.b16 %v419
        %v864 = vpack.c.b16 %v857, %v856
        %v865 = vpack.c.b16 %v859, %v858
        %v866 = vpack.c.b16 %v861, %v860
        %v867 = vpack.c.b16 %v863, %v862
        %v873 = vsel %vm425, %v847, 0
        %875 = vmatprep.subr.bf16.mxu0 0
        %876 = vmatpush1.bf16.msra.mxu0 %v864
        %877 = vmatprep.subr.bf16.mxu0 0
        %878 = vmatpush1.bf16.msra.mxu0 %v865
        %879 = vmatprep.subr.bf16.mxu0 0
        %880 = vmatpush1.bf16.msra.mxu0 %v866
        %881 = vmatprep.subr.bf16.mxu0 0
        %882 = vmatpush1.bf16.msra.mxu0 %v867
        %883 = vmatprep.subr.bf16.mxu0 0
        %884 = vmatpush1.bf16.msra.mxu0 0
        %885 = vmatprep.subr.bf16.mxu0 0
        %886 = vmatpush1.bf16.msra.mxu0 0
        %887 = vmatprep.subr.bf16.mxu0 0
        %888 = vmatpush1.bf16.msra.mxu0 0
        %889 = vmatprep.subr.bf16.mxu0 0
        %890 = vmatpush1.bf16.msra.mxu0 0
        %891 = vmatprep.subr.bf16.mxu0 0
        %892 = vmatpush1.bf16.msra.mxu0 0
        %893 = vmatprep.subr.bf16.mxu0 0
        %894 = vmatpush1.bf16.msra.mxu0 0
        %895 = vmatprep.subr.bf16.mxu0 0
        %896 = vmatpush1.bf16.msra.mxu0 0
        %897 = vmatprep.subr.bf16.mxu0 0
        %898 = vmatpush1.bf16.msra.mxu0 0
        %899 = vmatprep.subr.bf16.mxu0 0
        %900 = vmatpush1.bf16.msra.mxu0 0
        %901 = vmatprep.subr.bf16.mxu0 0
        %902 = vmatpush1.bf16.msra.mxu0 0
        %903 = vmatprep.subr.bf16.mxu0 0
        %904 = vmatpush1.bf16.msra.mxu0 0
        %905 = vmatprep.subr.bf16.mxu0 0
        %906 = vmatpush1.bf16.msra.mxu0 0
        %907 = vmatprep.mubr.bf16.mxu0 0
        %908 = vmatmul.mubr.bf16.gmra.mrb[0].mxu0 %v873
        %v909 = vpop.f32.mrb[0].mxu0
        %v910 = vadd.f32 0.0, %v909
        %v911 = vpop.f32.mrb[0].mxu0
        %v912 = vpop.f32.mrb[0].mxu0
        %v913 = vpop.f32.mrb[0].mxu0
        %914 = vdwg.mxu0
        %v915 = vmul.f32 %v910, 0.25
        %v916 = vsub.f32 %v915, %v915
        %v917 = vmul.f32 %v916, 1.442695
        %v918 = vpow.pop %v917
        %v919 = vmul.f32 %v918, %v555
        %v920 = vrcp.pop %v918
        %v921 = vmul.f32 %v919, %v920
        %v922 = vmul.f32 %v648, %v844
        %v923 = vpack.c.bf16 %v922, %v922
        %v925 = vsel %vm425, %v923, 0
        %927 = vmatprep.subr.bf16.mxu0 0
        %928 = vmatpush1.bf16.msra.mxu0 %v864
        %929 = vmatprep.subr.bf16.mxu0 0
        %930 = vmatpush1.bf16.msra.mxu0 %v865
        %931 = vmatprep.subr.bf16.mxu0 0
        %932 = vmatpush1.bf16.msra.mxu0 %v866
        %933 = vmatprep.subr.bf16.mxu0 0
        %934 = vmatpush1.bf16.msra.mxu0 %v867
        %935 = vmatprep.subr.bf16.mxu0 0
        %936 = vmatpush1.bf16.msra.mxu0 0
        %937 = vmatprep.subr.bf16.mxu0 0
        %938 = vmatpush1.bf16.msra.mxu0 0
        %939 = vmatprep.subr.bf16.mxu0 0
        %940 = vmatpush1.bf16.msra.mxu0 0
        %941 = vmatprep.subr.bf16.mxu0 0
        %942 = vmatpush1.bf16.msra.mxu0 0
        %943 = vmatprep.subr.bf16.mxu0 0
        %944 = vmatpush1.bf16.msra.mxu0 0
        %945 = vmatprep.subr.bf16.mxu0 0
        %946 = vmatpush1.bf16.msra.mxu0 0
        %947 = vmatprep.subr.bf16.mxu0 0
        %948 = vmatpush1.bf16.msra.mxu0 0
        %949 = vmatprep.subr.bf16.mxu0 0
        %950 = vmatpush1.bf16.msra.mxu0 0
        %951 = vmatprep.subr.bf16.mxu0 0
        %952 = vmatpush1.bf16.msra.mxu0 0
        %953 = vmatprep.subr.bf16.mxu0 0
        %954 = vmatpush1.bf16.msra.mxu0 0
        %955 = vmatprep.subr.bf16.mxu0 0
        %956 = vmatpush1.bf16.msra.mxu0 0
        %957 = vmatprep.subr.bf16.mxu0 0
        %958 = vmatpush1.bf16.msra.mxu0 0
        %959 = vmatprep.mubr.bf16.mxu0 0
        %960 = vmatmul.mubr.bf16.gmra.mrb[0].mxu0 %v925
        %v961 = vpop.f32.mrb[0].mxu0
        %v962 = vadd.f32 0.0, %v961
        %v963 = vpop.f32.mrb[0].mxu0
        %v964 = vpop.f32.mrb[0].mxu0
        %v965 = vpop.f32.mrb[0].mxu0
        %966 = vdwg.mxu0
        %v967 = vmul.f32 %v962, 0.25
        %969 = vrot.lane.b32.xlu0 %v648, 64
        %v970 = vpop.permute.xlu0 %969
        %v972 = vmul.f32 %v648, %v970
        %v973 = vpack.c.bf16 %v972, %v972
        %v975 = vsel %vm425, %v973, 0
        %977 = vmatprep.subr.bf16.mxu0 0
        %978 = vmatpush1.bf16.msra.mxu0 %v864
        %979 = vmatprep.subr.bf16.mxu0 0
        %980 = vmatpush1.bf16.msra.mxu0 %v865
        %981 = vmatprep.subr.bf16.mxu0 0
        %982 = vmatpush1.bf16.msra.mxu0 %v866
        %983 = vmatprep.subr.bf16.mxu0 0
        %984 = vmatpush1.bf16.msra.mxu0 %v867
        %985 = vmatprep.subr.bf16.mxu0 0
        %986 = vmatpush1.bf16.msra.mxu0 0
        %987 = vmatprep.subr.bf16.mxu0 0
        %988 = vmatpush1.bf16.msra.mxu0 0
        %989 = vmatprep.subr.bf16.mxu0 0
        %990 = vmatpush1.bf16.msra.mxu0 0
        %991 = vmatprep.subr.bf16.mxu0 0
        %992 = vmatpush1.bf16.msra.mxu0 0
        %993 = vmatprep.subr.bf16.mxu0 0
        %994 = vmatpush1.bf16.msra.mxu0 0
        %995 = vmatprep.subr.bf16.mxu0 0
        %996 = vmatpush1.bf16.msra.mxu0 0
        %997 = vmatprep.subr.bf16.mxu0 0
        %998 = vmatpush1.bf16.msra.mxu0 0
        %999 = vmatprep.subr.bf16.mxu0 0
        %1000 = vmatpush1.bf16.msra.mxu0 0
        %1001 = vmatprep.subr.bf16.mxu0 0
        %1002 = vmatpush1.bf16.msra.mxu0 0
        %1003 = vmatprep.subr.bf16.mxu0 0
        %1004 = vmatpush1.bf16.msra.mxu0 0
        %1005 = vmatprep.subr.bf16.mxu0 0
        %1006 = vmatpush1.bf16.msra.mxu0 0
        %1007 = vmatprep.subr.bf16.mxu0 0
        %1008 = vmatpush1.bf16.msra.mxu0 0
        %1009 = vmatprep.mubr.bf16.mxu0 0
        %1010 = vmatmul.mubr.bf16.gmra.mrb[0].mxu0 %v975
        %v1011 = vpop.f32.mrb[0].mxu0
        %v1012 = vadd.f32 0.0, %v1011
        %v1013 = vpop.f32.mrb[0].mxu0
        %v1014 = vpop.f32.mrb[0].mxu0
        %v1015 = vpop.f32.mrb[0].mxu0
        %1016 = vdwg.mxu0
        %v1017 = vmul.f32 %v1012, 0.25
        %v1018 = vmax.f32 %v967, %v1017
        %v1019 = vsub.f32 %v967, %v1018
        %v1020 = vmul.f32 %v1019, 1.442695
        %v1021 = vpow.pop %v1020
        %v1022 = vsub.f32 %v1017, %v1018
        %v1023 = vmul.f32 %v1022, 1.442695
        %v1024 = vpow.pop %v1023
        %v1025 = vadd.f32 %v1021, %v1024
        %v1026 = vmul.f32 %v1021, %v555
        %v1027 = vmul.f32 %v1024, %v650
        %v1028 = vadd.f32 %v1026, %v1027
        %v1029 = vrcp.pop %v1025
        %v1030 = vmul.f32 %v1028, %v1029
        %v1031 = vmul.f32 %v741, %v844
        %v1032 = vpack.c.bf16 %v1031, %v1031
        %v1034 = vsel %vm425, %v1032, 0
        %1036 = vmatprep.subr.bf16.mxu0 0
        %1037 = vmatpush1.bf16.msra.mxu0 %v864
        %1038 = vmatprep.subr.bf16.mxu0 0
        %1039 = vmatpush1.bf16.msra.mxu0 %v865
        %1040 = vmatprep.subr.bf16.mxu0 0
        %1041 = vmatpush1.bf16.msra.mxu0 %v866
        %1042 = vmatprep.subr.bf16.mxu0 0
        %1043 = vmatpush1.bf16.msra.mxu0 %v867
        %1044 = vmatprep.subr.bf16.mxu0 0
        %1045 = vmatpush1.bf16.msra.mxu0 0
        %1046 = vmatprep.subr.bf16.mxu0 0
        %1047 = vmatpush1.bf16.msra.mxu0 0
        %1048 = vmatprep.subr.bf16.mxu0 0
        %1049 = vmatpush1.bf16.msra.mxu0 0
        %1050 = vmatprep.subr.bf16.mxu0 0
        %1051 = vmatpush1.bf16.msra.mxu0 0
        %1052 = vmatprep.subr.bf16.mxu0 0
        %1053 = vmatpush1.bf16.msra.mxu0 0
        %1054 = vmatprep.subr.bf16.mxu0 0
        %1055 = vmatpush1.bf16.msra.mxu0 0
        %1056 = vmatprep.subr.bf16.mxu0 0
        %1057 = vmatpush1.bf16.msra.mxu0 0
        %1058 = vmatprep.subr.bf16.mxu0 0
        %1059 = vmatpush1.bf16.msra.mxu0 0
        %1060 = vmatprep.subr.bf16.mxu0 0
        %1061 = vmatpush1.bf16.msra.mxu0 0
        %1062 = vmatprep.subr.bf16.mxu0 0
        %1063 = vmatpush1.bf16.msra.mxu0 0
        %1064 = vmatprep.subr.bf16.mxu0 0
        %1065 = vmatpush1.bf16.msra.mxu0 0
        %1066 = vmatprep.subr.bf16.mxu0 0
        %1067 = vmatpush1.bf16.msra.mxu0 0
        %1068 = vmatprep.mubr.bf16.mxu0 0
        %1069 = vmatmul.mubr.bf16.gmra.mrb[0].mxu0 %v1034
        %v1070 = vpop.f32.mrb[0].mxu0
        %v1071 = vadd.f32 0.0, %v1070
        %v1072 = vpop.f32.mrb[0].mxu0
        %v1073 = vpop.f32.mrb[0].mxu0
        %v1074 = vpop.f32.mrb[0].mxu0
        %1075 = vdwg.mxu0
        %v1076 = vmul.f32 %v1071, 0.25
        %v1077 = vmul.f32 %v741, %v970
        %v1078 = vpack.c.bf16 %v1077, %v1077
        %v1080 = vsel %vm425, %v1078, 0
        %1082 = vmatprep.subr.bf16.mxu0 0
        %1083 = vmatpush1.bf16.msra.mxu0 %v864
        %1084 = vmatprep.subr.bf16.mxu0 0
        %1085 = vmatpush1.bf16.msra.mxu0 %v865
        %1086 = vmatprep.subr.bf16.mxu0 0
        %1087 = vmatpush1.bf16.msra.mxu0 %v866
        %1088 = vmatprep.subr.bf16.mxu0 0
        %1089 = vmatpush1.bf16.msra.mxu0 %v867
        %1090 = vmatprep.subr.bf16.mxu0 0
        %1091 = vmatpush1.bf16.msra.mxu0 0
        %1092 = vmatprep.subr.bf16.mxu0 0
        %1093 = vmatpush1.bf16.msra.mxu0 0
        %1094 = vmatprep.subr.bf16.mxu0 0
        %1095 = vmatpush1.bf16.msra.mxu0 0
        %1096 = vmatprep.subr.bf16.mxu0 0
        %1097 = vmatpush1.bf16.msra.mxu0 0
        %1098 = vmatprep.subr.bf16.mxu0 0
        %1099 = vmatpush1.bf16.msra.mxu0 0
        %1100 = vmatprep.subr.bf16.mxu0 0
        %1101 = vmatpush1.bf16.msra.mxu0 0
        %1102 = vmatprep.subr.bf16.mxu0 0
        %1103 = vmatpush1.bf16.msra.mxu0 0
        %1104 = vmatprep.subr.bf16.mxu0 0
        %1105 = vmatpush1.bf16.msra.mxu0 0
        %1106 = vmatprep.subr.bf16.mxu0 0
        %1107 = vmatpush1.bf16.msra.mxu0 0
        %1108 = vmatprep.subr.bf16.mxu0 0
        %1109 = vmatpush1.bf16.msra.mxu0 0
        %1110 = vmatprep.subr.bf16.mxu0 0
        %1111 = vmatpush1.bf16.msra.mxu0 0
        %1112 = vmatprep.subr.bf16.mxu0 0
        %1113 = vmatpush1.bf16.msra.mxu0 0
        %1114 = vmatprep.mubr.bf16.mxu0 0
        %1115 = vmatmul.mubr.bf16.gmra.mrb[0].mxu0 %v1080
        %v1116 = vpop.f32.mrb[0].mxu0
        %v1117 = vadd.f32 0.0, %v1116
        %v1118 = vpop.f32.mrb[0].mxu0
        %v1119 = vpop.f32.mrb[0].mxu0
        %v1120 = vpop.f32.mrb[0].mxu0
        %1121 = vdwg.mxu0
        %v1122 = vmul.f32 %v1117, 0.25
        %1124 = vrot.lane.b32.xlu0 %v741, 64
        %v1125 = vpop.permute.xlu0 %1124
        %v1127 = vmul.f32 %v741, %v1125
        %v1128 = vpack.c.bf16 %v1127, %v1127
        %v1130 = vsel %vm425, %v1128, 0
        %1132 = vmatprep.subr.bf16.mxu0 0
        %1133 = vmatpush1.bf16.msra.mxu0 %v864
        %1134 = vmatprep.subr.bf16.mxu0 0
        %1135 = vmatpush1.bf16.msra.mxu0 %v865
        %1136 = vmatprep.subr.bf16.mxu0 0
        %1137 = vmatpush1.bf16.msra.mxu0 %v866
        %1138 = vmatprep.subr.bf16.mxu0 0
        %1139 = vmatpush1.bf16.msra.mxu0 %v867
        %1140 = vmatprep.subr.bf16.mxu0 0
        %1141 = vmatpush1.bf16.msra.mxu0 0
        %1142 = vmatprep.subr.bf16.mxu0 0
        %1143 = vmatpush1.bf16.msra.mxu0 0
        %1144 = vmatprep.subr.bf16.mxu0 0
        %1145 = vmatpush1.bf16.msra.mxu0 0
        %1146 = vmatprep.subr.bf16.mxu0 0
        %1147 = vmatpush1.bf16.msra.mxu0 0
        %1148 = vmatprep.subr.bf16.mxu0 0
        %1149 = vmatpush1.bf16.msra.mxu0 0
        %1150 = vmatprep.subr.bf16.mxu0 0
        %1151 = vmatpush1.bf16.msra.mxu0 0
        %1152 = vmatprep.subr.bf16.mxu0 0
        %1153 = vmatpush1.bf16.msra.mxu0 0
        %1154 = vmatprep.subr.bf16.mxu0 0
        %1155 = vmatpush1.bf16.msra.mxu0 0
        %1156 = vmatprep.subr.bf16.mxu0 0
        %1157 = vmatpush1.bf16.msra.mxu0 0
        %1158 = vmatprep.subr.bf16.mxu0 0
        %1159 = vmatpush1.bf16.msra.mxu0 0
        %1160 = vmatprep.subr.bf16.mxu0 0
        %1161 = vmatpush1.bf16.msra.mxu0 0
        %1162 = vmatprep.subr.bf16.mxu0 0
        %1163 = vmatpush1.bf16.msra.mxu0 0
        %1164 = vmatprep.mubr.bf16.mxu0 0
        %1165 = vmatmul.mubr.bf16.gmra.mrb[0].mxu0 %v1130
        %v1166 = vpop.f32.mrb[0].mxu0
        %v1167 = vadd.f32 0.0, %v1166
        %v1168 = vpop.f32.mrb[0].mxu0
        %v1169 = vpop.f32.mrb[0].mxu0
        %v1170 = vpop.f32.mrb[0].mxu0
        %1171 = vdwg.mxu0
        %v1172 = vmul.f32 %v1167, 0.25
        %v1173 = vmax.f32 %v1076, %v1122
        %v1174 = vmax.f32 %v1173, %v1172
        %v1175 = vsub.f32 %v1076, %v1174
        %v1176 = vmul.f32 %v1175, 1.442695
        %v1177 = vpow.pop %v1176
        %v1178 = vsub.f32 %v1122, %v1174
        %v1179 = vmul.f32 %v1178, 1.442695
        %v1180 = vpow.pop %v1179
        %v1181 = vsub.f32 %v1172, %v1174
        %v1182 = vmul.f32 %v1181, 1.442695
        %v1183 = vpow.pop %v1182
        %v1184 = vadd.f32 %v1177, %v1180
        %v1185 = vadd.f32 %v1184, %v1183
        %v1186 = vmul.f32 %v1177, %v555
        %v1187 = vmul.f32 %v1180, %v650
        %v1188 = vadd.f32 %v1186, %v1187
        %v1189 = vmul.f32 %v1183, %v743
        %v1190 = vadd.f32 %v1188, %v1189
        %v1191 = vrcp.pop %v1185
        %v1192 = vmul.f32 %v1190, %v1191
        %v1193 = vmul.f32 %v836, %v844
        %v1194 = vpack.c.bf16 %v1193, %v1193
        %v1196 = vsel %vm425, %v1194, 0
        %1198 = vmatprep.subr.bf16.mxu0 0
        %1199 = vmatpush1.bf16.msra.mxu0 %v864
        %1200 = vmatprep.subr.bf16.mxu0 0
        %1201 = vmatpush1.bf16.msra.mxu0 %v865
        %1202 = vmatprep.subr.bf16.mxu0 0
        %1203 = vmatpush1.bf16.msra.mxu0 %v866
        %1204 = vmatprep.subr.bf16.mxu0 0
        %1205 = vmatpush1.bf16.msra.mxu0 %v867
        %1206 = vmatprep.subr.bf16.mxu0 0
        %1207 = vmatpush1.bf16.msra.mxu0 0
        %1208 = vmatprep.subr.bf16.mxu0 0
        %1209 = vmatpush1.bf16.msra.mxu0 0
        %1210 = vmatprep.subr.bf16.mxu0 0
        %1211 = vmatpush1.bf16.msra.mxu0 0
        %1212 = vmatprep.subr.bf16.mxu0 0
        %1213 = vmatpush1.bf16.msra.mxu0 0
        %1214 = vmatprep.subr.bf16.mxu0 0
        %1215 = vmatpush1.bf16.msra.mxu0 0
        %1216 = vmatprep.subr.bf16.mxu0 0
        %1217 = vmatpush1.bf16.msra.mxu0 0
        %1218 = vmatprep.subr.bf16.mxu0 0
        %1219 = vmatpush1.bf16.msra.mxu0 0
        %1220 = vmatprep.subr.bf16.mxu0 0
        %1221 = vmatpush1.bf16.msra.mxu0 0
        %1222 = vmatprep.subr.bf16.mxu0 0
        %1223 = vmatpush1.bf16.msra.mxu0 0
        %1224 = vmatprep.subr.bf16.mxu0 0
        %1225 = vmatpush1.bf16.msra.mxu0 0
        %1226 = vmatprep.subr.bf16.mxu0 0
        %1227 = vmatpush1.bf16.msra.mxu0 0
        %1228 = vmatprep.subr.bf16.mxu0 0
        %1229 = vmatpush1.bf16.msra.mxu0 0
        %1230 = vmatprep.mubr.bf16.mxu0 0
        %1231 = vmatmul.mubr.bf16.gmra.mrb[0].mxu0 %v1196
        %v1232 = vpop.f32.mrb[0].mxu0
        %v1233 = vadd.f32 0.0, %v1232
        %v1234 = vpop.f32.mrb[0].mxu0
        %v1235 = vpop.f32.mrb[0].mxu0
        %v1236 = vpop.f32.mrb[0].mxu0
        %1237 = vdwg.mxu0
        %v1238 = vmul.f32 %v1233, 0.25
        %v1239 = vmul.f32 %v836, %v970
        %v1240 = vpack.c.bf16 %v1239, %v1239
        %v1242 = vsel %vm425, %v1240, 0
        %1244 = vmatprep.subr.bf16.mxu0 0
        %1245 = vmatpush1.bf16.msra.mxu0 %v864
        %1246 = vmatprep.subr.bf16.mxu0 0
        %1247 = vmatpush1.bf16.msra.mxu0 %v865
        %1248 = vmatprep.subr.bf16.mxu0 0
        %1249 = vmatpush1.bf16.msra.mxu0 %v866
        %1250 = vmatprep.subr.bf16.mxu0 0
        %1251 = vmatpush1.bf16.msra.mxu0 %v867
        %1252 = vmatprep.subr.bf16.mxu0 0
        %1253 = vmatpush1.bf16.msra.mxu0 0
        %1254 = vmatprep.subr.bf16.mxu0 0
        %1255 = vmatpush1.bf16.msra.mxu0 0
        %1256 = vmatprep.subr.bf16.mxu0 0
        %1257 = vmatpush1.bf16.msra.mxu0 0
        %1258 = vmatprep.subr.bf16.mxu0 0
        %1259 = vmatpush1.bf16.msra.mxu0 0
        %1260 = vmatprep.subr.bf16.mxu0 0
        %1261 = vmatpush1.bf16.msra.mxu0 0
        %1262 = vmatprep.subr.bf16.mxu0 0
        %1263 = vmatpush1.bf16.msra.mxu0 0
        %1264 = vmatprep.subr.bf16.mxu0 0
        %1265 = vmatpush1.bf16.msra.mxu0 0
        %1266 = vmatprep.subr.bf16.mxu0 0
        %1267 = vmatpush1.bf16.msra.mxu0 0
        %1268 = vmatprep.subr.bf16.mxu0 0
        %1269 = vmatpush1.bf16.msra.mxu0 0
        %1270 = vmatprep.subr.bf16.mxu0 0
        %1271 = vmatpush1.bf16.msra.mxu0 0
        %1272 = vmatprep.subr.bf16.mxu0 0
        %1273 = vmatpush1.bf16.msra.mxu0 0
        %1274 = vmatprep.subr.bf16.mxu0 0
        %1275 = vmatpush1.bf16.msra.mxu0 0
        %1276 = vmatprep.mubr.bf16.mxu0 0
        %1277 = vmatmul.mubr.bf16.gmra.mrb[0].mxu0 %v1242
        %v1278 = vpop.f32.mrb[0].mxu0
        %v1279 = vadd.f32 0.0, %v1278
        %v1280 = vpop.f32.mrb[0].mxu0
        %v1281 = vpop.f32.mrb[0].mxu0
        %v1282 = vpop.f32.mrb[0].mxu0
        %1283 = vdwg.mxu0
        %v1284 = vmul.f32 %v1279, 0.25
        %v1285 = vmul.f32 %v836, %v1125
        %v1286 = vpack.c.bf16 %v1285, %v1285
        %v1288 = vsel %vm425, %v1286, 0
        %1290 = vmatprep.subr.bf16.mxu0 0
        %1291 = vmatpush1.bf16.msra.mxu0 %v864
        %1292 = vmatprep.subr.bf16.mxu0 0
        %1293 = vmatpush1.bf16.msra.mxu0 %v865
        %1294 = vmatprep.subr.bf16.mxu0 0
        %1295 = vmatpush1.bf16.msra.mxu0 %v866
        %1296 = vmatprep.subr.bf16.mxu0 0
        %1297 = vmatpush1.bf16.msra.mxu0 %v867
        %1298 = vmatprep.subr.bf16.mxu0 0
        %1299 = vmatpush1.bf16.msra.mxu0 0
        %1300 = vmatprep.subr.bf16.mxu0 0
        %1301 = vmatpush1.bf16.msra.mxu0 0
        %1302 = vmatprep.subr.bf16.mxu0 0
        %1303 = vmatpush1.bf16.msra.mxu0 0
        %1304 = vmatprep.subr.bf16.mxu0 0
        %1305 = vmatpush1.bf16.msra.mxu0 0
        %1306 = vmatprep.subr.bf16.mxu0 0
        %1307 = vmatpush1.bf16.msra.mxu0 0
        %1308 = vmatprep.subr.bf16.mxu0 0
        %1309 = vmatpush1.bf16.msra.mxu0 0
        %1310 = vmatprep.subr.bf16.mxu0 0
        %1311 = vmatpush1.bf16.msra.mxu0 0
        %1312 = vmatprep.subr.bf16.mxu0 0
        %1313 = vmatpush1.bf16.msra.mxu0 0
        %1314 = vmatprep.subr.bf16.mxu0 0
        %1315 = vmatpush1.bf16.msra.mxu0 0
        %1316 = vmatprep.subr.bf16.mxu0 0
        %1317 = vmatpush1.bf16.msra.mxu0 0
        %1318 = vmatprep.subr.bf16.mxu0 0
        %1319 = vmatpush1.bf16.msra.mxu0 0
        %1320 = vmatprep.subr.bf16.mxu0 0
        %1321 = vmatpush1.bf16.msra.mxu0 0
        %1322 = vmatprep.mubr.bf16.mxu0 0
        %1323 = vmatmul.mubr.bf16.gmra.mrb[0].mxu0 %v1288
        %v1324 = vpop.f32.mrb[0].mxu0
        %v1325 = vadd.f32 0.0, %v1324
        %v1326 = vpop.f32.mrb[0].mxu0
        %v1327 = vpop.f32.mrb[0].mxu0
        %v1328 = vpop.f32.mrb[0].mxu0
        %1329 = vdwg.mxu0
        %v1330 = vmul.f32 %v1325, 0.25
        %1332 = vrot.lane.b32.xlu0 %v836, 64
        %v1333 = vpop.permute.xlu0 %1332
        %v1335 = vmul.f32 %v836, %v1333
        %v1336 = vpack.c.bf16 %v1335, %v1335
        %v1338 = vsel %vm425, %v1336, 0
        %1340 = vmatprep.subr.bf16.mxu0 0
        %1341 = vmatpush1.bf16.msra.mxu0 %v864
        %1342 = vmatprep.subr.bf16.mxu0 0
        %1343 = vmatpush1.bf16.msra.mxu0 %v865
        %1344 = vmatprep.subr.bf16.mxu0 0
        %1345 = vmatpush1.bf16.msra.mxu0 %v866
        %1346 = vmatprep.subr.bf16.mxu0 0
        %1347 = vmatpush1.bf16.msra.mxu0 %v867
        %1348 = vmatprep.subr.bf16.mxu0 0
        %1349 = vmatpush1.bf16.msra.mxu0 0
        %1350 = vmatprep.subr.bf16.mxu0 0
        %1351 = vmatpush1.bf16.msra.mxu0 0
        %1352 = vmatprep.subr.bf16.mxu0 0
        %1353 = vmatpush1.bf16.msra.mxu0 0
        %1354 = vmatprep.subr.bf16.mxu0 0
        %1355 = vmatpush1.bf16.msra.mxu0 0
        %1356 = vmatprep.subr.bf16.mxu0 0
        %1357 = vmatpush1.bf16.msra.mxu0 0
        %1358 = vmatprep.subr.bf16.mxu0 0
        %1359 = vmatpush1.bf16.msra.mxu0 0
        %1360 = vmatprep.subr.bf16.mxu0 0
        %1361 = vmatpush1.bf16.msra.mxu0 0
        %1362 = vmatprep.subr.bf16.mxu0 0
        %1363 = vmatpush1.bf16.msra.mxu0 0
        %1364 = vmatprep.subr.bf16.mxu0 0
        %1365 = vmatpush1.bf16.msra.mxu0 0
        %1366 = vmatprep.subr.bf16.mxu0 0
        %1367 = vmatpush1.bf16.msra.mxu0 0
        %1368 = vmatprep.subr.bf16.mxu0 0
        %1369 = vmatpush1.bf16.msra.mxu0 0
        %1370 = vmatprep.subr.bf16.mxu0 0
        %1371 = vmatpush1.bf16.msra.mxu0 0
        %1372 = vmatprep.mubr.bf16.mxu0 0
        %1373 = vmatmul.mubr.bf16.gmra.mrb[0].mxu0 %v1338
        %v1374 = vpop.f32.mrb[0].mxu0
        %v1375 = vadd.f32 0.0, %v1374
        %v1376 = vpop.f32.mrb[0].mxu0
        %v1377 = vpop.f32.mrb[0].mxu0
        %v1378 = vpop.f32.mrb[0].mxu0
        %1379 = vdwg.mxu0
        %v1380 = vmul.f32 %v1375, 0.25
        %v1381 = vmax.f32 %v1238, %v1284
        %v1382 = vmax.f32 %v1381, %v1330
        %v1383 = vmax.f32 %v1382, %v1380
        %v1384 = vsub.f32 %v1238, %v1383
        %v1385 = vmul.f32 %v1384, 1.442695
        %v1386 = vpow.pop %v1385
        %v1387 = vsub.f32 %v1284, %v1383
        %v1388 = vmul.f32 %v1387, 1.442695
        %v1389 = vpow.pop %v1388
        %v1390 = vsub.f32 %v1330, %v1383
        %v1391 = vmul.f32 %v1390, 1.442695
        %v1392 = vpow.pop %v1391
        %v1393 = vsub.f32 %v1380, %v1383
        %v1394 = vmul.f32 %v1393, 1.442695
        %v1395 = vpow.pop %v1394
        %v1396 = vadd.f32 %v1386, %v1389
        %v1397 = vadd.f32 %v1396, %v1392
        %v1398 = vadd.f32 %v1397, %v1395
        %v1399 = vmul.f32 %v1386, %v555
        %v1400 = vmul.f32 %v1389, %v650
        %v1401 = vadd.f32 %v1399, %v1400
        %v1402 = vmul.f32 %v1392, %v743
        %v1403 = vadd.f32 %v1401, %v1402
        %v1404 = vmul.f32 %v1395, %v838
        %v1405 = vadd.f32 %v1403, %v1404
        %v1406 = vrcp.pop %v1398
        %v1407 = vmul.f32 %v1405, %v1406
        %v1408 = vpack.c.bf16 %v1030, %v921
        %v1409 = vpack.c.bf16 %v1407, %v1192
        %v1410 = vld [vmem:[%s2] sm:$0xf]
        %v1411 = vld [vmem:[%s2 + $0x4] sm:$0xf]
        %v1412 = vld [vmem:[%s2 + $0x8] sm:$0xf]
        %v1413 = vld [vmem:[%s2 + $0xc] sm:$0xf]
        %v1414 = vld [vmem:[%s2 + $0x10] sm:$0xf]
        %v1415 = vld [vmem:[%s2 + $0x14] sm:$0xf]
        %v1416 = vld [vmem:[%s2 + $0x18] sm:$0xf]
        %v1417 = vld [vmem:[%s2 + $0x1c] sm:$0xf]
        %v1426 = vunpack.c.l.b16 %v1410
        %v1427 = vunpack.c.l.b16 %v1411
        %v1428 = vunpack.c.l.b16 %v1412
        %v1429 = vunpack.c.l.b16 %v1413
        %v1430 = vunpack.c.l.b16 %v1414
        %v1431 = vunpack.c.l.b16 %v1415
        %v1432 = vunpack.c.l.b16 %v1416
        %v1433 = vunpack.c.l.b16 %v1417
        %v1434 = vpack.c.b16 %v1427, %v1426
        %v1435 = vpack.c.b16 %v1429, %v1428
        %v1436 = vpack.c.b16 %v1431, %v1430
        %v1437 = vpack.c.b16 %v1433, %v1432
        %v1443 = vsel %vm425, %v1408, 0
        %v1446 = vsel %vm425, %v1409, 0
        %1448 = vmatprep.subr.bf16.mxu0 0
        %1449 = vmatpush1.bf16.msra.mxu0 %v1434
        %1450 = vmatprep.subr.bf16.mxu0 0
        %1451 = vmatpush1.bf16.msra.mxu0 %v1435
        %1452 = vmatprep.subr.bf16.mxu0 0
        %1453 = vmatpush1.bf16.msra.mxu0 %v1436
        %1454 = vmatprep.subr.bf16.mxu0 0
        %1455 = vmatpush1.bf16.msra.mxu0 %v1437
        %1456 = vmatprep.subr.bf16.mxu0 0
        %1457 = vmatpush1.bf16.msra.mxu0 0
        %1458 = vmatprep.subr.bf16.mxu0 0
        %1459 = vmatpush1.bf16.msra.mxu0 0
        %1460 = vmatprep.subr.bf16.mxu0 0
        %1461 = vmatpush1.bf16.msra.mxu0 0
        %1462 = vmatprep.subr.bf16.mxu0 0
        %1463 = vmatpush1.bf16.msra.mxu0 0
        %1464 = vmatprep.subr.bf16.mxu0 0
        %1465 = vmatpush1.bf16.msra.mxu0 0
        %1466 = vmatprep.subr.bf16.mxu0 0
        %1467 = vmatpush1.bf16.msra.mxu0 0
        %1468 = vmatprep.subr.bf16.mxu0 0
        %1469 = vmatpush1.bf16.msra.mxu0 0
        %1470 = vmatprep.subr.bf16.mxu0 0
        %1471 = vmatpush1.bf16.msra.mxu0 0
        %1472 = vmatprep.subr.bf16.mxu0 0
        %1473 = vmatpush1.bf16.msra.mxu0 0
        %1474 = vmatprep.subr.bf16.mxu0 0
        %1475 = vmatpush1.bf16.msra.mxu0 0
        %1476 = vmatprep.subr.bf16.mxu0 0
        %1477 = vmatpush1.bf16.msra.mxu0 0
        %1478 = vmatprep.subr.bf16.mxu0 0
        %1479 = vmatpush1.bf16.msra.mxu0 0
        %1480 = vmatprep.mubr.bf16.mxu0 0
        %1481 = vmatmul.mubr.bf16.gmra.mrb[0].mxu0 %v1443
        %v1482 = vpop.f32.mrb[0].mxu0
        %v1483 = vadd.f32 0.0, %v1482
        %v1484 = vpop.f32.mrb[0].mxu0
        %v1485 = vpop.f32.mrb[0].mxu0
        %v1486 = vadd.f32 0.0, %v1485
        %v1487 = vpop.f32.mrb[0].mxu0
        %1488 = vmatprep.mubr.bf16.mxu0 0
        %1489 = vmatmul.mubr.bf16.gmra.mrb[0].mxu0 %v1446
        %v1490 = vpop.f32.mrb[0].mxu0
        %v1491 = vadd.f32 0.0, %v1490
        %v1492 = vpop.f32.mrb[0].mxu0
        %v1493 = vpop.f32.mrb[0].mxu0
        %v1494 = vadd.f32 0.0, %v1493
        %v1495 = vpop.f32.mrb[0].mxu0
        %1496 = vdwg.mxu0
        %v1497 = vadd.f32 %v461, %v1483
        %v1498 = vadd.f32 %v462, %v1486
        %v1499 = vadd.f32 %v463, %v1491
        %v1500 = vadd.f32 %v464, %v1494
        %v1501 = vld [vmem:[%s6] sm:$0x1]
        %v1502 = vmul.f32 %v1497, %v1497
        %v1503 = vmul.f32 %v1498, %v1498
        %v1504 = vmul.f32 %v1499, %v1499
        %v1505 = vmul.f32 %v1500, %v1500
        %v1506 = vsel %vm425, %v1502, 0.0
        %1507 = vadd.xlane.f32.xlu0 %v1506
        %v1508 = vpop.xlane.xlu0 %1507
        %v1509 = vsel %vm425, %v1503, 0.0
        %1510 = vadd.xlane.f32.xlu0 %v1509
        %v1511 = vpop.xlane.xlu0 %1510
        %v1512 = vsel %vm425, %v1504, 0.0
        %1513 = vadd.xlane.f32.xlu0 %v1512
        %v1514 = vpop.xlane.xlu0 %1513
        %v1515 = vsel %vm425, %v1505, 0.0
        %1516 = vadd.xlane.f32.xlu0 %v1515
        %v1517 = vpop.xlane.xlu0 %1516
        %v1518 = vmul.f32 %v1508, %v438
        %v1519 = vmul.f32 %v1511, %v438
        %v1520 = vmul.f32 %v1514, %v438
        %v1521 = vmul.f32 %v1517, %v438
        %v1522 = vadd.f32 %v1518, 1e-06
        %v1523 = vadd.f32 %v1519, 1e-06
        %v1524 = vadd.f32 %v1520, 1e-06
        %v1525 = vadd.f32 %v1521, 1e-06
        %v1526 = vrsqrt.pop %v1522
        %v1527 = vrsqrt.pop %v1523
        %v1528 = vrsqrt.pop %v1524
        %v1529 = vrsqrt.pop %v1525
        %v1530 = vmul.f32 %v1497, %v1526
        %v1531 = vmul.f32 %v1498, %v1527
        %v1532 = vmul.f32 %v1499, %v1528
        %v1533 = vmul.f32 %v1500, %v1529
        %v1535 = vlaneseq
        %v1536 = vshrl.u32 %v1535, 7
        %v1537 = vsub.s32 0, %v1536
        %v1538 = vrot.slane %v1501, %v1537
        %v1540 = vmul.f32 %v1530, %v1538
        %v1541 = vmul.f32 %v1531, %v1538
        %v1542 = vmul.f32 %v1532, %v1538
        %v1543 = vmul.f32 %v1533, %v1538
        %v1544 = vpack.c.bf16 %v1541, %v1540
        %v1545 = vpack.c.bf16 %v1543, %v1542
        %v1546 = vld [vmem:[%s3] sm:$0xff]
        %v1547 = vld [vmem:[%s3 + $0x8] sm:$0xff]
        %v1548 = vld [vmem:[%s3 + $0x10] sm:$0xff]
        %v1549 = vld [vmem:[%s3 + $0x18] sm:$0xff]
        %v1550 = vld [vmem:[%s3 + $0x20] sm:$0xff]
        %v1551 = vld [vmem:[%s3 + $0x28] sm:$0xff]
        %v1552 = vld [vmem:[%s3 + $0x30] sm:$0xff]
        %v1553 = vld [vmem:[%s3 + $0x38] sm:$0xff]
        %v1554 = vld [vmem:[%s3 + $0x40] sm:$0xff]
        %v1555 = vld [vmem:[%s3 + $0x48] sm:$0xff]
        %v1556 = vld [vmem:[%s3 + $0x50] sm:$0xff]
        %v1557 = vld [vmem:[%s3 + $0x58] sm:$0xff]
        %v1558 = vld [vmem:[%s3 + $0x60] sm:$0xff]
        %v1559 = vld [vmem:[%s3 + $0x68] sm:$0xff]
        %v1560 = vld [vmem:[%s3 + $0x70] sm:$0xff]
        %v1561 = vld [vmem:[%s3 + $0x78] sm:$0xff]
        %v1578 = vunpack.c.l.b16 %v1546
        %v1579 = vunpack.c.h.b16 %v1546
        %v1580 = vunpack.c.l.b16 %v1547
        %v1581 = vunpack.c.h.b16 %v1547
        %v1582 = vunpack.c.l.b16 %v1548
        %v1583 = vunpack.c.h.b16 %v1548
        %v1584 = vunpack.c.l.b16 %v1549
        %v1585 = vunpack.c.h.b16 %v1549
        %v1586 = vunpack.c.l.b16 %v1550
        %v1587 = vunpack.c.h.b16 %v1550
        %v1588 = vunpack.c.l.b16 %v1551
        %v1589 = vunpack.c.h.b16 %v1551
        %v1590 = vunpack.c.l.b16 %v1552
        %v1591 = vunpack.c.h.b16 %v1552
        %v1592 = vunpack.c.l.b16 %v1553
        %v1593 = vunpack.c.h.b16 %v1553
        %v1594 = vunpack.c.l.b16 %v1554
        %v1595 = vunpack.c.h.b16 %v1554
        %v1596 = vunpack.c.l.b16 %v1555
        %v1597 = vunpack.c.h.b16 %v1555
        %v1598 = vunpack.c.l.b16 %v1556
        %v1599 = vunpack.c.h.b16 %v1556
        %v1600 = vunpack.c.l.b16 %v1557
        %v1601 = vunpack.c.h.b16 %v1557
        %v1602 = vunpack.c.l.b16 %v1558
        %v1603 = vunpack.c.h.b16 %v1558
        %v1604 = vunpack.c.l.b16 %v1559
        %v1605 = vunpack.c.h.b16 %v1559
        %v1606 = vunpack.c.l.b16 %v1560
        %v1607 = vunpack.c.h.b16 %v1560
        %v1608 = vunpack.c.l.b16 %v1561
        %v1609 = vunpack.c.h.b16 %v1561
        %v1610 = vpack.c.b16 %v1582, %v1578
        %v1611 = vpack.c.b16 %v1583, %v1579
        %v1612 = vpack.c.b16 %v1584, %v1580
        %v1613 = vpack.c.b16 %v1585, %v1581
        %v1614 = vpack.c.b16 %v1590, %v1586
        %v1615 = vpack.c.b16 %v1591, %v1587
        %v1616 = vpack.c.b16 %v1592, %v1588
        %v1617 = vpack.c.b16 %v1593, %v1589
        %v1618 = vpack.c.b16 %v1598, %v1594
        %v1619 = vpack.c.b16 %v1599, %v1595
        %v1620 = vpack.c.b16 %v1600, %v1596
        %v1621 = vpack.c.b16 %v1601, %v1597
        %v1622 = vpack.c.b16 %v1606, %v1602
        %v1623 = vpack.c.b16 %v1607, %v1603
        %v1624 = vpack.c.b16 %v1608, %v1604
        %v1625 = vpack.c.b16 %v1609, %v1605
        %v1643 = vsel %vm425, %v1544, 0
        %v1646 = vsel %vm425, %v1545, 0
        %1648 = vmatprep.subr.bf16.mxu0 %v1611
        %1649 = vmatpush1.bf16.msra.mxu0 %v1610
        %1650 = vmatprep.subr.bf16.mxu0 %v1615
        %1651 = vmatpush1.bf16.msra.mxu0 %v1614
        %1652 = vmatprep.subr.bf16.mxu0 %v1619
        %1653 = vmatpush1.bf16.msra.mxu0 %v1618
        %1654 = vmatprep.subr.bf16.mxu0 %v1623
        %1655 = vmatpush1.bf16.msra.mxu0 %v1622
        %1656 = vmatprep.subr.bf16.mxu0 0
        %1657 = vmatpush1.bf16.msra.mxu0 0
        %1658 = vmatprep.subr.bf16.mxu0 0
        %1659 = vmatpush1.bf16.msra.mxu0 0
        %1660 = vmatprep.subr.bf16.mxu0 0
        %1661 = vmatpush1.bf16.msra.mxu0 0
        %1662 = vmatprep.subr.bf16.mxu0 0
        %1663 = vmatpush1.bf16.msra.mxu0 0
        %1664 = vmatprep.subr.bf16.mxu0 0
        %1665 = vmatpush1.bf16.msra.mxu0 0
        %1666 = vmatprep.subr.bf16.mxu0 0
        %1667 = vmatpush1.bf16.msra.mxu0 0
        %1668 = vmatprep.subr.bf16.mxu0 0
        %1669 = vmatpush1.bf16.msra.mxu0 0
        %1670 = vmatprep.subr.bf16.mxu0 0
        %1671 = vmatpush1.bf16.msra.mxu0 0
        %1672 = vmatprep.subr.bf16.mxu0 0
        %1673 = vmatpush1.bf16.msra.mxu0 0
        %1674 = vmatprep.subr.bf16.mxu0 0
        %1675 = vmatpush1.bf16.msra.mxu0 0
        %1676 = vmatprep.subr.bf16.mxu0 0
        %1677 = vmatpush1.bf16.msra.mxu0 0
        %1678 = vmatprep.subr.bf16.mxu0 0
        %1679 = vmatpush1.bf16.msra.mxu0 0
        %1680 = vmatprep.mubr.bf16.mxu0 0
        %1681 = vmatmul.mubr.bf16.gmra.mrb[0].mxu0 %v1643
        %v1682 = vpop.f32.mrb[0].mxu0
        %v1683 = vadd.f32 0.0, %v1682
        %v1684 = vpop.f32.mrb[0].mxu0
        %v1685 = vadd.f32 0.0, %v1684
        %v1686 = vpop.f32.mrb[0].mxu0
        %v1687 = vadd.f32 0.0, %v1686
        %v1688 = vpop.f32.mrb[0].mxu0
        %v1689 = vadd.f32 0.0, %v1688
        %1690 = vmatprep.mubr.bf16.mxu0 0
        %1691 = vmatmul.mubr.bf16.gmra.mrb[0].mxu0 %v1646
        %v1692 = vpop.f32.mrb[0].mxu0
        %v1693 = vadd.f32 0.0, %v1692
        %v1694 = vpop.f32.mrb[0].mxu0
        %v1695 = vadd.f32 0.0, %v1694
        %v1696 = vpop.f32.mrb[0].mxu0
        %v1697 = vadd.f32 0.0, %v1696
        %v1698 = vpop.f32.mrb[0].mxu0
        %v1699 = vadd.f32 0.0, %v1698
        %1700 = vdwg.mxu0
        %1701 = vmatprep.subr.bf16.mxu0 %v1613
        %1702 = vmatpush1.bf16.msra.mxu0 %v1612
        %1703 = vmatprep.subr.bf16.mxu0 %v1617
        %1704 = vmatpush1.bf16.msra.mxu0 %v1616
        %1705 = vmatprep.subr.bf16.mxu0 %v1621
        %1706 = vmatpush1.bf16.msra.mxu0 %v1620
        %1707 = vmatprep.subr.bf16.mxu0 %v1625
        %1708 = vmatpush1.bf16.msra.mxu0 %v1624
        %1709 = vmatprep.subr.bf16.mxu0 0
        %1710 = vmatpush1.bf16.msra.mxu0 0
        %1711 = vmatprep.subr.bf16.mxu0 0
        %1712 = vmatpush1.bf16.msra.mxu0 0
        %1713 = vmatprep.subr.bf16.mxu0 0
        %1714 = vmatpush1.bf16.msra.mxu0 0
        %1715 = vmatprep.subr.bf16.mxu0 0
        %1716 = vmatpush1.bf16.msra.mxu0 0
        %1717 = vmatprep.subr.bf16.mxu0 0
        %1718 = vmatpush1.bf16.msra.mxu0 0
        %1719 = vmatprep.subr.bf16.mxu0 0
        %1720 = vmatpush1.bf16.msra.mxu0 0
        %1721 = vmatprep.subr.bf16.mxu0 0
        %1722 = vmatpush1.bf16.msra.mxu0 0
        %1723 = vmatprep.subr.bf16.mxu0 0
        %1724 = vmatpush1.bf16.msra.mxu0 0
        %1725 = vmatprep.subr.bf16.mxu0 0
        %1726 = vmatpush1.bf16.msra.mxu0 0
        %1727 = vmatprep.subr.bf16.mxu0 0
        %1728 = vmatpush1.bf16.msra.mxu0 0
        %1729 = vmatprep.subr.bf16.mxu0 0
        %1730 = vmatpush1.bf16.msra.mxu0 0
        %1731 = vmatprep.subr.bf16.mxu0 0
        %1732 = vmatpush1.bf16.msra.mxu0 0
        %1733 = vmatprep.mubr.bf16.mxu0 0
        %1734 = vmatmul.mubr.bf16.gmra.mrb[0].mxu0 %v1643
        %v1735 = vpop.f32.mrb[0].mxu0
        %v1736 = vadd.f32 0.0, %v1735
        %v1737 = vpop.f32.mrb[0].mxu0
        %v1738 = vadd.f32 0.0, %v1737
        %v1739 = vpop.f32.mrb[0].mxu0
        %v1740 = vadd.f32 0.0, %v1739
        %v1741 = vpop.f32.mrb[0].mxu0
        %v1742 = vadd.f32 0.0, %v1741
        %1743 = vmatprep.mubr.bf16.mxu0 0
        %1744 = vmatmul.mubr.bf16.gmra.mrb[0].mxu0 %v1646
        %v1745 = vpop.f32.mrb[0].mxu0
        %v1746 = vadd.f32 0.0, %v1745
        %v1747 = vpop.f32.mrb[0].mxu0
        %v1748 = vadd.f32 0.0, %v1747
        %v1749 = vpop.f32.mrb[0].mxu0
        %v1750 = vadd.f32 0.0, %v1749
        %v1751 = vpop.f32.mrb[0].mxu0
        %v1752 = vadd.f32 0.0, %v1751
        %1753 = vdwg.mxu0
        %v1754 = vxor.u32 %v1683, 2147483648
        %v1755 = vxor.u32 %v1685, 2147483648
        %v1756 = vxor.u32 %v1687, 2147483648
        %v1757 = vxor.u32 %v1689, 2147483648
        %v1758 = vxor.u32 %v1693, 2147483648
        %v1759 = vxor.u32 %v1695, 2147483648
        %v1760 = vxor.u32 %v1697, 2147483648
        %v1761 = vxor.u32 %v1699, 2147483648
        %v1762 = vmul.f32 %v1754, 1.442695
        %v1763 = vpow.pop %v1762
        %v1764 = vmul.f32 %v1755, 1.442695
        %v1765 = vpow.pop %v1764
        %v1766 = vmul.f32 %v1756, 1.442695
        %v1767 = vpow.pop %v1766
        %v1768 = vmul.f32 %v1757, 1.442695
        %v1769 = vpow.pop %v1768
        %v1770 = vmul.f32 %v1758, 1.442695
        %v1771 = vpow.pop %v1770
        %v1772 = vmul.f32 %v1759, 1.442695
        %v1773 = vpow.pop %v1772
        %v1774 = vmul.f32 %v1760, 1.442695
        %v1775 = vpow.pop %v1774
        %v1776 = vmul.f32 %v1761, 1.442695
        %v1777 = vpow.pop %v1776
        %v1778 = vadd.f32 %v1763, 1.0
        %v1779 = vadd.f32 %v1765, 1.0
        %v1780 = vadd.f32 %v1767, 1.0
        %v1781 = vadd.f32 %v1769, 1.0
        %v1782 = vadd.f32 %v1771, 1.0
        %v1783 = vadd.f32 %v1773, 1.0
        %v1784 = vadd.f32 %v1775, 1.0
        %v1785 = vadd.f32 %v1777, 1.0
        %v1786 = vrcp.pop %v1778
        %v1787 = vmul.f32 1.0, %v1786
        %v1788 = vrcp.pop %v1779
        %v1789 = vmul.f32 1.0, %v1788
        %v1790 = vrcp.pop %v1780
        %v1791 = vmul.f32 1.0, %v1790
        %v1792 = vrcp.pop %v1781
        %v1793 = vmul.f32 1.0, %v1792
        %v1794 = vrcp.pop %v1782
        %v1795 = vmul.f32 1.0, %v1794
        %v1796 = vrcp.pop %v1783
        %v1797 = vmul.f32 1.0, %v1796
        %v1798 = vrcp.pop %v1784
        %v1799 = vmul.f32 1.0, %v1798
        %v1800 = vrcp.pop %v1785
        %v1801 = vmul.f32 1.0, %v1800
        %v1802 = vmul.f32 %v1683, %v1787
        %v1803 = vmul.f32 %v1685, %v1789
        %v1804 = vmul.f32 %v1687, %v1791
        %v1805 = vmul.f32 %v1689, %v1793
        %v1806 = vmul.f32 %v1693, %v1795
        %v1807 = vmul.f32 %v1695, %v1797
        %v1808 = vmul.f32 %v1697, %v1799
        %v1809 = vmul.f32 %v1699, %v1801
        %v1810 = vmul.f32 %v1802, %v1736
        %v1811 = vmul.f32 %v1803, %v1738
        %v1812 = vmul.f32 %v1804, %v1740
        %v1813 = vmul.f32 %v1805, %v1742
        %v1814 = vmul.f32 %v1806, %v1746
        %v1815 = vmul.f32 %v1807, %v1748
        %v1816 = vmul.f32 %v1808, %v1750
        %v1817 = vmul.f32 %v1809, %v1752
        %v1818 = vpack.c.bf16 %v1812, %v1810
        %v1819 = vpack.c.bf16 %v1813, %v1811
        %v1820 = vpack.c.bf16 %v1816, %v1814
        %v1821 = vpack.c.bf16 %v1817, %v1815
        %v1822 = vld [vmem:[%s4] sm:$0xf]
        %v1823 = vld [vmem:[%s4 + $0x4] sm:$0xf]
        %v1824 = vld [vmem:[%s4 + $0x8] sm:$0xf]
        %v1825 = vld [vmem:[%s4 + $0xc] sm:$0xf]
        %v1826 = vld [vmem:[%s4 + $0x10] sm:$0xf]
        %v1827 = vld [vmem:[%s4 + $0x14] sm:$0xf]
        %v1828 = vld [vmem:[%s4 + $0x18] sm:$0xf]
        %v1829 = vld [vmem:[%s4 + $0x1c] sm:$0xf]
        %v1830 = vld [vmem:[%s4 + $0x20] sm:$0xf]
        %v1831 = vld [vmem:[%s4 + $0x24] sm:$0xf]
        %v1832 = vld [vmem:[%s4 + $0x28] sm:$0xf]
        %v1833 = vld [vmem:[%s4 + $0x2c] sm:$0xf]
        %v1834 = vld [vmem:[%s4 + $0x30] sm:$0xf]
        %v1835 = vld [vmem:[%s4 + $0x34] sm:$0xf]
        %v1836 = vld [vmem:[%s4 + $0x38] sm:$0xf]
        %v1837 = vld [vmem:[%s4 + $0x3c] sm:$0xf]
        %v1838 = vld [vmem:[%s4 + $0x40] sm:$0xf]
        %v1839 = vld [vmem:[%s4 + $0x44] sm:$0xf]
        %v1840 = vld [vmem:[%s4 + $0x48] sm:$0xf]
        %v1841 = vld [vmem:[%s4 + $0x4c] sm:$0xf]
        %v1842 = vld [vmem:[%s4 + $0x50] sm:$0xf]
        %v1843 = vld [vmem:[%s4 + $0x54] sm:$0xf]
        %v1844 = vld [vmem:[%s4 + $0x58] sm:$0xf]
        %v1845 = vld [vmem:[%s4 + $0x5c] sm:$0xf]
        %v1846 = vld [vmem:[%s4 + $0x60] sm:$0xf]
        %v1847 = vld [vmem:[%s4 + $0x64] sm:$0xf]
        %v1848 = vld [vmem:[%s4 + $0x68] sm:$0xf]
        %v1849 = vld [vmem:[%s4 + $0x6c] sm:$0xf]
        %v1850 = vld [vmem:[%s4 + $0x70] sm:$0xf]
        %v1851 = vld [vmem:[%s4 + $0x74] sm:$0xf]
        %v1852 = vld [vmem:[%s4 + $0x78] sm:$0xf]
        %v1853 = vld [vmem:[%s4 + $0x7c] sm:$0xf]
        %v1886 = vunpack.c.l.b16 %v1822
        %v1887 = vunpack.c.l.b16 %v1823
        %v1888 = vunpack.c.l.b16 %v1824
        %v1889 = vunpack.c.l.b16 %v1825
        %v1890 = vunpack.c.l.b16 %v1826
        %v1891 = vunpack.c.l.b16 %v1827
        %v1892 = vunpack.c.l.b16 %v1828
        %v1893 = vunpack.c.l.b16 %v1829
        %v1894 = vunpack.c.l.b16 %v1830
        %v1895 = vunpack.c.l.b16 %v1831
        %v1896 = vunpack.c.l.b16 %v1832
        %v1897 = vunpack.c.l.b16 %v1833
        %v1898 = vunpack.c.l.b16 %v1834
        %v1899 = vunpack.c.l.b16 %v1835
        %v1900 = vunpack.c.l.b16 %v1836
        %v1901 = vunpack.c.l.b16 %v1837
        %v1902 = vunpack.c.l.b16 %v1838
        %v1903 = vunpack.c.l.b16 %v1839
        %v1904 = vunpack.c.l.b16 %v1840
        %v1905 = vunpack.c.l.b16 %v1841
        %v1906 = vunpack.c.l.b16 %v1842
        %v1907 = vunpack.c.l.b16 %v1843
        %v1908 = vunpack.c.l.b16 %v1844
        %v1909 = vunpack.c.l.b16 %v1845
        %v1910 = vunpack.c.l.b16 %v1846
        %v1911 = vunpack.c.l.b16 %v1847
        %v1912 = vunpack.c.l.b16 %v1848
        %v1913 = vunpack.c.l.b16 %v1849
        %v1914 = vunpack.c.l.b16 %v1850
        %v1915 = vunpack.c.l.b16 %v1851
        %v1916 = vunpack.c.l.b16 %v1852
        %v1917 = vunpack.c.l.b16 %v1853
        %v1918 = vpack.c.b16 %v1887, %v1886
        %v1919 = vpack.c.b16 %v1889, %v1888
        %v1920 = vpack.c.b16 %v1891, %v1890
        %v1921 = vpack.c.b16 %v1893, %v1892
        %v1922 = vpack.c.b16 %v1895, %v1894
        %v1923 = vpack.c.b16 %v1897, %v1896
        %v1924 = vpack.c.b16 %v1899, %v1898
        %v1925 = vpack.c.b16 %v1901, %v1900
        %v1926 = vpack.c.b16 %v1903, %v1902
        %v1927 = vpack.c.b16 %v1905, %v1904
        %v1928 = vpack.c.b16 %v1907, %v1906
        %v1929 = vpack.c.b16 %v1909, %v1908
        %v1930 = vpack.c.b16 %v1911, %v1910
        %v1931 = vpack.c.b16 %v1913, %v1912
        %v1932 = vpack.c.b16 %v1915, %v1914
        %v1933 = vpack.c.b16 %v1917, %v1916
        %1950 = vmatprep.subr.bf16.mxu0 0
        %1951 = vmatpush1.bf16.msra.mxu0 %v1918
        %1952 = vmatprep.subr.bf16.mxu0 0
        %1953 = vmatpush1.bf16.msra.mxu0 %v1919
        %1954 = vmatprep.subr.bf16.mxu0 0
        %1955 = vmatpush1.bf16.msra.mxu0 %v1920
        %1956 = vmatprep.subr.bf16.mxu0 0
        %1957 = vmatpush1.bf16.msra.mxu0 %v1921
        %1958 = vmatprep.subr.bf16.mxu0 0
        %1959 = vmatpush1.bf16.msra.mxu0 %v1922
        %1960 = vmatprep.subr.bf16.mxu0 0
        %1961 = vmatpush1.bf16.msra.mxu0 %v1923
        %1962 = vmatprep.subr.bf16.mxu0 0
        %1963 = vmatpush1.bf16.msra.mxu0 %v1924
        %1964 = vmatprep.subr.bf16.mxu0 0
        %1965 = vmatpush1.bf16.msra.mxu0 %v1925
        %1966 = vmatprep.subr.bf16.mxu0 0
        %1967 = vmatpush1.bf16.msra.mxu0 %v1926
        %1968 = vmatprep.subr.bf16.mxu0 0
        %1969 = vmatpush1.bf16.msra.mxu0 %v1927
        %1970 = vmatprep.subr.bf16.mxu0 0
        %1971 = vmatpush1.bf16.msra.mxu0 %v1928
        %1972 = vmatprep.subr.bf16.mxu0 0
        %1973 = vmatpush1.bf16.msra.mxu0 %v1929
        %1974 = vmatprep.subr.bf16.mxu0 0
        %1975 = vmatpush1.bf16.msra.mxu0 %v1930
        %1976 = vmatprep.subr.bf16.mxu0 0
        %1977 = vmatpush1.bf16.msra.mxu0 %v1931
        %1978 = vmatprep.subr.bf16.mxu0 0
        %1979 = vmatpush1.bf16.msra.mxu0 %v1932
        %1980 = vmatprep.subr.bf16.mxu0 0
        %1981 = vmatpush1.bf16.msra.mxu0 %v1933
        %1982 = vmatprep.mubr.bf16.mxu0 %v1819
        %1983 = vmatmul.mubr.bf16.gmra.mrb[0].mxu0 %v1818
        %v1984 = vpop.f32.mrb[0].mxu0
        %v1985 = vadd.f32 0.0, %v1984
        %v1986 = vpop.f32.mrb[0].mxu0
        %v1987 = vpop.f32.mrb[0].mxu0
        %v1988 = vadd.f32 0.0, %v1987
        %v1989 = vpop.f32.mrb[0].mxu0
        %1990 = vmatprep.mubr.bf16.mxu0 %v1821
        %1991 = vmatmul.mubr.bf16.gmra.mrb[0].mxu0 %v1820
        %v1992 = vpop.f32.mrb[0].mxu0
        %v1993 = vadd.f32 0.0, %v1992
        %v1994 = vpop.f32.mrb[0].mxu0
        %v1995 = vpop.f32.mrb[0].mxu0
        %v1996 = vadd.f32 0.0, %v1995
        %v1997 = vpop.f32.mrb[0].mxu0
        %1998 = vdwg.mxu0
        %v1999 = vadd.f32 %v1497, %v1985
        %v2000 = vadd.f32 %v1498, %v1988
        %v2001 = vadd.f32 %v1499, %v1993
        %v2002 = vadd.f32 %v1500, %v1996
        %s2003 = scalar_lea.vmem %s5, 1
        %v2004 = vld [vmem:[%s2003] sm:$0x1]
        %v2005 = vmul.f32 %v1999, %v1999
        %v2006 = vmul.f32 %v2000, %v2000
        %v2007 = vmul.f32 %v2001, %v2001
        %v2008 = vmul.f32 %v2002, %v2002
        %v2009 = vsel %vm425, %v2005, 0.0
        %2010 = vadd.xlane.f32.xlu0 %v2009
        %v2011 = vpop.xlane.xlu0 %2010
        %v2012 = vsel %vm425, %v2006, 0.0
        %2013 = vadd.xlane.f32.xlu0 %v2012
        %v2014 = vpop.xlane.xlu0 %2013
        %v2015 = vsel %vm425, %v2007, 0.0
        %2016 = vadd.xlane.f32.xlu0 %v2015
        %v2017 = vpop.xlane.xlu0 %2016
        %v2018 = vsel %vm425, %v2008, 0.0
        %2019 = vadd.xlane.f32.xlu0 %v2018
        %v2020 = vpop.xlane.xlu0 %2019
        %v2021 = vmul.f32 %v2011, %v438
        %v2022 = vmul.f32 %v2014, %v438
        %v2023 = vmul.f32 %v2017, %v438
        %v2024 = vmul.f32 %v2020, %v438
        %v2025 = vadd.f32 %v2021, 1e-06
        %v2026 = vadd.f32 %v2022, 1e-06
        %v2027 = vadd.f32 %v2023, 1e-06
        %v2028 = vadd.f32 %v2024, 1e-06
        %v2029 = vrsqrt.pop %v2025
        %v2030 = vrsqrt.pop %v2026
        %v2031 = vrsqrt.pop %v2027
        %v2032 = vrsqrt.pop %v2028
        %v2033 = vmul.f32 %v1999, %v2029
        %v2034 = vmul.f32 %v2000, %v2030
        %v2035 = vmul.f32 %v2001, %v2031
        %v2036 = vmul.f32 %v2002, %v2032
        %v2038 = vlaneseq
        %v2039 = vshrl.u32 %v2038, 7
        %v2040 = vsub.s32 0, %v2039
        %v2041 = vrot.slane %v2004, %v2040
        %v2043 = vmul.f32 %v2033, %v2041
        %v2044 = vmul.f32 %v2034, %v2041
        %v2045 = vmul.f32 %v2035, %v2041
        %v2046 = vmul.f32 %v2036, %v2041
        %v2047 = vpack.c.bf16 %v2044, %v2043
        %v2048 = vpack.c.bf16 %v2046, %v2045
        %s2049 = scalar_lea.vmem [#allocation3], 256
        %v2050 = vld [vmem:[%s2049] sm:$0xff]
        %v2051 = vld [vmem:[%s2049 + $0x8] sm:$0xff]
        %v2052 = vld [vmem:[%s2049 + $0x10] sm:$0xff]
        %v2053 = vld [vmem:[%s2049 + $0x18] sm:$0xff]
        %v2054 = vld [vmem:[%s2049 + $0x20] sm:$0xff]
        %v2055 = vld [vmem:[%s2049 + $0x28] sm:$0xff]
        %v2056 = vld [vmem:[%s2049 + $0x30] sm:$0xff]
        %v2057 = vld [vmem:[%s2049 + $0x38] sm:$0xff]
        %v2066 = vunpack.c.l.b16 %v2050
        %v2067 = vunpack.c.h.b16 %v2050
        %v2068 = vunpack.c.l.b16 %v2051
        %v2069 = vunpack.c.h.b16 %v2051
        %v2070 = vunpack.c.l.b16 %v2052
        %v2071 = vunpack.c.h.b16 %v2052
        %v2072 = vunpack.c.l.b16 %v2053
        %v2073 = vunpack.c.h.b16 %v2053
        %v2074 = vunpack.c.l.b16 %v2054
        %v2075 = vunpack.c.h.b16 %v2054
        %v2076 = vunpack.c.l.b16 %v2055
        %v2077 = vunpack.c.h.b16 %v2055
        %v2078 = vunpack.c.l.b16 %v2056
        %v2079 = vunpack.c.h.b16 %v2056
        %v2080 = vunpack.c.l.b16 %v2057
        %v2081 = vunpack.c.h.b16 %v2057
        %v2082 = vpack.c.b16 %v2068, %v2066
        %v2083 = vpack.c.b16 %v2069, %v2067
        %v2084 = vpack.c.b16 %v2072, %v2070
        %v2085 = vpack.c.b16 %v2073, %v2071
        %v2086 = vpack.c.b16 %v2076, %v2074
        %v2087 = vpack.c.b16 %v2077, %v2075
        %v2088 = vpack.c.b16 %v2080, %v2078
        %v2089 = vpack.c.b16 %v2081, %v2079
        %v2099 = vsel %vm425, %v2047, 0
        %2101 = vmatprep.subr.bf16.mxu0 %v2083
        %2102 = vmatpush1.bf16.msra.mxu0 %v2082
        %2103 = vmatprep.subr.bf16.mxu0 %v2085
        %2104 = vmatpush1.bf16.msra.mxu0 %v2084
        %2105 = vmatprep.subr.bf16.mxu0 %v2087
        %2106 = vmatpush1.bf16.msra.mxu0 %v2086
        %2107 = vmatprep.subr.bf16.mxu0 %v2089
        %2108 = vmatpush1.bf16.msra.mxu0 %v2088
        %2109 = vmatprep.subr.bf16.mxu0 0
        %2110 = vmatpush1.bf16.msra.mxu0 0
        %2111 = vmatprep.subr.bf16.mxu0 0
        %2112 = vmatpush1.bf16.msra.mxu0 0
        %2113 = vmatprep.subr.bf16.mxu0 0
        %2114 = vmatpush1.bf16.msra.mxu0 0
        %2115 = vmatprep.subr.bf16.mxu0 0
        %2116 = vmatpush1.bf16.msra.mxu0 0
        %2117 = vmatprep.subr.bf16.mxu0 0
        %2118 = vmatpush1.bf16.msra.mxu0 0
        %2119 = vmatprep.subr.bf16.mxu0 0
        %2120 = vmatpush1.bf16.msra.mxu0 0
        %2121 = vmatprep.subr.bf16.mxu0 0
        %2122 = vmatpush1.bf16.msra.mxu0 0
        %2123 = vmatprep.subr.bf16.mxu0 0
        %2124 = vmatpush1.bf16.msra.mxu0 0
        %2125 = vmatprep.subr.bf16.mxu0 0
        %2126 = vmatpush1.bf16.msra.mxu0 0
        %2127 = vmatprep.subr.bf16.mxu0 0
        %2128 = vmatpush1.bf16.msra.mxu0 0
        %2129 = vmatprep.subr.bf16.mxu0 0
        %2130 = vmatpush1.bf16.msra.mxu0 0
        %2131 = vmatprep.subr.bf16.mxu0 0
        %2132 = vmatpush1.bf16.msra.mxu0 0
        %2133 = vmatprep.mubr.bf16.mxu0 0
        %2134 = vmatmul.mubr.bf16.gmra.mrb[0].mxu0 %v2099
        %v2135 = vpop.f32.mrb[0].mxu0
        %v2136 = vadd.f32 0.0, %v2135
        %v2137 = vpop.f32.mrb[0].mxu0
        %v2138 = vadd.f32 0.0, %v2137
        %v2139 = vpop.f32.mrb[0].mxu0
        %v2140 = vpop.f32.mrb[0].mxu0
        %2141 = vdwg.mxu0
        %s2142 = scalar_lea.vmem [#allocation3], 320
        %v2143 = vld [vmem:[%s2142] sm:$0xff]
        %v2144 = vld [vmem:[%s2142 + $0x8] sm:$0xff]
        %v2145 = vld [vmem:[%s2142 + $0x10] sm:$0xff]
        %v2146 = vld [vmem:[%s2142 + $0x18] sm:$0xff]
        %v2147 = vld [vmem:[%s2142 + $0x20] sm:$0xff]
        %v2148 = vld [vmem:[%s2142 + $0x28] sm:$0xff]
        %v2149 = vld [vmem:[%s2142 + $0x30] sm:$0xff]
        %v2150 = vld [vmem:[%s2142 + $0x38] sm:$0xff]
        %v2152 = vrot.slane %v2047, 4
        %v2161 = vunpack.c.l.b16 %v2143
        %v2162 = vunpack.c.h.b16 %v2143
        %v2163 = vunpack.c.l.b16 %v2144
        %v2164 = vunpack.c.h.b16 %v2144
        %v2165 = vunpack.c.l.b16 %v2145
        %v2166 = vunpack.c.h.b16 %v2145
        %v2167 = vunpack.c.l.b16 %v2146
        %v2168 = vunpack.c.h.b16 %v2146
        %v2169 = vunpack.c.l.b16 %v2147
        %v2170 = vunpack.c.h.b16 %v2147
        %v2171 = vunpack.c.l.b16 %v2148
        %v2172 = vunpack.c.h.b16 %v2148
        %v2173 = vunpack.c.l.b16 %v2149
        %v2174 = vunpack.c.h.b16 %v2149
        %v2175 = vunpack.c.l.b16 %v2150
        %v2176 = vunpack.c.h.b16 %v2150
        %v2177 = vpack.c.b16 %v2163, %v2161
        %v2178 = vpack.c.b16 %v2164, %v2162
        %v2179 = vpack.c.b16 %v2167, %v2165
        %v2180 = vpack.c.b16 %v2168, %v2166
        %v2181 = vpack.c.b16 %v2171, %v2169
        %v2182 = vpack.c.b16 %v2172, %v2170
        %v2183 = vpack.c.b16 %v2175, %v2173
        %v2184 = vpack.c.b16 %v2176, %v2174
        %v2194 = vsel %vm425, %v2152, 0
        %2196 = vmatprep.subr.bf16.mxu0 %v2178
        %2197 = vmatpush1.bf16.msra.mxu0 %v2177
        %2198 = vmatprep.subr.bf16.mxu0 %v2180
        %2199 = vmatpush1.bf16.msra.mxu0 %v2179
        %2200 = vmatprep.subr.bf16.mxu0 %v2182
        %2201 = vmatpush1.bf16.msra.mxu0 %v2181
        %2202 = vmatprep.subr.bf16.mxu0 %v2184
        %2203 = vmatpush1.bf16.msra.mxu0 %v2183
        %2204 = vmatprep.subr.bf16.mxu0 0
        %2205 = vmatpush1.bf16.msra.mxu0 0
        %2206 = vmatprep.subr.bf16.mxu0 0
        %2207 = vmatpush1.bf16.msra.mxu0 0
        %2208 = vmatprep.subr.bf16.mxu0 0
        %2209 = vmatpush1.bf16.msra.mxu0 0
        %2210 = vmatprep.subr.bf16.mxu0 0
        %2211 = vmatpush1.bf16.msra.mxu0 0
        %2212 = vmatprep.subr.bf16.mxu0 0
        %2213 = vmatpush1.bf16.msra.mxu0 0
        %2214 = vmatprep.subr.bf16.mxu0 0
        %2215 = vmatpush1.bf16.msra.mxu0 0
        %2216 = vmatprep.subr.bf16.mxu0 0
        %2217 = vmatpush1.bf16.msra.mxu0 0
        %2218 = vmatprep.subr.bf16.mxu0 0
        %2219 = vmatpush1.bf16.msra.mxu0 0
        %2220 = vmatprep.subr.bf16.mxu0 0
        %2221 = vmatpush1.bf16.msra.mxu0 0
        %2222 = vmatprep.subr.bf16.mxu0 0
        %2223 = vmatpush1.bf16.msra.mxu0 0
        %2224 = vmatprep.subr.bf16.mxu0 0
        %2225 = vmatpush1.bf16.msra.mxu0 0
        %2226 = vmatprep.subr.bf16.mxu0 0
        %2227 = vmatpush1.bf16.msra.mxu0 0
        %2228 = vmatprep.mubr.bf16.mxu0 0
        %2229 = vmatmul.mubr.bf16.gmra.mrb[0].mxu0 %v2194
        %v2230 = vpop.f32.mrb[0].mxu0
        %v2231 = vadd.f32 0.0, %v2230
        %v2232 = vpop.f32.mrb[0].mxu0
        %v2233 = vadd.f32 0.0, %v2232
        %v2234 = vpop.f32.mrb[0].mxu0
        %v2235 = vpop.f32.mrb[0].mxu0
        %2236 = vdwg.mxu0
        %s2237 = scalar_lea.vmem [#allocation3], 384
        %v2238 = vld [vmem:[%s2237] sm:$0xff]
        %v2239 = vld [vmem:[%s2237 + $0x8] sm:$0xff]
        %v2240 = vld [vmem:[%s2237 + $0x10] sm:$0xff]
        %v2241 = vld [vmem:[%s2237 + $0x18] sm:$0xff]
        %v2242 = vld [vmem:[%s2237 + $0x20] sm:$0xff]
        %v2243 = vld [vmem:[%s2237 + $0x28] sm:$0xff]
        %v2244 = vld [vmem:[%s2237 + $0x30] sm:$0xff]
        %v2245 = vld [vmem:[%s2237 + $0x38] sm:$0xff]
        %v2254 = vunpack.c.l.b16 %v2238
        %v2255 = vunpack.c.h.b16 %v2238
        %v2256 = vunpack.c.l.b16 %v2239
        %v2257 = vunpack.c.h.b16 %v2239
        %v2258 = vunpack.c.l.b16 %v2240
        %v2259 = vunpack.c.h.b16 %v2240
        %v2260 = vunpack.c.l.b16 %v2241
        %v2261 = vunpack.c.h.b16 %v2241
        %v2262 = vunpack.c.l.b16 %v2242
        %v2263 = vunpack.c.h.b16 %v2242
        %v2264 = vunpack.c.l.b16 %v2243
        %v2265 = vunpack.c.h.b16 %v2243
        %v2266 = vunpack.c.l.b16 %v2244
        %v2267 = vunpack.c.h.b16 %v2244
        %v2268 = vunpack.c.l.b16 %v2245
        %v2269 = vunpack.c.h.b16 %v2245
        %v2270 = vpack.c.b16 %v2256, %v2254
        %v2271 = vpack.c.b16 %v2257, %v2255
        %v2272 = vpack.c.b16 %v2260, %v2258
        %v2273 = vpack.c.b16 %v2261, %v2259
        %v2274 = vpack.c.b16 %v2264, %v2262
        %v2275 = vpack.c.b16 %v2265, %v2263
        %v2276 = vpack.c.b16 %v2268, %v2266
        %v2277 = vpack.c.b16 %v2269, %v2267
        %v2287 = vsel %vm425, %v2048, 0
        %2289 = vmatprep.subr.bf16.mxu0 %v2271
        %2290 = vmatpush1.bf16.msra.mxu0 %v2270
        %2291 = vmatprep.subr.bf16.mxu0 %v2273
        %2292 = vmatpush1.bf16.msra.mxu0 %v2272
        %2293 = vmatprep.subr.bf16.mxu0 %v2275
        %2294 = vmatpush1.bf16.msra.mxu0 %v2274
        %2295 = vmatprep.subr.bf16.mxu0 %v2277
        %2296 = vmatpush1.bf16.msra.mxu0 %v2276
        %2297 = vmatprep.subr.bf16.mxu0 0
        %2298 = vmatpush1.bf16.msra.mxu0 0
        %2299 = vmatprep.subr.bf16.mxu0 0
        %2300 = vmatpush1.bf16.msra.mxu0 0
        %2301 = vmatprep.subr.bf16.mxu0 0
        %2302 = vmatpush1.bf16.msra.mxu0 0
        %2303 = vmatprep.subr.bf16.mxu0 0
        %2304 = vmatpush1.bf16.msra.mxu0 0
        %2305 = vmatprep.subr.bf16.mxu0 0
        %2306 = vmatpush1.bf16.msra.mxu0 0
        %2307 = vmatprep.subr.bf16.mxu0 0
        %2308 = vmatpush1.bf16.msra.mxu0 0
        %2309 = vmatprep.subr.bf16.mxu0 0
        %2310 = vmatpush1.bf16.msra.mxu0 0
        %2311 = vmatprep.subr.bf16.mxu0 0
        %2312 = vmatpush1.bf16.msra.mxu0 0
        %2313 = vmatprep.subr.bf16.mxu0 0
        %2314 = vmatpush1.bf16.msra.mxu0 0
        %2315 = vmatprep.subr.bf16.mxu0 0
        %2316 = vmatpush1.bf16.msra.mxu0 0
        %2317 = vmatprep.subr.bf16.mxu0 0
        %2318 = vmatpush1.bf16.msra.mxu0 0
        %2319 = vmatprep.subr.bf16.mxu0 0
        %2320 = vmatpush1.bf16.msra.mxu0 0
        %2321 = vmatprep.mubr.bf16.mxu0 0
        %2322 = vmatmul.mubr.bf16.gmra.mrb[0].mxu0 %v2287
        %v2323 = vpop.f32.mrb[0].mxu0
        %v2324 = vadd.f32 0.0, %v2323
        %v2325 = vpop.f32.mrb[0].mxu0
        %v2326 = vadd.f32 0.0, %v2325
        %v2327 = vpop.f32.mrb[0].mxu0
        %v2328 = vpop.f32.mrb[0].mxu0
        %2329 = vdwg.mxu0
        %s2330 = scalar_lea.vmem [#allocation3], 448
        %v2331 = vld [vmem:[%s2330] sm:$0xff]
        %v2332 = vld [vmem:[%s2330 + $0x8] sm:$0xff]
        %v2333 = vld [vmem:[%s2330 + $0x10] sm:$0xff]
        %v2334 = vld [vmem:[%s2330 + $0x18] sm:$0xff]
        %v2335 = vld [vmem:[%s2330 + $0x20] sm:$0xff]
        %v2336 = vld [vmem:[%s2330 + $0x28] sm:$0xff]
        %v2337 = vld [vmem:[%s2330 + $0x30] sm:$0xff]
        %v2338 = vld [vmem:[%s2330 + $0x38] sm:$0xff]
        %v2340 = vrot.slane %v2048, 4
        %v2349 = vunpack.c.l.b16 %v2331
        %v2350 = vunpack.c.h.b16 %v2331
        %v2351 = vunpack.c.l.b16 %v2332
        %v2352 = vunpack.c.h.b16 %v2332
        %v2353 = vunpack.c.l.b16 %v2333
        %v2354 = vunpack.c.h.b16 %v2333
        %v2355 = vunpack.c.l.b16 %v2334
        %v2356 = vunpack.c.h.b16 %v2334
        %v2357 = vunpack.c.l.b16 %v2335
        %v2358 = vunpack.c.h.b16 %v2335
        %v2359 = vunpack.c.l.b16 %v2336
        %v2360 = vunpack.c.h.b16 %v2336
        %v2361 = vunpack.c.l.b16 %v2337
        %v2362 = vunpack.c.h.b16 %v2337
        %v2363 = vunpack.c.l.b16 %v2338
        %v2364 = vunpack.c.h.b16 %v2338
        %v2365 = vpack.c.b16 %v2351, %v2349
        %v2366 = vpack.c.b16 %v2352, %v2350
        %v2367 = vpack.c.b16 %v2355, %v2353
        %v2368 = vpack.c.b16 %v2356, %v2354
        %v2369 = vpack.c.b16 %v2359, %v2357
        %v2370 = vpack.c.b16 %v2360, %v2358
        %v2371 = vpack.c.b16 %v2363, %v2361
        %v2372 = vpack.c.b16 %v2364, %v2362
        %v2382 = vsel %vm425, %v2340, 0
        %2384 = vmatprep.subr.bf16.mxu0 %v2366
        %2385 = vmatpush1.bf16.msra.mxu0 %v2365
        %2386 = vmatprep.subr.bf16.mxu0 %v2368
        %2387 = vmatpush1.bf16.msra.mxu0 %v2367
        %2388 = vmatprep.subr.bf16.mxu0 %v2370
        %2389 = vmatpush1.bf16.msra.mxu0 %v2369
        %2390 = vmatprep.subr.bf16.mxu0 %v2372
        %2391 = vmatpush1.bf16.msra.mxu0 %v2371
        %2392 = vmatprep.subr.bf16.mxu0 0
        %2393 = vmatpush1.bf16.msra.mxu0 0
        %2394 = vmatprep.subr.bf16.mxu0 0
        %2395 = vmatpush1.bf16.msra.mxu0 0
        %2396 = vmatprep.subr.bf16.mxu0 0
        %2397 = vmatpush1.bf16.msra.mxu0 0
        %2398 = vmatprep.subr.bf16.mxu0 0
        %2399 = vmatpush1.bf16.msra.mxu0 0
        %2400 = vmatprep.subr.bf16.mxu0 0
        %2401 = vmatpush1.bf16.msra.mxu0 0
        %2402 = vmatprep.subr.bf16.mxu0 0
        %2403 = vmatpush1.bf16.msra.mxu0 0
        %2404 = vmatprep.subr.bf16.mxu0 0
        %2405 = vmatpush1.bf16.msra.mxu0 0
        %2406 = vmatprep.subr.bf16.mxu0 0
        %2407 = vmatpush1.bf16.msra.mxu0 0
        %2408 = vmatprep.subr.bf16.mxu0 0
        %2409 = vmatpush1.bf16.msra.mxu0 0
        %2410 = vmatprep.subr.bf16.mxu0 0
        %2411 = vmatpush1.bf16.msra.mxu0 0
        %2412 = vmatprep.subr.bf16.mxu0 0
        %2413 = vmatpush1.bf16.msra.mxu0 0
        %2414 = vmatprep.subr.bf16.mxu0 0
        %2415 = vmatpush1.bf16.msra.mxu0 0
        %2416 = vmatprep.mubr.bf16.mxu0 0
        %2417 = vmatmul.mubr.bf16.gmra.mrb[0].mxu0 %v2382
        %v2418 = vpop.f32.mrb[0].mxu0
        %v2419 = vadd.f32 0.0, %v2418
        %v2420 = vpop.f32.mrb[0].mxu0
        %v2421 = vadd.f32 0.0, %v2420
        %v2422 = vpop.f32.mrb[0].mxu0
        %v2423 = vpop.f32.mrb[0].mxu0
        %2424 = vdwg.mxu0
        %2426 = vrot.lane.b32.xlu0 %v2136, 64
        %v2427 = vpop.permute.xlu0 %2426
        %v2429 = vmul.f32 %v2136, %v2427
        %v2430 = vpack.c.bf16 %v2429, %v2429
        %v2432 = vsel %vm425, %v2430, 0
        %2434 = vmatprep.subr.bf16.mxu0 0
        %2435 = vmatpush1.bf16.msra.mxu0 %v864
        %2436 = vmatprep.subr.bf16.mxu0 0
        %2437 = vmatpush1.bf16.msra.mxu0 %v865
        %2438 = vmatprep.subr.bf16.mxu0 0
        %2439 = vmatpush1.bf16.msra.mxu0 %v866
        %2440 = vmatprep.subr.bf16.mxu0 0
        %2441 = vmatpush1.bf16.msra.mxu0 %v867
        %2442 = vmatprep.subr.bf16.mxu0 0
        %2443 = vmatpush1.bf16.msra.mxu0 0
        %2444 = vmatprep.subr.bf16.mxu0 0
        %2445 = vmatpush1.bf16.msra.mxu0 0
        %2446 = vmatprep.subr.bf16.mxu0 0
        %2447 = vmatpush1.bf16.msra.mxu0 0
        %2448 = vmatprep.subr.bf16.mxu0 0
        %2449 = vmatpush1.bf16.msra.mxu0 0
        %2450 = vmatprep.subr.bf16.mxu0 0
        %2451 = vmatpush1.bf16.msra.mxu0 0
        %2452 = vmatprep.subr.bf16.mxu0 0
        %2453 = vmatpush1.bf16.msra.mxu0 0
        %2454 = vmatprep.subr.bf16.mxu0 0
        %2455 = vmatpush1.bf16.msra.mxu0 0
        %2456 = vmatprep.subr.bf16.mxu0 0
        %2457 = vmatpush1.bf16.msra.mxu0 0
        %2458 = vmatprep.subr.bf16.mxu0 0
        %2459 = vmatpush1.bf16.msra.mxu0 0
        %2460 = vmatprep.subr.bf16.mxu0 0
        %2461 = vmatpush1.bf16.msra.mxu0 0
        %2462 = vmatprep.subr.bf16.mxu0 0
        %2463 = vmatpush1.bf16.msra.mxu0 0
        %2464 = vmatprep.subr.bf16.mxu0 0
        %2465 = vmatpush1.bf16.msra.mxu0 0
        %2466 = vmatprep.mubr.bf16.mxu0 0
        %2467 = vmatmul.mubr.bf16.gmra.mrb[0].mxu0 %v2432
        %v2468 = vpop.f32.mrb[0].mxu0
        %v2469 = vadd.f32 0.0, %v2468
        %v2470 = vpop.f32.mrb[0].mxu0
        %v2471 = vpop.f32.mrb[0].mxu0
        %v2472 = vpop.f32.mrb[0].mxu0
        %2473 = vdwg.mxu0
        %v2474 = vmul.f32 %v2469, 0.25
        %v2475 = vsub.f32 %v2474, %v2474
        %v2476 = vmul.f32 %v2475, 1.442695
        %v2477 = vpow.pop %v2476
        %v2478 = vmul.f32 %v2477, %v2138
        %v2479 = vrcp.pop %v2477
        %v2480 = vmul.f32 %v2478, %v2479
        %v2481 = vmul.f32 %v2231, %v2427
        %v2482 = vpack.c.bf16 %v2481, %v2481
        %v2484 = vsel %vm425, %v2482, 0
        %2486 = vmatprep.subr.bf16.mxu0 0
        %2487 = vmatpush1.bf16.msra.mxu0 %v864
        %2488 = vmatprep.subr.bf16.mxu0 0
        %2489 = vmatpush1.bf16.msra.mxu0 %v865
        %2490 = vmatprep.subr.bf16.mxu0 0
        %2491 = vmatpush1.bf16.msra.mxu0 %v866
        %2492 = vmatprep.subr.bf16.mxu0 0
        %2493 = vmatpush1.bf16.msra.mxu0 %v867
        %2494 = vmatprep.subr.bf16.mxu0 0
        %2495 = vmatpush1.bf16.msra.mxu0 0
        %2496 = vmatprep.subr.bf16.mxu0 0
        %2497 = vmatpush1.bf16.msra.mxu0 0
        %2498 = vmatprep.subr.bf16.mxu0 0
        %2499 = vmatpush1.bf16.msra.mxu0 0
        %2500 = vmatprep.subr.bf16.mxu0 0
        %2501 = vmatpush1.bf16.msra.mxu0 0
        %2502 = vmatprep.subr.bf16.mxu0 0
        %2503 = vmatpush1.bf16.msra.mxu0 0
        %2504 = vmatprep.subr.bf16.mxu0 0
        %2505 = vmatpush1.bf16.msra.mxu0 0
        %2506 = vmatprep.subr.bf16.mxu0 0
        %2507 = vmatpush1.bf16.msra.mxu0 0
        %2508 = vmatprep.subr.bf16.mxu0 0
        %2509 = vmatpush1.bf16.msra.mxu0 0
        %2510 = vmatprep.subr.bf16.mxu0 0
        %2511 = vmatpush1.bf16.msra.mxu0 0
        %2512 = vmatprep.subr.bf16.mxu0 0
        %2513 = vmatpush1.bf16.msra.mxu0 0
        %2514 = vmatprep.subr.bf16.mxu0 0
        %2515 = vmatpush1.bf16.msra.mxu0 0
        %2516 = vmatprep.subr.bf16.mxu0 0
        %2517 = vmatpush1.bf16.msra.mxu0 0
        %2518 = vmatprep.mubr.bf16.mxu0 0
        %2519 = vmatmul.mubr.bf16.gmra.mrb[0].mxu0 %v2484
        %v2520 = vpop.f32.mrb[0].mxu0
        %v2521 = vadd.f32 0.0, %v2520
        %v2522 = vpop.f32.mrb[0].mxu0
        %v2523 = vpop.f32.mrb[0].mxu0
        %v2524 = vpop.f32.mrb[0].mxu0
        %2525 = vdwg.mxu0
        %v2526 = vmul.f32 %v2521, 0.25
        %2528 = vrot.lane.b32.xlu0 %v2231, 64
        %v2529 = vpop.permute.xlu0 %2528
        %v2531 = vmul.f32 %v2231, %v2529
        %v2532 = vpack.c.bf16 %v2531, %v2531
        %v2534 = vsel %vm425, %v2532, 0
        %2536 = vmatprep.subr.bf16.mxu0 0
        %2537 = vmatpush1.bf16.msra.mxu0 %v864
        %2538 = vmatprep.subr.bf16.mxu0 0
        %2539 = vmatpush1.bf16.msra.mxu0 %v865
        %2540 = vmatprep.subr.bf16.mxu0 0
        %2541 = vmatpush1.bf16.msra.mxu0 %v866
        %2542 = vmatprep.subr.bf16.mxu0 0
        %2543 = vmatpush1.bf16.msra.mxu0 %v867
        %2544 = vmatprep.subr.bf16.mxu0 0
        %2545 = vmatpush1.bf16.msra.mxu0 0
        %2546 = vmatprep.subr.bf16.mxu0 0
        %2547 = vmatpush1.bf16.msra.mxu0 0
        %2548 = vmatprep.subr.bf16.mxu0 0
        %2549 = vmatpush1.bf16.msra.mxu0 0
        %2550 = vmatprep.subr.bf16.mxu0 0
        %2551 = vmatpush1.bf16.msra.mxu0 0
        %2552 = vmatprep.subr.bf16.mxu0 0
        %2553 = vmatpush1.bf16.msra.mxu0 0
        %2554 = vmatprep.subr.bf16.mxu0 0
        %2555 = vmatpush1.bf16.msra.mxu0 0
        %2556 = vmatprep.subr.bf16.mxu0 0
        %2557 = vmatpush1.bf16.msra.mxu0 0
        %2558 = vmatprep.subr.bf16.mxu0 0
        %2559 = vmatpush1.bf16.msra.mxu0 0
        %2560 = vmatprep.subr.bf16.mxu0 0
        %2561 = vmatpush1.bf16.msra.mxu0 0
        %2562 = vmatprep.subr.bf16.mxu0 0
        %2563 = vmatpush1.bf16.msra.mxu0 0
        %2564 = vmatprep.subr.bf16.mxu0 0
        %2565 = vmatpush1.bf16.msra.mxu0 0
        %2566 = vmatprep.subr.bf16.mxu0 0
        %2567 = vmatpush1.bf16.msra.mxu0 0
        %2568 = vmatprep.mubr.bf16.mxu0 0
        %2569 = vmatmul.mubr.bf16.gmra.mrb[0].mxu0 %v2534
        %v2570 = vpop.f32.mrb[0].mxu0
        %v2571 = vadd.f32 0.0, %v2570
        %v2572 = vpop.f32.mrb[0].mxu0
        %v2573 = vpop.f32.mrb[0].mxu0
        %v2574 = vpop.f32.mrb[0].mxu0
        %2575 = vdwg.mxu0
        %v2576 = vmul.f32 %v2571, 0.25
        %v2577 = vmax.f32 %v2526, %v2576
        %v2578 = vsub.f32 %v2526, %v2577
        %v2579 = vmul.f32 %v2578, 1.442695
        %v2580 = vpow.pop %v2579
        %v2581 = vsub.f32 %v2576, %v2577
        %v2582 = vmul.f32 %v2581, 1.442695
        %v2583 = vpow.pop %v2582
        %v2584 = vadd.f32 %v2580, %v2583
        %v2585 = vmul.f32 %v2580, %v2138
        %v2586 = vmul.f32 %v2583, %v2233
        %v2587 = vadd.f32 %v2585, %v2586
        %v2588 = vrcp.pop %v2584
        %v2589 = vmul.f32 %v2587, %v2588
        %v2590 = vmul.f32 %v2324, %v2427
        %v2591 = vpack.c.bf16 %v2590, %v2590
        %v2593 = vsel %vm425, %v2591, 0
        %2595 = vmatprep.subr.bf16.mxu0 0
        %2596 = vmatpush1.bf16.msra.mxu0 %v864
        %2597 = vmatprep.subr.bf16.mxu0 0
        %2598 = vmatpush1.bf16.msra.mxu0 %v865
        %2599 = vmatprep.subr.bf16.mxu0 0
        %2600 = vmatpush1.bf16.msra.mxu0 %v866
        %2601 = vmatprep.subr.bf16.mxu0 0
        %2602 = vmatpush1.bf16.msra.mxu0 %v867
        %2603 = vmatprep.subr.bf16.mxu0 0
        %2604 = vmatpush1.bf16.msra.mxu0 0
        %2605 = vmatprep.subr.bf16.mxu0 0
        %2606 = vmatpush1.bf16.msra.mxu0 0
        %2607 = vmatprep.subr.bf16.mxu0 0
        %2608 = vmatpush1.bf16.msra.mxu0 0
        %2609 = vmatprep.subr.bf16.mxu0 0
        %2610 = vmatpush1.bf16.msra.mxu0 0
        %2611 = vmatprep.subr.bf16.mxu0 0
        %2612 = vmatpush1.bf16.msra.mxu0 0
        %2613 = vmatprep.subr.bf16.mxu0 0
        %2614 = vmatpush1.bf16.msra.mxu0 0
        %2615 = vmatprep.subr.bf16.mxu0 0
        %2616 = vmatpush1.bf16.msra.mxu0 0
        %2617 = vmatprep.subr.bf16.mxu0 0
        %2618 = vmatpush1.bf16.msra.mxu0 0
        %2619 = vmatprep.subr.bf16.mxu0 0
        %2620 = vmatpush1.bf16.msra.mxu0 0
        %2621 = vmatprep.subr.bf16.mxu0 0
        %2622 = vmatpush1.bf16.msra.mxu0 0
        %2623 = vmatprep.subr.bf16.mxu0 0
        %2624 = vmatpush1.bf16.msra.mxu0 0
        %2625 = vmatprep.subr.bf16.mxu0 0
        %2626 = vmatpush1.bf16.msra.mxu0 0
        %2627 = vmatprep.mubr.bf16.mxu0 0
        %2628 = vmatmul.mubr.bf16.gmra.mrb[0].mxu0 %v2593
        %v2629 = vpop.f32.mrb[0].mxu0
        %v2630 = vadd.f32 0.0, %v2629
        %v2631 = vpop.f32.mrb[0].mxu0
        %v2632 = vpop.f32.mrb[0].mxu0
        %v2633 = vpop.f32.mrb[0].mxu0
        %2634 = vdwg.mxu0
        %v2635 = vmul.f32 %v2630, 0.25
        %v2636 = vmul.f32 %v2324, %v2529
        %v2637 = vpack.c.bf16 %v2636, %v2636
        %v2639 = vsel %vm425, %v2637, 0
        %2641 = vmatprep.subr.bf16.mxu0 0
        %2642 = vmatpush1.bf16.msra.mxu0 %v864
        %2643 = vmatprep.subr.bf16.mxu0 0
        %2644 = vmatpush1.bf16.msra.mxu0 %v865
        %2645 = vmatprep.subr.bf16.mxu0 0
        %2646 = vmatpush1.bf16.msra.mxu0 %v866
        %2647 = vmatprep.subr.bf16.mxu0 0
        %2648 = vmatpush1.bf16.msra.mxu0 %v867
        %2649 = vmatprep.subr.bf16.mxu0 0
        %2650 = vmatpush1.bf16.msra.mxu0 0
        %2651 = vmatprep.subr.bf16.mxu0 0
        %2652 = vmatpush1.bf16.msra.mxu0 0
        %2653 = vmatprep.subr.bf16.mxu0 0
        %2654 = vmatpush1.bf16.msra.mxu0 0
        %2655 = vmatprep.subr.bf16.mxu0 0
        %2656 = vmatpush1.bf16.msra.mxu0 0
        %2657 = vmatprep.subr.bf16.mxu0 0
        %2658 = vmatpush1.bf16.msra.mxu0 0
        %2659 = vmatprep.subr.bf16.mxu0 0
        %2660 = vmatpush1.bf16.msra.mxu0 0
        %2661 = vmatprep.subr.bf16.mxu0 0
        %2662 = vmatpush1.bf16.msra.mxu0 0
        %2663 = vmatprep.subr.bf16.mxu0 0
        %2664 = vmatpush1.bf16.msra.mxu0 0
        %2665 = vmatprep.subr.bf16.mxu0 0
        %2666 = vmatpush1.bf16.msra.mxu0 0
        %2667 = vmatprep.subr.bf16.mxu0 0
        %2668 = vmatpush1.bf16.msra.mxu0 0
        %2669 = vmatprep.subr.bf16.mxu0 0
        %2670 = vmatpush1.bf16.msra.mxu0 0
        %2671 = vmatprep.subr.bf16.mxu0 0
        %2672 = vmatpush1.bf16.msra.mxu0 0
        %2673 = vmatprep.mubr.bf16.mxu0 0
        %2674 = vmatmul.mubr.bf16.gmra.mrb[0].mxu0 %v2639
        %v2675 = vpop.f32.mrb[0].mxu0
        %v2676 = vadd.f32 0.0, %v2675
        %v2677 = vpop.f32.mrb[0].mxu0
        %v2678 = vpop.f32.mrb[0].mxu0
        %v2679 = vpop.f32.mrb[0].mxu0
        %2680 = vdwg.mxu0
        %v2681 = vmul.f32 %v2676, 0.25
        %2683 = vrot.lane.b32.xlu0 %v2324, 64
        %v2684 = vpop.permute.xlu0 %2683
        %v2686 = vmul.f32 %v2324, %v2684
        %v2687 = vpack.c.bf16 %v2686, %v2686
        %v2689 = vsel %vm425, %v2687, 0
        %2691 = vmatprep.subr.bf16.mxu0 0
        %2692 = vmatpush1.bf16.msra.mxu0 %v864
        %2693 = vmatprep.subr.bf16.mxu0 0
        %2694 = vmatpush1.bf16.msra.mxu0 %v865
        %2695 = vmatprep.subr.bf16.mxu0 0
        %2696 = vmatpush1.bf16.msra.mxu0 %v866
        %2697 = vmatprep.subr.bf16.mxu0 0
        %2698 = vmatpush1.bf16.msra.mxu0 %v867
        %2699 = vmatprep.subr.bf16.mxu0 0
        %2700 = vmatpush1.bf16.msra.mxu0 0
        %2701 = vmatprep.subr.bf16.mxu0 0
        %2702 = vmatpush1.bf16.msra.mxu0 0
        %2703 = vmatprep.subr.bf16.mxu0 0
        %2704 = vmatpush1.bf16.msra.mxu0 0
        %2705 = vmatprep.subr.bf16.mxu0 0
        %2706 = vmatpush1.bf16.msra.mxu0 0
        %2707 = vmatprep.subr.bf16.mxu0 0
        %2708 = vmatpush1.bf16.msra.mxu0 0
        %2709 = vmatprep.subr.bf16.mxu0 0
        %2710 = vmatpush1.bf16.msra.mxu0 0
        %2711 = vmatprep.subr.bf16.mxu0 0
        %2712 = vmatpush1.bf16.msra.mxu0 0
        %2713 = vmatprep.subr.bf16.mxu0 0
        %2714 = vmatpush1.bf16.msra.mxu0 0
        %2715 = vmatprep.subr.bf16.mxu0 0
        %2716 = vmatpush1.bf16.msra.mxu0 0
        %2717 = vmatprep.subr.bf16.mxu0 0
        %2718 = vmatpush1.bf16.msra.mxu0 0
        %2719 = vmatprep.subr.bf16.mxu0 0
        %2720 = vmatpush1.bf16.msra.mxu0 0
        %2721 = vmatprep.subr.bf16.mxu0 0
        %2722 = vmatpush1.bf16.msra.mxu0 0
        %2723 = vmatprep.mubr.bf16.mxu0 0
        %2724 = vmatmul.mubr.bf16.gmra.mrb[0].mxu0 %v2689
        %v2725 = vpop.f32.mrb[0].mxu0
        %v2726 = vadd.f32 0.0, %v2725
        %v2727 = vpop.f32.mrb[0].mxu0
        %v2728 = vpop.f32.mrb[0].mxu0
        %v2729 = vpop.f32.mrb[0].mxu0
        %2730 = vdwg.mxu0
        %v2731 = vmul.f32 %v2726, 0.25
        %v2732 = vmax.f32 %v2635, %v2681
        %v2733 = vmax.f32 %v2732, %v2731
        %v2734 = vsub.f32 %v2635, %v2733
        %v2735 = vmul.f32 %v2734, 1.442695
        %v2736 = vpow.pop %v2735
        %v2737 = vsub.f32 %v2681, %v2733
        %v2738 = vmul.f32 %v2737, 1.442695
        %v2739 = vpow.pop %v2738
        %v2740 = vsub.f32 %v2731, %v2733
        %v2741 = vmul.f32 %v2740, 1.442695
        %v2742 = vpow.pop %v2741
        %v2743 = vadd.f32 %v2736, %v2739
        %v2744 = vadd.f32 %v2743, %v2742
        %v2745 = vmul.f32 %v2736, %v2138
        %v2746 = vmul.f32 %v2739, %v2233
        %v2747 = vadd.f32 %v2745, %v2746
        %v2748 = vmul.f32 %v2742, %v2326
        %v2749 = vadd.f32 %v2747, %v2748
        %v2750 = vrcp.pop %v2744
        %v2751 = vmul.f32 %v2749, %v2750
        %v2752 = vmul.f32 %v2419, %v2427
        %v2753 = vpack.c.bf16 %v2752, %v2752
        %v2755 = vsel %vm425, %v2753, 0
        %2757 = vmatprep.subr.bf16.mxu0 0
        %2758 = vmatpush1.bf16.msra.mxu0 %v864
        %2759 = vmatprep.subr.bf16.mxu0 0
        %2760 = vmatpush1.bf16.msra.mxu0 %v865
        %2761 = vmatprep.subr.bf16.mxu0 0
        %2762 = vmatpush1.bf16.msra.mxu0 %v866
        %2763 = vmatprep.subr.bf16.mxu0 0
        %2764 = vmatpush1.bf16.msra.mxu0 %v867
        %2765 = vmatprep.subr.bf16.mxu0 0
        %2766 = vmatpush1.bf16.msra.mxu0 0
        %2767 = vmatprep.subr.bf16.mxu0 0
        %2768 = vmatpush1.bf16.msra.mxu0 0
        %2769 = vmatprep.subr.bf16.mxu0 0
        %2770 = vmatpush1.bf16.msra.mxu0 0
        %2771 = vmatprep.subr.bf16.mxu0 0
        %2772 = vmatpush1.bf16.msra.mxu0 0
        %2773 = vmatprep.subr.bf16.mxu0 0
        %2774 = vmatpush1.bf16.msra.mxu0 0
        %2775 = vmatprep.subr.bf16.mxu0 0
        %2776 = vmatpush1.bf16.msra.mxu0 0
        %2777 = vmatprep.subr.bf16.mxu0 0
        %2778 = vmatpush1.bf16.msra.mxu0 0
        %2779 = vmatprep.subr.bf16.mxu0 0
        %2780 = vmatpush1.bf16.msra.mxu0 0
        %2781 = vmatprep.subr.bf16.mxu0 0
        %2782 = vmatpush1.bf16.msra.mxu0 0
        %2783 = vmatprep.subr.bf16.mxu0 0
        %2784 = vmatpush1.bf16.msra.mxu0 0
        %2785 = vmatprep.subr.bf16.mxu0 0
        %2786 = vmatpush1.bf16.msra.mxu0 0
        %2787 = vmatprep.subr.bf16.mxu0 0
        %2788 = vmatpush1.bf16.msra.mxu0 0
        %2789 = vmatprep.mubr.bf16.mxu0 0
        %2790 = vmatmul.mubr.bf16.gmra.mrb[0].mxu0 %v2755
        %v2791 = vpop.f32.mrb[0].mxu0
        %v2792 = vadd.f32 0.0, %v2791
        %v2793 = vpop.f32.mrb[0].mxu0
        %v2794 = vpop.f32.mrb[0].mxu0
        %v2795 = vpop.f32.mrb[0].mxu0
        %2796 = vdwg.mxu0
        %v2797 = vmul.f32 %v2792, 0.25
        %v2798 = vmul.f32 %v2419, %v2529
        %v2799 = vpack.c.bf16 %v2798, %v2798
        %v2801 = vsel %vm425, %v2799, 0
        %2803 = vmatprep.subr.bf16.mxu0 0
        %2804 = vmatpush1.bf16.msra.mxu0 %v864
        %2805 = vmatprep.subr.bf16.mxu0 0
        %2806 = vmatpush1.bf16.msra.mxu0 %v865
        %2807 = vmatprep.subr.bf16.mxu0 0
        %2808 = vmatpush1.bf16.msra.mxu0 %v866
        %2809 = vmatprep.subr.bf16.mxu0 0
        %2810 = vmatpush1.bf16.msra.mxu0 %v867
        %2811 = vmatprep.subr.bf16.mxu0 0
        %2812 = vmatpush1.bf16.msra.mxu0 0
        %2813 = vmatprep.subr.bf16.mxu0 0
        %2814 = vmatpush1.bf16.msra.mxu0 0
        %2815 = vmatprep.subr.bf16.mxu0 0
        %2816 = vmatpush1.bf16.msra.mxu0 0
        %2817 = vmatprep.subr.bf16.mxu0 0
        %2818 = vmatpush1.bf16.msra.mxu0 0
        %2819 = vmatprep.subr.bf16.mxu0 0
        %2820 = vmatpush1.bf16.msra.mxu0 0
        %2821 = vmatprep.subr.bf16.mxu0 0
        %2822 = vmatpush1.bf16.msra.mxu0 0
        %2823 = vmatprep.subr.bf16.mxu0 0
        %2824 = vmatpush1.bf16.msra.mxu0 0
        %2825 = vmatprep.subr.bf16.mxu0 0
        %2826 = vmatpush1.bf16.msra.mxu0 0
        %2827 = vmatprep.subr.bf16.mxu0 0
        %2828 = vmatpush1.bf16.msra.mxu0 0
        %2829 = vmatprep.subr.bf16.mxu0 0
        %2830 = vmatpush1.bf16.msra.mxu0 0
        %2831 = vmatprep.subr.bf16.mxu0 0
        %2832 = vmatpush1.bf16.msra.mxu0 0
        %2833 = vmatprep.subr.bf16.mxu0 0
        %2834 = vmatpush1.bf16.msra.mxu0 0
        %2835 = vmatprep.mubr.bf16.mxu0 0
        %2836 = vmatmul.mubr.bf16.gmra.mrb[0].mxu0 %v2801
        %v2837 = vpop.f32.mrb[0].mxu0
        %v2838 = vadd.f32 0.0, %v2837
        %v2839 = vpop.f32.mrb[0].mxu0
        %v2840 = vpop.f32.mrb[0].mxu0
        %v2841 = vpop.f32.mrb[0].mxu0
        %2842 = vdwg.mxu0
        %v2843 = vmul.f32 %v2838, 0.25
        %v2844 = vmul.f32 %v2419, %v2684
        %v2845 = vpack.c.bf16 %v2844, %v2844
        %v2847 = vsel %vm425, %v2845, 0
        %2849 = vmatprep.subr.bf16.mxu0 0
        %2850 = vmatpush1.bf16.msra.mxu0 %v864
        %2851 = vmatprep.subr.bf16.mxu0 0
        %2852 = vmatpush1.bf16.msra.mxu0 %v865
        %2853 = vmatprep.subr.bf16.mxu0 0
        %2854 = vmatpush1.bf16.msra.mxu0 %v866
        %2855 = vmatprep.subr.bf16.mxu0 0
        %2856 = vmatpush1.bf16.msra.mxu0 %v867
        %2857 = vmatprep.subr.bf16.mxu0 0
        %2858 = vmatpush1.bf16.msra.mxu0 0
        %2859 = vmatprep.subr.bf16.mxu0 0
        %2860 = vmatpush1.bf16.msra.mxu0 0
        %2861 = vmatprep.subr.bf16.mxu0 0
        %2862 = vmatpush1.bf16.msra.mxu0 0
        %2863 = vmatprep.subr.bf16.mxu0 0
        %2864 = vmatpush1.bf16.msra.mxu0 0
        %2865 = vmatprep.subr.bf16.mxu0 0
        %2866 = vmatpush1.bf16.msra.mxu0 0
        %2867 = vmatprep.subr.bf16.mxu0 0
        %2868 = vmatpush1.bf16.msra.mxu0 0
        %2869 = vmatprep.subr.bf16.mxu0 0
        %2870 = vmatpush1.bf16.msra.mxu0 0
        %2871 = vmatprep.subr.bf16.mxu0 0
        %2872 = vmatpush1.bf16.msra.mxu0 0
        %2873 = vmatprep.subr.bf16.mxu0 0
        %2874 = vmatpush1.bf16.msra.mxu0 0
        %2875 = vmatprep.subr.bf16.mxu0 0
        %2876 = vmatpush1.bf16.msra.mxu0 0
        %2877 = vmatprep.subr.bf16.mxu0 0
        %2878 = vmatpush1.bf16.msra.mxu0 0
        %2879 = vmatprep.subr.bf16.mxu0 0
        %2880 = vmatpush1.bf16.msra.mxu0 0
        %2881 = vmatprep.mubr.bf16.mxu0 0
        %2882 = vmatmul.mubr.bf16.gmra.mrb[0].mxu0 %v2847
        %v2883 = vpop.f32.mrb[0].mxu0
        %v2884 = vadd.f32 0.0, %v2883
        %v2885 = vpop.f32.mrb[0].mxu0
        %v2886 = vpop.f32.mrb[0].mxu0
        %v2887 = vpop.f32.mrb[0].mxu0
        %2888 = vdwg.mxu0
        %v2889 = vmul.f32 %v2884, 0.25
        %2891 = vrot.lane.b32.xlu0 %v2419, 64
        %v2892 = vpop.permute.xlu0 %2891
        %v2894 = vmul.f32 %v2419, %v2892
        %v2895 = vpack.c.bf16 %v2894, %v2894
        %v2897 = vsel %vm425, %v2895, 0
        %2899 = vmatprep.subr.bf16.mxu0 0
        %2900 = vmatpush1.bf16.msra.mxu0 %v864
        %2901 = vmatprep.subr.bf16.mxu0 0
        %2902 = vmatpush1.bf16.msra.mxu0 %v865
        %2903 = vmatprep.subr.bf16.mxu0 0
        %2904 = vmatpush1.bf16.msra.mxu0 %v866
        %2905 = vmatprep.subr.bf16.mxu0 0
        %2906 = vmatpush1.bf16.msra.mxu0 %v867
        %2907 = vmatprep.subr.bf16.mxu0 0
        %2908 = vmatpush1.bf16.msra.mxu0 0
        %2909 = vmatprep.subr.bf16.mxu0 0
        %2910 = vmatpush1.bf16.msra.mxu0 0
        %2911 = vmatprep.subr.bf16.mxu0 0
        %2912 = vmatpush1.bf16.msra.mxu0 0
        %2913 = vmatprep.subr.bf16.mxu0 0
        %2914 = vmatpush1.bf16.msra.mxu0 0
        %2915 = vmatprep.subr.bf16.mxu0 0
        %2916 = vmatpush1.bf16.msra.mxu0 0
        %2917 = vmatprep.subr.bf16.mxu0 0
        %2918 = vmatpush1.bf16.msra.mxu0 0
        %2919 = vmatprep.subr.bf16.mxu0 0
        %2920 = vmatpush1.bf16.msra.mxu0 0
        %2921 = vmatprep.subr.bf16.mxu0 0
        %2922 = vmatpush1.bf16.msra.mxu0 0
        %2923 = vmatprep.subr.bf16.mxu0 0
        %2924 = vmatpush1.bf16.msra.mxu0 0
        %2925 = vmatprep.subr.bf16.mxu0 0
        %2926 = vmatpush1.bf16.msra.mxu0 0
        %2927 = vmatprep.subr.bf16.mxu0 0
        %2928 = vmatpush1.bf16.msra.mxu0 0
        %2929 = vmatprep.subr.bf16.mxu0 0
        %2930 = vmatpush1.bf16.msra.mxu0 0
        %2931 = vmatprep.mubr.bf16.mxu0 0
        %2932 = vmatmul.mubr.bf16.gmra.mrb[0].mxu0 %v2897
        %v2933 = vpop.f32.mrb[0].mxu0
        %v2934 = vadd.f32 0.0, %v2933
        %v2935 = vpop.f32.mrb[0].mxu0
        %v2936 = vpop.f32.mrb[0].mxu0
        %v2937 = vpop.f32.mrb[0].mxu0
        %2938 = vdwg.mxu0
        %v2939 = vmul.f32 %v2934, 0.25
        %v2940 = vmax.f32 %v2797, %v2843
        %v2941 = vmax.f32 %v2940, %v2889
        %v2942 = vmax.f32 %v2941, %v2939
        %v2943 = vsub.f32 %v2797, %v2942
        %v2944 = vmul.f32 %v2943, 1.442695
        %v2945 = vpow.pop %v2944
        %v2946 = vsub.f32 %v2843, %v2942
        %v2947 = vmul.f32 %v2946, 1.442695
        %v2948 = vpow.pop %v2947
        %v2949 = vsub.f32 %v2889, %v2942
        %v2950 = vmul.f32 %v2949, 1.442695
        %v2951 = vpow.pop %v2950
        %v2952 = vsub.f32 %v2939, %v2942
        %v2953 = vmul.f32 %v2952, 1.442695
        %v2954 = vpow.pop %v2953
        %v2955 = vadd.f32 %v2945, %v2948
        %v2956 = vadd.f32 %v2955, %v2951
        %v2957 = vadd.f32 %v2956, %v2954
        %v2958 = vmul.f32 %v2945, %v2138
        %v2959 = vmul.f32 %v2948, %v2233
        %v2960 = vadd.f32 %v2958, %v2959
        %v2961 = vmul.f32 %v2951, %v2326
        %v2962 = vadd.f32 %v2960, %v2961
        %v2963 = vmul.f32 %v2954, %v2421
        %v2964 = vadd.f32 %v2962, %v2963
        %v2965 = vrcp.pop %v2957
        %v2966 = vmul.f32 %v2964, %v2965
        %v2967 = vpack.c.bf16 %v2589, %v2480
        %v2968 = vpack.c.bf16 %v2966, %v2751
        %s2969 = scalar_lea.vmem %s2, 32
        %v2970 = vld [vmem:[%s2969] sm:$0xf]
        %v2971 = vld [vmem:[%s2969 + $0x4] sm:$0xf]
        %v2972 = vld [vmem:[%s2969 + $0x8] sm:$0xf]
        %v2973 = vld [vmem:[%s2969 + $0xc] sm:$0xf]
        %v2974 = vld [vmem:[%s2969 + $0x10] sm:$0xf]
        %v2975 = vld [vmem:[%s2969 + $0x14] sm:$0xf]
        %v2976 = vld [vmem:[%s2969 + $0x18] sm:$0xf]
        %v2977 = vld [vmem:[%s2969 + $0x1c] sm:$0xf]
        %v2986 = vunpack.c.l.b16 %v2970
        %v2987 = vunpack.c.l.b16 %v2971
        %v2988 = vunpack.c.l.b16 %v2972
        %v2989 = vunpack.c.l.b16 %v2973
        %v2990 = vunpack.c.l.b16 %v2974
        %v2991 = vunpack.c.l.b16 %v2975
        %v2992 = vunpack.c.l.b16 %v2976
        %v2993 = vunpack.c.l.b16 %v2977
        %v2994 = vpack.c.b16 %v2987, %v2986
        %v2995 = vpack.c.b16 %v2989, %v2988
        %v2996 = vpack.c.b16 %v2991, %v2990
        %v2997 = vpack.c.b16 %v2993, %v2992
        %v3003 = vsel %vm425, %v2967, 0
        %v3006 = vsel %vm425, %v2968, 0
        %3008 = vmatprep.subr.bf16.mxu0 0
        %3009 = vmatpush1.bf16.msra.mxu0 %v2994
        %3010 = vmatprep.subr.bf16.mxu0 0
        %3011 = vmatpush1.bf16.msra.mxu0 %v2995
        %3012 = vmatprep.subr.bf16.mxu0 0
        %3013 = vmatpush1.bf16.msra.mxu0 %v2996
        %3014 = vmatprep.subr.bf16.mxu0 0
        %3015 = vmatpush1.bf16.msra.mxu0 %v2997
        %3016 = vmatprep.subr.bf16.mxu0 0
        %3017 = vmatpush1.bf16.msra.mxu0 0
        %3018 = vmatprep.subr.bf16.mxu0 0
        %3019 = vmatpush1.bf16.msra.mxu0 0
        %3020 = vmatprep.subr.bf16.mxu0 0
        %3021 = vmatpush1.bf16.msra.mxu0 0
        %3022 = vmatprep.subr.bf16.mxu0 0
        %3023 = vmatpush1.bf16.msra.mxu0 0
        %3024 = vmatprep.subr.bf16.mxu0 0
        %3025 = vmatpush1.bf16.msra.mxu0 0
        %3026 = vmatprep.subr.bf16.mxu0 0
        %3027 = vmatpush1.bf16.msra.mxu0 0
        %3028 = vmatprep.subr.bf16.mxu0 0
        %3029 = vmatpush1.bf16.msra.mxu0 0
        %3030 = vmatprep.subr.bf16.mxu0 0
        %3031 = vmatpush1.bf16.msra.mxu0 0
        %3032 = vmatprep.subr.bf16.mxu0 0
        %3033 = vmatpush1.bf16.msra.mxu0 0
        %3034 = vmatprep.subr.bf16.mxu0 0
        %3035 = vmatpush1.bf16.msra.mxu0 0
        %3036 = vmatprep.subr.bf16.mxu0 0
        %3037 = vmatpush1.bf16.msra.mxu0 0
        %3038 = vmatprep.subr.bf16.mxu0 0
        %3039 = vmatpush1.bf16.msra.mxu0 0
        %3040 = vmatprep.mubr.bf16.mxu0 0
        %3041 = vmatmul.mubr.bf16.gmra.mrb[0].mxu0 %v3003
        %v3042 = vpop.f32.mrb[0].mxu0
        %v3043 = vadd.f32 0.0, %v3042
        %v3044 = vpop.f32.mrb[0].mxu0
        %v3045 = vpop.f32.mrb[0].mxu0
        %v3046 = vadd.f32 0.0, %v3045
        %v3047 = vpop.f32.mrb[0].mxu0
        %3048 = vmatprep.mubr.bf16.mxu0 0
        %3049 = vmatmul.mubr.bf16.gmra.mrb[0].mxu0 %v3006
        %v3050 = vpop.f32.mrb[0].mxu0
        %v3051 = vadd.f32 0.0, %v3050
        %v3052 = vpop.f32.mrb[0].mxu0
        %v3053 = vpop.f32.mrb[0].mxu0
        %v3054 = vadd.f32 0.0, %v3053
        %v3055 = vpop.f32.mrb[0].mxu0
        %3056 = vdwg.mxu0
        %v3057 = vadd.f32 %v2043, %v3043
        %v3058 = vadd.f32 %v2044, %v3046
        %v3059 = vadd.f32 %v2045, %v3051
        %v3060 = vadd.f32 %v2046, %v3054
        %s3061 = scalar_lea.vmem %s6, 1
        %v3062 = vld [vmem:[%s3061] sm:$0x1]
        %v3063 = vmul.f32 %v3057, %v3057
        %v3064 = vmul.f32 %v3058, %v3058
        %v3065 = vmul.f32 %v3059, %v3059
        %v3066 = vmul.f32 %v3060, %v3060
        %v3067 = vsel %vm425, %v3063, 0.0
        %3068 = vadd.xlane.f32.xlu0 %v3067
        %v3069 = vpop.xlane.xlu0 %3068
        %v3070 = vsel %vm425, %v3064, 0.0
        %3071 = vadd.xlane.f32.xlu0 %v3070
        %v3072 = vpop.xlane.xlu0 %3071
        %v3073 = vsel %vm425, %v3065, 0.0
        %3074 = vadd.xlane.f32.xlu0 %v3073
        %v3075 = vpop.xlane.xlu0 %3074
        %v3076 = vsel %vm425, %v3066, 0.0
        %3077 = vadd.xlane.f32.xlu0 %v3076
        %v3078 = vpop.xlane.xlu0 %3077
        %v3079 = vmul.f32 %v3069, %v438
        %v3080 = vmul.f32 %v3072, %v438
        %v3081 = vmul.f32 %v3075, %v438
        %v3082 = vmul.f32 %v3078, %v438
        %v3083 = vadd.f32 %v3079, 1e-06
        %v3084 = vadd.f32 %v3080, 1e-06
        %v3085 = vadd.f32 %v3081, 1e-06
        %v3086 = vadd.f32 %v3082, 1e-06
        %v3087 = vrsqrt.pop %v3083
        %v3088 = vrsqrt.pop %v3084
        %v3089 = vrsqrt.pop %v3085
        %v3090 = vrsqrt.pop %v3086
        %v3091 = vmul.f32 %v3057, %v3087
        %v3092 = vmul.f32 %v3058, %v3088
        %v3093 = vmul.f32 %v3059, %v3089
        %v3094 = vmul.f32 %v3060, %v3090
        %v3096 = vlaneseq
        %v3097 = vshrl.u32 %v3096, 7
        %v3098 = vsub.s32 0, %v3097
        %v3099 = vrot.slane %v3062, %v3098
        %v3101 = vmul.f32 %v3091, %v3099
        %v3102 = vmul.f32 %v3092, %v3099
        %v3103 = vmul.f32 %v3093, %v3099
        %v3104 = vmul.f32 %v3094, %v3099
        %v3105 = vpack.c.bf16 %v3102, %v3101
        %v3106 = vpack.c.bf16 %v3104, %v3103
        %s3107 = scalar_lea.vmem %s3, 128
        %v3108 = vld [vmem:[%s3107] sm:$0xff]
        %v3109 = vld [vmem:[%s3107 + $0x8] sm:$0xff]
        %v3110 = vld [vmem:[%s3107 + $0x10] sm:$0xff]
        %v3111 = vld [vmem:[%s3107 + $0x18] sm:$0xff]
        %v3112 = vld [vmem:[%s3107 + $0x20] sm:$0xff]
        %v3113 = vld [vmem:[%s3107 + $0x28] sm:$0xff]
        %v3114 = vld [vmem:[%s3107 + $0x30] sm:$0xff]
        %v3115 = vld [vmem:[%s3107 + $0x38] sm:$0xff]
        %v3116 = vld [vmem:[%s3107 + $0x40] sm:$0xff]
        %v3117 = vld [vmem:[%s3107 + $0x48] sm:$0xff]
        %v3118 = vld [vmem:[%s3107 + $0x50] sm:$0xff]
        %v3119 = vld [vmem:[%s3107 + $0x58] sm:$0xff]
        %v3120 = vld [vmem:[%s3107 + $0x60] sm:$0xff]
        %v3121 = vld [vmem:[%s3107 + $0x68] sm:$0xff]
        %v3122 = vld [vmem:[%s3107 + $0x70] sm:$0xff]
        %v3123 = vld [vmem:[%s3107 + $0x78] sm:$0xff]
        %v3140 = vunpack.c.l.b16 %v3108
        %v3141 = vunpack.c.h.b16 %v3108
        %v3142 = vunpack.c.l.b16 %v3109
        %v3143 = vunpack.c.h.b16 %v3109
        %v3144 = vunpack.c.l.b16 %v3110
        %v3145 = vunpack.c.h.b16 %v3110
        %v3146 = vunpack.c.l.b16 %v3111
        %v3147 = vunpack.c.h.b16 %v3111
        %v3148 = vunpack.c.l.b16 %v3112
        %v3149 = vunpack.c.h.b16 %v3112
        %v3150 = vunpack.c.l.b16 %v3113
        %v3151 = vunpack.c.h.b16 %v3113
        %v3152 = vunpack.c.l.b16 %v3114
        %v3153 = vunpack.c.h.b16 %v3114
        %v3154 = vunpack.c.l.b16 %v3115
        %v3155 = vunpack.c.h.b16 %v3115
        %v3156 = vunpack.c.l.b16 %v3116
        %v3157 = vunpack.c.h.b16 %v3116
        %v3158 = vunpack.c.l.b16 %v3117
        %v3159 = vunpack.c.h.b16 %v3117
        %v3160 = vunpack.c.l.b16 %v3118
        %v3161 = vunpack.c.h.b16 %v3118
        %v3162 = vunpack.c.l.b16 %v3119
        %v3163 = vunpack.c.h.b16 %v3119
        %v3164 = vunpack.c.l.b16 %v3120
        %v3165 = vunpack.c.h.b16 %v3120
        %v3166 = vunpack.c.l.b16 %v3121
        %v3167 = vunpack.c.h.b16 %v3121
        %v3168 = vunpack.c.l.b16 %v3122
        %v3169 = vunpack.c.h.b16 %v3122
        %v3170 = vunpack.c.l.b16 %v3123
        %v3171 = vunpack.c.h.b16 %v3123
        %v3172 = vpack.c.b16 %v3144, %v3140
        %v3173 = vpack.c.b16 %v3145, %v3141
        %v3174 = vpack.c.b16 %v3146, %v3142
        %v3175 = vpack.c.b16 %v3147, %v3143
        %v3176 = vpack.c.b16 %v3152, %v3148
        %v3177 = vpack.c.b16 %v3153, %v3149
        %v3178 = vpack.c.b16 %v3154, %v3150
        %v3179 = vpack.c.b16 %v3155, %v3151
        %v3180 = vpack.c.b16 %v3160, %v3156
        %v3181 = vpack.c.b16 %v3161, %v3157
        %v3182 = vpack.c.b16 %v3162, %v3158
        %v3183 = vpack.c.b16 %v3163, %v3159
        %v3184 = vpack.c.b16 %v3168, %v3164
        %v3185 = vpack.c.b16 %v3169, %v3165
        %v3186 = vpack.c.b16 %v3170, %v3166
        %v3187 = vpack.c.b16 %v3171, %v3167
        %v3205 = vsel %vm425, %v3105, 0
        %v3208 = vsel %vm425, %v3106, 0
        %3210 = vmatprep.subr.bf16.mxu0 %v3173
        %3211 = vmatpush1.bf16.msra.mxu0 %v3172
        %3212 = vmatprep.subr.bf16.mxu0 %v3177
        %3213 = vmatpush1.bf16.msra.mxu0 %v3176
        %3214 = vmatprep.subr.bf16.mxu0 %v3181
        %3215 = vmatpush1.bf16.msra.mxu0 %v3180
        %3216 = vmatprep.subr.bf16.mxu0 %v3185
        %3217 = vmatpush1.bf16.msra.mxu0 %v3184
        %3218 = vmatprep.subr.bf16.mxu0 0
        %3219 = vmatpush1.bf16.msra.mxu0 0
        %3220 = vmatprep.subr.bf16.mxu0 0
        %3221 = vmatpush1.bf16.msra.mxu0 0
        %3222 = vmatprep.subr.bf16.mxu0 0
        %3223 = vmatpush1.bf16.msra.mxu0 0
        %3224 = vmatprep.subr.bf16.mxu0 0
        %3225 = vmatpush1.bf16.msra.mxu0 0
        %3226 = vmatprep.subr.bf16.mxu0 0
        %3227 = vmatpush1.bf16.msra.mxu0 0
        %3228 = vmatprep.subr.bf16.mxu0 0
        %3229 = vmatpush1.bf16.msra.mxu0 0
        %3230 = vmatprep.subr.bf16.mxu0 0
        %3231 = vmatpush1.bf16.msra.mxu0 0
        %3232 = vmatprep.subr.bf16.mxu0 0
        %3233 = vmatpush1.bf16.msra.mxu0 0
        %3234 = vmatprep.subr.bf16.mxu0 0
        %3235 = vmatpush1.bf16.msra.mxu0 0
        %3236 = vmatprep.subr.bf16.mxu0 0
        %3237 = vmatpush1.bf16.msra.mxu0 0
        %3238 = vmatprep.subr.bf16.mxu0 0
        %3239 = vmatpush1.bf16.msra.mxu0 0
        %3240 = vmatprep.subr.bf16.mxu0 0
        %3241 = vmatpush1.bf16.msra.mxu0 0
        %3242 = vmatprep.mubr.bf16.mxu0 0
        %3243 = vmatmul.mubr.bf16.gmra.mrb[0].mxu0 %v3205
        %v3244 = vpop.f32.mrb[0].mxu0
        %v3245 = vadd.f32 0.0, %v3244
        %v3246 = vpop.f32.mrb[0].mxu0
        %v3247 = vadd.f32 0.0, %v3246
        %v3248 = vpop.f32.mrb[0].mxu0
        %v3249 = vadd.f32 0.0, %v3248
        %v3250 = vpop.f32.mrb[0].mxu0
        %v3251 = vadd.f32 0.0, %v3250
        %3252 = vmatprep.mubr.bf16.mxu0 0
        %3253 = vmatmul.mubr.bf16.gmra.mrb[0].mxu0 %v3208
        %v3254 = vpop.f32.mrb[0].mxu0
        %v3255 = vadd.f32 0.0, %v3254
        %v3256 = vpop.f32.mrb[0].mxu0
        %v3257 = vadd.f32 0.0, %v3256
        %v3258 = vpop.f32.mrb[0].mxu0
        %v3259 = vadd.f32 0.0, %v3258
        %v3260 = vpop.f32.mrb[0].mxu0
        %v3261 = vadd.f32 0.0, %v3260
        %3262 = vdwg.mxu0
        %3263 = vmatprep.subr.bf16.mxu0 %v3175
        %3264 = vmatpush1.bf16.msra.mxu0 %v3174
        %3265 = vmatprep.subr.bf16.mxu0 %v3179
        %3266 = vmatpush1.bf16.msra.mxu0 %v3178
        %3267 = vmatprep.subr.bf16.mxu0 %v3183
        %3268 = vmatpush1.bf16.msra.mxu0 %v3182
        %3269 = vmatprep.subr.bf16.mxu0 %v3187
        %3270 = vmatpush1.bf16.msra.mxu0 %v3186
        %3271 = vmatprep.subr.bf16.mxu0 0
        %3272 = vmatpush1.bf16.msra.mxu0 0
        %3273 = vmatprep.subr.bf16.mxu0 0
        %3274 = vmatpush1.bf16.msra.mxu0 0
        %3275 = vmatprep.subr.bf16.mxu0 0
        %3276 = vmatpush1.bf16.msra.mxu0 0
        %3277 = vmatprep.subr.bf16.mxu0 0
        %3278 = vmatpush1.bf16.msra.mxu0 0
        %3279 = vmatprep.subr.bf16.mxu0 0
        %3280 = vmatpush1.bf16.msra.mxu0 0
        %3281 = vmatprep.subr.bf16.mxu0 0
        %3282 = vmatpush1.bf16.msra.mxu0 0
        %3283 = vmatprep.subr.bf16.mxu0 0
        %3284 = vmatpush1.bf16.msra.mxu0 0
        %3285 = vmatprep.subr.bf16.mxu0 0
        %3286 = vmatpush1.bf16.msra.mxu0 0
        %3287 = vmatprep.subr.bf16.mxu0 0
        %3288 = vmatpush1.bf16.msra.mxu0 0
        %3289 = vmatprep.subr.bf16.mxu0 0
        %3290 = vmatpush1.bf16.msra.mxu0 0
        %3291 = vmatprep.subr.bf16.mxu0 0
        %3292 = vmatpush1.bf16.msra.mxu0 0
        %3293 = vmatprep.subr.bf16.mxu0 0
        %3294 = vmatpush1.bf16.msra.mxu0 0
        %3295 = vmatprep.mubr.bf16.mxu0 0
        %3296 = vmatmul.mubr.bf16.gmra.mrb[0].mxu0 %v3205
        %v3297 = vpop.f32.mrb[0].mxu0
        %v3298 = vadd.f32 0.0, %v3297
        %v3299 = vpop.f32.mrb[0].mxu0
        %v3300 = vadd.f32 0.0, %v3299
        %v3301 = vpop.f32.mrb[0].mxu0
        %v3302 = vadd.f32 0.0, %v3301
        %v3303 = vpop.f32.mrb[0].mxu0
        %v3304 = vadd.f32 0.0, %v3303
        %3305 = vmatprep.mubr.bf16.mxu0 0
        %3306 = vmatmul.mubr.bf16.gmra.mrb[0].mxu0 %v3208
        %v3307 = vpop.f32.mrb[0].mxu0
        %v3308 = vadd.f32 0.0, %v3307
        %v3309 = vpop.f32.mrb[0].mxu0
        %v3310 = vadd.f32 0.0, %v3309
        %v3311 = vpop.f32.mrb[0].mxu0
        %v3312 = vadd.f32 0.0, %v3311
        %v3313 = vpop.f32.mrb[0].mxu0
        %v3314 = vadd.f32 0.0, %v3313
        %3315 = vdwg.mxu0
        %v3316 = vxor.u32 %v3245, 2147483648
        %v3317 = vxor.u32 %v3247, 2147483648
        %v3318 = vxor.u32 %v3249, 2147483648
        %v3319 = vxor.u32 %v3251, 2147483648
        %v3320 = vxor.u32 %v3255, 2147483648
        %v3321 = vxor.u32 %v3257, 2147483648
        %v3322 = vxor.u32 %v3259, 2147483648
        %v3323 = vxor.u32 %v3261, 2147483648
        %v3324 = vmul.f32 %v3316, 1.442695
        %v3325 = vpow.pop %v3324
        %v3326 = vmul.f32 %v3317, 1.442695
        %v3327 = vpow.pop %v3326
        %v3328 = vmul.f32 %v3318, 1.442695
        %v3329 = vpow.pop %v3328
        %v3330 = vmul.f32 %v3319, 1.442695
        %v3331 = vpow.pop %v3330
        %v3332 = vmul.f32 %v3320, 1.442695
        %v3333 = vpow.pop %v3332
        %v3334 = vmul.f32 %v3321, 1.442695
        %v3335 = vpow.pop %v3334
        %v3336 = vmul.f32 %v3322, 1.442695
        %v3337 = vpow.pop %v3336
        %v3338 = vmul.f32 %v3323, 1.442695
        %v3339 = vpow.pop %v3338
        %v3340 = vadd.f32 %v3325, 1.0
        %v3341 = vadd.f32 %v3327, 1.0
        %v3342 = vadd.f32 %v3329, 1.0
        %v3343 = vadd.f32 %v3331, 1.0
        %v3344 = vadd.f32 %v3333, 1.0
        %v3345 = vadd.f32 %v3335, 1.0
        %v3346 = vadd.f32 %v3337, 1.0
        %v3347 = vadd.f32 %v3339, 1.0
        %v3348 = vrcp.pop %v3340
        %v3349 = vmul.f32 1.0, %v3348
        %v3350 = vrcp.pop %v3341
        %v3351 = vmul.f32 1.0, %v3350
        %v3352 = vrcp.pop %v3342
        %v3353 = vmul.f32 1.0, %v3352
        %v3354 = vrcp.pop %v3343
        %v3355 = vmul.f32 1.0, %v3354
        %v3356 = vrcp.pop %v3344
        %v3357 = vmul.f32 1.0, %v3356
        %v3358 = vrcp.pop %v3345
        %v3359 = vmul.f32 1.0, %v3358
        %v3360 = vrcp.pop %v3346
        %v3361 = vmul.f32 1.0, %v3360
        %v3362 = vrcp.pop %v3347
        %v3363 = vmul.f32 1.0, %v3362
        %v3364 = vmul.f32 %v3245, %v3349
        %v3365 = vmul.f32 %v3247, %v3351
        %v3366 = vmul.f32 %v3249, %v3353
        %v3367 = vmul.f32 %v3251, %v3355
        %v3368 = vmul.f32 %v3255, %v3357
        %v3369 = vmul.f32 %v3257, %v3359
        %v3370 = vmul.f32 %v3259, %v3361
        %v3371 = vmul.f32 %v3261, %v3363
        %v3372 = vmul.f32 %v3364, %v3298
        %v3373 = vmul.f32 %v3365, %v3300
        %v3374 = vmul.f32 %v3366, %v3302
        %v3375 = vmul.f32 %v3367, %v3304
        %v3376 = vmul.f32 %v3368, %v3308
        %v3377 = vmul.f32 %v3369, %v3310
        %v3378 = vmul.f32 %v3370, %v3312
        %v3379 = vmul.f32 %v3371, %v3314
        %v3380 = vpack.c.bf16 %v3374, %v3372
        %v3381 = vpack.c.bf16 %v3375, %v3373
        %v3382 = vpack.c.bf16 %v3378, %v3376
        %v3383 = vpack.c.bf16 %v3379, %v3377
        %s3384 = scalar_lea.vmem %s4, 128
        %v3385 = vld [vmem:[%s3384] sm:$0xf]
        %v3386 = vld [vmem:[%s3384 + $0x4] sm:$0xf]
        %v3387 = vld [vmem:[%s3384 + $0x8] sm:$0xf]
        %v3388 = vld [vmem:[%s3384 + $0xc] sm:$0xf]
        %v3389 = vld [vmem:[%s3384 + $0x10] sm:$0xf]
        %v3390 = vld [vmem:[%s3384 + $0x14] sm:$0xf]
        %v3391 = vld [vmem:[%s3384 + $0x18] sm:$0xf]
        %v3392 = vld [vmem:[%s3384 + $0x1c] sm:$0xf]
        %v3393 = vld [vmem:[%s3384 + $0x20] sm:$0xf]
        %v3394 = vld [vmem:[%s3384 + $0x24] sm:$0xf]
        %v3395 = vld [vmem:[%s3384 + $0x28] sm:$0xf]
        %v3396 = vld [vmem:[%s3384 + $0x2c] sm:$0xf]
        %v3397 = vld [vmem:[%s3384 + $0x30] sm:$0xf]
        %v3398 = vld [vmem:[%s3384 + $0x34] sm:$0xf]
        %v3399 = vld [vmem:[%s3384 + $0x38] sm:$0xf]
        %v3400 = vld [vmem:[%s3384 + $0x3c] sm:$0xf]
        %v3401 = vld [vmem:[%s3384 + $0x40] sm:$0xf]
        %v3402 = vld [vmem:[%s3384 + $0x44] sm:$0xf]
        %v3403 = vld [vmem:[%s3384 + $0x48] sm:$0xf]
        %v3404 = vld [vmem:[%s3384 + $0x4c] sm:$0xf]
        %v3405 = vld [vmem:[%s3384 + $0x50] sm:$0xf]
        %v3406 = vld [vmem:[%s3384 + $0x54] sm:$0xf]
        %v3407 = vld [vmem:[%s3384 + $0x58] sm:$0xf]
        %v3408 = vld [vmem:[%s3384 + $0x5c] sm:$0xf]
        %v3409 = vld [vmem:[%s3384 + $0x60] sm:$0xf]
        %v3410 = vld [vmem:[%s3384 + $0x64] sm:$0xf]
        %v3411 = vld [vmem:[%s3384 + $0x68] sm:$0xf]
        %v3412 = vld [vmem:[%s3384 + $0x6c] sm:$0xf]
        %v3413 = vld [vmem:[%s3384 + $0x70] sm:$0xf]
        %v3414 = vld [vmem:[%s3384 + $0x74] sm:$0xf]
        %v3415 = vld [vmem:[%s3384 + $0x78] sm:$0xf]
        %v3416 = vld [vmem:[%s3384 + $0x7c] sm:$0xf]
        %v3449 = vunpack.c.l.b16 %v3385
        %v3450 = vunpack.c.l.b16 %v3386
        %v3451 = vunpack.c.l.b16 %v3387
        %v3452 = vunpack.c.l.b16 %v3388
        %v3453 = vunpack.c.l.b16 %v3389
        %v3454 = vunpack.c.l.b16 %v3390
        %v3455 = vunpack.c.l.b16 %v3391
        %v3456 = vunpack.c.l.b16 %v3392
        %v3457 = vunpack.c.l.b16 %v3393
        %v3458 = vunpack.c.l.b16 %v3394
        %v3459 = vunpack.c.l.b16 %v3395
        %v3460 = vunpack.c.l.b16 %v3396
        %v3461 = vunpack.c.l.b16 %v3397
        %v3462 = vunpack.c.l.b16 %v3398
        %v3463 = vunpack.c.l.b16 %v3399
        %v3464 = vunpack.c.l.b16 %v3400
        %v3465 = vunpack.c.l.b16 %v3401
        %v3466 = vunpack.c.l.b16 %v3402
        %v3467 = vunpack.c.l.b16 %v3403
        %v3468 = vunpack.c.l.b16 %v3404
        %v3469 = vunpack.c.l.b16 %v3405
        %v3470 = vunpack.c.l.b16 %v3406
        %v3471 = vunpack.c.l.b16 %v3407
        %v3472 = vunpack.c.l.b16 %v3408
        %v3473 = vunpack.c.l.b16 %v3409
        %v3474 = vunpack.c.l.b16 %v3410
        %v3475 = vunpack.c.l.b16 %v3411
        %v3476 = vunpack.c.l.b16 %v3412
        %v3477 = vunpack.c.l.b16 %v3413
        %v3478 = vunpack.c.l.b16 %v3414
        %v3479 = vunpack.c.l.b16 %v3415
        %v3480 = vunpack.c.l.b16 %v3416
        %v3481 = vpack.c.b16 %v3450, %v3449
        %v3482 = vpack.c.b16 %v3452, %v3451
        %v3483 = vpack.c.b16 %v3454, %v3453
        %v3484 = vpack.c.b16 %v3456, %v3455
        %v3485 = vpack.c.b16 %v3458, %v3457
        %v3486 = vpack.c.b16 %v3460, %v3459
        %v3487 = vpack.c.b16 %v3462, %v3461
        %v3488 = vpack.c.b16 %v3464, %v3463
        %v3489 = vpack.c.b16 %v3466, %v3465
        %v3490 = vpack.c.b16 %v3468, %v3467
        %v3491 = vpack.c.b16 %v3470, %v3469
        %v3492 = vpack.c.b16 %v3472, %v3471
        %v3493 = vpack.c.b16 %v3474, %v3473
        %v3494 = vpack.c.b16 %v3476, %v3475
        %v3495 = vpack.c.b16 %v3478, %v3477
        %v3496 = vpack.c.b16 %v3480, %v3479
        %3513 = vmatprep.subr.bf16.mxu0 0
        %3514 = vmatpush1.bf16.msra.mxu0 %v3481
        %3515 = vmatprep.subr.bf16.mxu0 0
        %3516 = vmatpush1.bf16.msra.mxu0 %v3482
        %3517 = vmatprep.subr.bf16.mxu0 0
        %3518 = vmatpush1.bf16.msra.mxu0 %v3483
        %3519 = vmatprep.subr.bf16.mxu0 0
        %3520 = vmatpush1.bf16.msra.mxu0 %v3484
        %3521 = vmatprep.subr.bf16.mxu0 0
        %3522 = vmatpush1.bf16.msra.mxu0 %v3485
        %3523 = vmatprep.subr.bf16.mxu0 0
        %3524 = vmatpush1.bf16.msra.mxu0 %v3486
        %3525 = vmatprep.subr.bf16.mxu0 0
        %3526 = vmatpush1.bf16.msra.mxu0 %v3487
        %3527 = vmatprep.subr.bf16.mxu0 0
        %3528 = vmatpush1.bf16.msra.mxu0 %v3488
        %3529 = vmatprep.subr.bf16.mxu0 0
        %3530 = vmatpush1.bf16.msra.mxu0 %v3489
        %3531 = vmatprep.subr.bf16.mxu0 0
        %3532 = vmatpush1.bf16.msra.mxu0 %v3490
        %3533 = vmatprep.subr.bf16.mxu0 0
        %3534 = vmatpush1.bf16.msra.mxu0 %v3491
        %3535 = vmatprep.subr.bf16.mxu0 0
        %3536 = vmatpush1.bf16.msra.mxu0 %v3492
        %3537 = vmatprep.subr.bf16.mxu0 0
        %3538 = vmatpush1.bf16.msra.mxu0 %v3493
        %3539 = vmatprep.subr.bf16.mxu0 0
        %3540 = vmatpush1.bf16.msra.mxu0 %v3494
        %3541 = vmatprep.subr.bf16.mxu0 0
        %3542 = vmatpush1.bf16.msra.mxu0 %v3495
        %3543 = vmatprep.subr.bf16.mxu0 0
        %3544 = vmatpush1.bf16.msra.mxu0 %v3496
        %3545 = vmatprep.mubr.bf16.mxu0 %v3381
        %3546 = vmatmul.mubr.bf16.gmra.mrb[0].mxu0 %v3380
        %v3547 = vpop.f32.mrb[0].mxu0
        %v3548 = vpop.f32.mrb[0].mxu0
        %v3549 = vpop.f32.mrb[0].mxu0
        %v3550 = vpop.f32.mrb[0].mxu0
        %3551 = vmatprep.mubr.bf16.mxu0 %v3383
        %3552 = vmatmul.mubr.bf16.gmra.mrb[0].mxu0 %v3382
        %v3553 = vpop.f32.mrb[0].mxu0
        %v3554 = vpop.f32.mrb[0].mxu0
        %v3555 = vpop.f32.mrb[0].mxu0
        %v3556 = vadd.f32 0.0, %v3555
        %v3557 = vpop.f32.mrb[0].mxu0
        %3558 = vdwg.mxu0
        %v3559 = vadd.f32 %v3060, %v3556
        %v3560 = vld [vmem:[%s7] sm:$0x1]
        %v3561 = vmul.f32 %v3559, %v3559
        %v3562 = vsel %vm425, %v3561, 0.0
        %3563 = vadd.xlane.f32.xlu0 %v3562
        %v3564 = vpop.xlane.xlu0 %3563
        %v3565 = vmul.f32 %v3564, %v438
        %v3566 = vadd.f32 %v3565, 1e-06
        %v3567 = vrsqrt.pop %v3566
        %v3568 = vmul.f32 %v3559, %v3567
        %v3570 = vlaneseq
        %v3571 = vshrl.u32 %v3570, 7
        %v3572 = vsub.s32 0, %v3571
        %v3573 = vrot.slane %v3560, %v3572
        %v3575 = vmul.f32 %v3568, %v3573
        %3576 = vst.msk [vmem:[%s406] sm:$0xff] %vm425, %v3575
        %s3577 = sand.u32 %s227, 1
        %s3578 = scalar_lea.sflag [#allocation5], %s3577
        %s3579 = sand.u32 %s227, 1
        %s3580 = smul.addr %s3579, 8
        %s3581 = scalar_lea.vmem [#allocation8], %s3580
        // Predicated region
        $region103: #{tpu_custom_call.1} parent=89 // pred_check
          %p3582 = pneg %p237
        $region104: #{tpu_custom_call.1} parent=89 // pred_check_branch
          %3584 = sbr.rel (%p3582) target = $region106
        $region105: #{tpu_custom_call.1} parent=89 // pred_region
          %s3586 = ssub.s32 128, 128
          %3587 = vsyncadd %s3578, %s3586
          %s3588 = smul.addr %s25, 128
          %s3589 = scalar_lea.hbm %s9, %s3588
          %s3591 = sshll.u32 %s3581, 4
          %s3592 = int_to_ptr.vmem [resolvable:$true] %s3591
          %3594 = dma.vmem_to_hbm [thread:$0]  %s3592, 128, %s3589, %s3578
        $region106: #{tpu_custom_call.1} parent=89 // pred_fallthru
          _
      $region90: #{tpu_custom_call.1} parent=5 // pred_fallthru
        _
      %p3595 = scmp.le.s32.totalorder 2, %s20
      // Predicated region
      $region107: #{tpu_custom_call.1} parent=5 // pred_check
        %p3596 = pneg %p3595
      $region108: #{tpu_custom_call.1} parent=5 // pred_check_branch
        %3598 = sbr.rel (%p3596) target = $region110
      $region109: #{tpu_custom_call.1} parent=5 // pred_region
        %s3599 = ssub.s32 %s20, 2
        // Predicated region
        $region111: #{tpu_custom_call.1} parent=109 // pred_check
          %p3600 = pneg %p243
        $region112: #{tpu_custom_call.1} parent=109 // pred_check_branch
          %3602 = sbr.rel (%p3600) target = $region114
        $region113: #{tpu_custom_call.1} parent=109 // pred_region
          %s3603 = sand.u32 %s228, 1
          %s3604 = scalar_lea.sflag [#allocation5], %s3603
          %s3605 = sand.u32 %s228, 1
          %s3606 = smul.addr %s3605, 8
          %s3607 = scalar_lea.vmem [#allocation8], %s3606
          %3608 = dma.done %s3604, 128
        $region114: #{tpu_custom_call.1} parent=109 // pred_fallthru
          _
      $region110: #{tpu_custom_call.1} parent=5 // pred_fallthru
        _
    $region6: #{tpu_custom_call.1} parent=1 // loop_footer
      %s24 = sadd.s32 1, %s20
    $region7: #{tpu_custom_call.1} parent=1 // loop_footer_branch
      %19 = sbr.rel target = $region3
    $region8: #{tpu_custom_call.1} parent=1 // loop_exit
      _
    %3609 = vsyncpa [#allocation4], 1
    %s3610 = scalar_lea.sflag [#allocation4], 1
    %3611 = vsyncpa %s3610, 1
    %3612 = vsyncpa [#allocation7], 1
    %3613 = vsyncpa [#allocation5], 1
    %s3614 = scalar_lea.sflag [#allocation5], 1
    %3615 = vsyncpa %s3614, 1

</llo_original>
